<compile_context>
chip_gen: v7x
topology: tpu7x:2x2x1
jax: 0.10.0
libtpu: 0.0.40
codegen_flags: <defaults>
</compile_context>

<pallas_src>
import functools

import jax
import jax.numpy as jnp
from jax import lax
from jax.experimental import pallas as pl
from jax.experimental.pallas import tpu as pltpu

EPS = 1e-5


# ----------------------------------------------------------------------------
# Kernel 1/2: [optional folded-BN + ReLU on the input] -> Conv3x3 (pad=1, no bias)
#             + fused per-channel sum / sum-of-squares for BatchNorm statistics.
#
# Layout: input block (1, Cin, H*W), output block (1, Cout, H*W): H*W on lanes.
# Each 3x3 tap is x shifted by (dh, dw), realized in the flattened spatial axis
# as a lane rotation by dh*W + dw plus a precomputed boundary mask (so wrapped
# values are zeroed) — no padded image is ever materialized.
# ----------------------------------------------------------------------------
def _conv3x3_stats_kernel(x_ref, scale_ref, shift_ref, w_ref, mask_ref,
                          o_ref, sum_ref, sq_ref, *, H, W, fuse_bn_relu):
    HW = H * W

    @pl.when(pl.program_id(0) == 0)
    def _():
        sum_ref[...] = jnp.zeros_like(sum_ref)
        sq_ref[...] = jnp.zeros_like(sq_ref)

    a = x_ref[0].astype(jnp.float32)                        # (Cin, HW)
    if fuse_bn_relu:
        # Previous layer's folded BatchNorm + ReLU, applied on the fly while
        # reading — saves a full HBM round-trip of the activation tensor.
        a = jnp.maximum(a * scale_ref[...] + shift_ref[...], 0.0)

    cout = o_ref.shape[1]
    acc = jnp.zeros((cout, HW), jnp.float32)
    t = 0
    for dh in (-1, 0, 1):
        for dw in (-1, 0, 1):
            s = dh * W + dw
            if s == 0:
                tap = a
            else:
                # tap[c, p] = a[c, p + s] for in-bounds pixels, 0 otherwise.
                tap = pltpu.roll(a, shift=(-s) % HW, axis=1) * mask_ref[t]
            # (Cout, Cin) @ (Cin, HW) on the MXU, f32 accumulation.
            acc = acc + jnp.dot(w_ref[t], tap, preferred_element_type=jnp.float32)
            t += 1

    o_ref[0] = acc.astype(o_ref.dtype)
    # Fused BN statistics: lane-direction reductions (128 elements per op),
    # accumulated across the batch grid axis in resident output blocks.
    sum_ref[...] += jnp.sum(acc, axis=1, keepdims=True)
    sq_ref[...] += jnp.sum(acc * acc, axis=1, keepdims=True)


def conv3x3_bn_relu_stats(x, scale, shift, w9, masks, H, W, *, fuse_bn_relu):
    """x: (N, Cin, H*W); scale/shift: (Cin, 1); w9: (9, Cout, Cin); masks: (9, 1, H*W).

    Returns (conv_out (N, Cout, H*W), channel_sum (Cout, 1), channel_sumsq (Cout, 1)).
    """
    N, Cin, HW = x.shape
    Cout = w9.shape[1]
    kern = functools.partial(_conv3x3_stats_kernel, H=H, W=W,
                             fuse_bn_relu=fuse_bn_relu)
    return pl.pallas_call(
        kern,
        out_shape=(jax.ShapeDtypeStruct((N, Cout, HW), x.dtype),
                   jax.ShapeDtypeStruct((Cout, 1), jnp.float32),
                   jax.ShapeDtypeStruct((Cout, 1), jnp.float32)),
        grid_spec=pltpu.PrefetchScalarGridSpec(
            num_scalar_prefetch=0,
            grid=(N,),
            in_specs=[
                pl.BlockSpec((1, Cin, HW), lambda n: (n, 0, 0)),
                pl.BlockSpec((Cin, 1), lambda n: (0, 0)),
                pl.BlockSpec((Cin, 1), lambda n: (0, 0)),
                pl.BlockSpec((9, Cout, Cin), lambda n: (0, 0, 0)),
                pl.BlockSpec((9, 1, HW), lambda n: (0, 0, 0)),
            ],
            out_specs=[
                pl.BlockSpec((1, Cout, HW), lambda n: (n, 0, 0)),
                pl.BlockSpec((Cout, 1), lambda n: (0, 0)),
                pl.BlockSpec((Cout, 1), lambda n: (0, 0)),
            ],
        ),
        # The stats outputs accumulate across the batch axis -> reduction axis.
        compiler_params=pltpu.CompilerParams(dimension_semantics=("arbitrary",)),
    )(x, scale, shift, w9, masks)


# ----------------------------------------------------------------------------
# Kernel 3: fused folded-BN + ReLU + residual add (elementwise, lane-dense).
# ----------------------------------------------------------------------------
def _bn_relu_residual_kernel(c_ref, x_ref, scale_ref, shift_ref, o_ref):
    y = jnp.maximum(c_ref[0].astype(jnp.float32) * scale_ref[...] + shift_ref[...], 0.0)
    o_ref[0] = (y + x_ref[0].astype(jnp.float32)).astype(o_ref.dtype)


def bn_relu_residual(c, x, scale, shift):
    N, C, HW = c.shape
    return pl.pallas_call(
        _bn_relu_residual_kernel,
        out_shape=jax.ShapeDtypeStruct((N, C, HW), x.dtype),
        grid_spec=pltpu.PrefetchScalarGridSpec(
            num_scalar_prefetch=0,
            grid=(N,),
            in_specs=[
                pl.BlockSpec((1, C, HW), lambda n: (n, 0, 0)),
                pl.BlockSpec((1, C, HW), lambda n: (n, 0, 0)),
                pl.BlockSpec((C, 1), lambda n: (0, 0)),
                pl.BlockSpec((C, 1), lambda n: (0, 0)),
            ],
            out_specs=pl.BlockSpec((1, C, HW), lambda n: (n, 0, 0)),
        ),
        compiler_params=pltpu.CompilerParams(dimension_semantics=("parallel",)),
    )(c, x, scale, shift)


# ----------------------------------------------------------------------------
# Host-side glue (tiny O(C) / O(H*W) work).
# ----------------------------------------------------------------------------
def _make_tap_masks(H, W):
    # {0,1} validity mask per 3x3 tap, flattened to (9, 1, H*W), tap order (dh, dw).
    r = jnp.arange(H).reshape(H, 1)
    c = jnp.arange(W).reshape(1, W)
    masks = []
    for dh in (-1, 0, 1):
        for dw in (-1, 0, 1):
            m = ((r + dh >= 0) & (r + dh < H) & (c + dw >= 0) & (c + dw < W))
            masks.append(m.reshape(1, 1, H * W))
    return jnp.concatenate(masks, axis=0).astype(jnp.float32)


def _fold_bn(ssum, ssq, gamma, beta, count):
    mean = ssum / count                          # (C, 1)
    # Biased variance (PyTorch BN training-mode normalization).
    var = ssq / count - mean * mean
    scale = gamma.reshape(-1, 1) * lax.rsqrt(var + EPS)
    shift = beta.reshape(-1, 1) - mean * scale
    return scale, shift


@jax.jit
def resblock_forward(x_nchw, params):
    N, Ci, H, W = x_nchw.shape
    Co = params["conv1_w"].shape[0]
    HW = H * W
    xf = x_nchw.reshape(N, Ci, HW)               # layout-preserving reshape, no transpose

    # OIHW -> (tap, O, I): one (O, I) matrix per 3x3 tap, tap order = (kh, kw).
    w1 = jnp.transpose(params["conv1_w"], (2, 3, 0, 1)).reshape(9, Co, Ci)
    w2 = jnp.transpose(params["conv2_w"], (2, 3, 0, 1)).reshape(9, Ci, Co)
    masks = _make_tap_masks(H, W)
    count = N * H * W

    # conv1 + BN1 statistics (fused).
    dummy = jnp.zeros((Ci, 1), jnp.float32)
    c1, s1, q1 = conv3x3_bn_relu_stats(xf, dummy, dummy, w1, masks, H, W,
                                       fuse_bn_relu=False)
    scale1, shift1 = _fold_bn(s1, q1, params["bn1_gamma"], params["bn1_beta"], count)

    # bn1+relu1 fused into conv2's input read; conv2 + BN2 statistics (fused).
    c2, s2, q2 = conv3x3_bn_relu_stats(c1, scale1, shift1, w2, masks, H, W,
                                       fuse_bn_relu=True)
    scale2, shift2 = _fold_bn(s2, q2, params["bn2_gamma"], params["bn2_beta"], count)

    # bn2 + relu2 + residual add (fused elementwise).
    out = bn_relu_residual(c2, xf, scale2, shift2)
    return out.reshape(N, Ci, H, W)


# ----------------------------------------------------------------------------
# Pure-JAX reference (NCHW, mirrors PyTorch training-mode semantics).
# ----------------------------------------------------------------------------
def ref_forward(x, p):
    def conv(x_, w_):
        return lax.conv_general_dilated(
            x_, w_, window_strides=(1, 1), padding=((1, 1), (1, 1)),
            dimension_numbers=("NCHW", "OIHW", "NCHW"))

    def bn(x_, g, b):
        m = jnp.mean(x_, axis=(0, 2, 3))
        v = jnp.var(x_, axis=(0, 2, 3))
        xn = (x_ - m[None, :, None, None]) / jnp.sqrt(v[None, :, None, None] + EPS)
        return xn * g[None, :, None, None] + b[None, :, None, None]

    out = jnp.maximum(bn(conv(x, p["conv1_w"]), p["bn1_gamma"], p["bn1_beta"]), 0.0)
    out = jnp.maximum(bn(conv(out, p["conv2_w"]), p["bn2_gamma"], p["bn2_beta"]), 0.0)
    return out + x


if __name__ == "__main__":
    # ResBlock(i_ch=4, o_ch=8) on a (2, 4, 16, 16) NCHW input.
    N, i_ch, o_ch, H, W = 2, 4, 8, 16, 16

    key = jax.random.PRNGKey(0)
    ks = jax.random.split(key, 7)
    x = jax.random.normal(ks[0], (N, i_ch, H, W), jnp.float32)

    params = {
        "conv1_w":   0.2 * jax.random.normal(ks[1], (o_ch, i_ch, 3, 3), jnp.float32),
        "bn1_gamma": 1.0 + 0.1 * jax.random.normal(ks[2], (o_ch,), jnp.float32),
        "bn1_beta":  0.1 * jax.random.normal(ks[3], (o_ch,), jnp.float32),
        "conv2_w":   0.2 * jax.random.normal(ks[4], (i_ch, o_ch, 3, 3), jnp.float32),
        "bn2_gamma": 1.0 + 0.1 * jax.random.normal(ks[5], (i_ch,), jnp.float32),
        "bn2_beta":  0.1 * jax.random.normal(ks[6], (i_ch,), jnp.float32),
    }

    out = jax.block_until_ready(resblock_forward(x, params))
    ref = jax.block_until_ready(ref_forward(x, params))

    assert out.shape == (N, i_ch, H, W), out.shape
    err = float(jnp.max(jnp.abs(out - ref)))
    if err < 1e-3:
        print("KERNEL_OK")
    else:
        print(f"MISMATCH max_abs_err={err}")
</pallas_src>

<mosaic_0001>
module attributes {stable_mosaic.version = 11 : i64} {
  func.func @_conv3x3_stats_kernel(%arg0: i32, %arg1: memref<1x4x256xf32, #tpu.memory_space<vmem>>, %arg2: memref<4x1xf32, #tpu.memory_space<vmem>>, %arg3: memref<4x1xf32, #tpu.memory_space<vmem>>, %arg4: memref<9x8x4xf32, #tpu.memory_space<vmem>>, %arg5: memref<9x1x256xf32, #tpu.memory_space<vmem>>, %arg6: memref<1x8x256xf32, #tpu.memory_space<vmem>>, %arg7: memref<8x1xf32, #tpu.memory_space<vmem>>, %arg8: memref<8x1xf32, #tpu.memory_space<vmem>>) attributes {dimension_semantics = [#tpu.dimension_semantics<arbitrary>], iteration_bounds = array<i64: 2>, scalar_prefetch = 0 : i64, scratch_operands = 0 : i64, tpu.core_type = #tpu.core_type<tc>, window_params = [{transform_indices = @transform_0, window_bounds = array<i64: 1, 4, 256>}, {pipeline_mode = #tpu.pipeline_mode<synchronous>, transform_indices = @transform_1, window_bounds = array<i64: 4, 1>}, {pipeline_mode = #tpu.pipeline_mode<synchronous>, transform_indices = @transform_2, window_bounds = array<i64: 4, 1>}, {pipeline_mode = #tpu.pipeline_mode<synchronous>, transform_indices = @transform_3, window_bounds = array<i64: 9, 8, 4>}, {pipeline_mode = #tpu.pipeline_mode<synchronous>, transform_indices = @transform_4, window_bounds = array<i64: 9, 1, 256>}, {transform_indices = @transform_5, window_bounds = array<i64: 1, 8, 256>}, {pipeline_mode = #tpu.pipeline_mode<synchronous>, transform_indices = @transform_6, window_bounds = array<i64: 8, 1>}, {pipeline_mode = #tpu.pipeline_mode<synchronous>, transform_indices = @transform_7, window_bounds = array<i64: 8, 1>}]} {
    %c0_i32 = arith.constant 0 : i32
    %0 = arith.cmpi eq, %arg0, %c0_i32 : i32
    %1 = arith.extui %0 : i1 to i32
    %c0_i32_0 = arith.constant 0 : i32
    %2 = arith.cmpi ne, %1, %c0_i32_0 : i32
    scf.if %2 {
      %cst_68 = arith.constant 0.000000e+00 : f32
      %96 = vector.broadcast %cst_68 : f32 to vector<8x1xf32>
      %c0_69 = arith.constant 0 : index
      %c0_70 = arith.constant 0 : index
      %97 = vector.load %arg7[%c0_69, %c0_70] : memref<8x1xf32, #tpu.memory_space<vmem>>, vector<8x1xf32>
      tpu.vector_store %arg7[%c0_69, %c0_70], %96 {strides = array<i32>} : memref<8x1xf32, #tpu.memory_space<vmem>>, vector<8x1xf32>,
      %cst_71 = arith.constant 0.000000e+00 : f32
      %98 = vector.broadcast %cst_71 : f32 to vector<8x1xf32>
      %c0_72 = arith.constant 0 : index
      %c0_73 = arith.constant 0 : index
      %99 = vector.load %arg8[%c0_72, %c0_73] : memref<8x1xf32, #tpu.memory_space<vmem>>, vector<8x1xf32>
      tpu.vector_store %arg8[%c0_72, %c0_73], %98 {strides = array<i32>} : memref<8x1xf32, #tpu.memory_space<vmem>>, vector<8x1xf32>,
    } else {
    }
    %c0 = arith.constant 0 : index
    %c0_1 = arith.constant 0 : index
    %c0_2 = arith.constant 0 : index
    %3 = vector.load %arg1[%c0, %c0_1, %c0_2] : memref<1x4x256xf32, #tpu.memory_space<vmem>>, vector<1x4x256xf32>
    %4 = vector.shape_cast %3 : vector<1x4x256xf32> to vector<4x256xf32>
    %cst = arith.constant 0.000000e+00 : f32
    %5 = vector.broadcast %cst : f32 to vector<8x256xf32>
    %c17_i32 = arith.constant 17 : i32
    %6 = tpu.dynamic_rotate %4 by %c17_i32 dim 1 : vector<4x256xf32>, i32 -> vector<4x256xf32>
    %c0_3 = arith.constant 0 : index
    %c0_4 = arith.constant 0 : index
    %c0_5 = arith.constant 0 : index
    %7 = vector.load %arg5[%c0_3, %c0_4, %c0_5] : memref<9x1x256xf32, #tpu.memory_space<vmem>>, vector<1x1x256xf32>
    %8 = vector.shape_cast %7 : vector<1x1x256xf32> to vector<1x256xf32>
    %9 = vector.broadcast %8 : vector<1x256xf32> to vector<4x256xf32>
    %10 = arith.mulf %6, %9 : vector<4x256xf32>
    %c0_6 = arith.constant 0 : index
    %c0_7 = arith.constant 0 : index
    %c0_8 = arith.constant 0 : index
    %11 = vector.load %arg4[%c0_6, %c0_7, %c0_8] : memref<9x8x4xf32, #tpu.memory_space<vmem>>, vector<1x8x4xf32>
    %12 = vector.shape_cast %11 : vector<1x8x4xf32> to vector<8x4xf32>
    %cst_9 = arith.constant dense<0.000000e+00> : vector<8x256xf32>
    %13 = tpu.matmul %12, %10, %cst_9 {dimension_numbers = #tpu.dot_dimension_numbers<[1], [0], [0], [1], [0, 0, 1, 1], [], []>} : vector<8x4xf32>, vector<4x256xf32>, vector<8x256xf32> -> vector<8x256xf32>
    %14 = arith.addf %5, %13 : vector<8x256xf32>
    %c16_i32 = arith.constant 16 : i32
    %15 = tpu.dynamic_rotate %4 by %c16_i32 dim 1 : vector<4x256xf32>, i32 -> vector<4x256xf32>
    %c1 = arith.constant 1 : index
    %c0_10 = arith.constant 0 : index
    %c0_11 = arith.constant 0 : index
    %16 = vector.load %arg5[%c1, %c0_10, %c0_11] : memref<9x1x256xf32, #tpu.memory_space<vmem>>, vector<1x1x256xf32>
    %17 = vector.shape_cast %16 : vector<1x1x256xf32> to vector<1x256xf32>
    %18 = vector.broadcast %17 : vector<1x256xf32> to vector<4x256xf32>
    %19 = arith.mulf %15, %18 : vector<4x256xf32>
    %c1_12 = arith.constant 1 : index
    %c0_13 = arith.constant 0 : index
    %c0_14 = arith.constant 0 : index
    %20 = vector.load %arg4[%c1_12, %c0_13, %c0_14] : memref<9x8x4xf32, #tpu.memory_space<vmem>>, vector<1x8x4xf32>
    %21 = vector.shape_cast %20 : vector<1x8x4xf32> to vector<8x4xf32>
    %cst_15 = arith.constant dense<0.000000e+00> : vector<8x256xf32>
    %22 = tpu.matmul %21, %19, %cst_15 {dimension_numbers = #tpu.dot_dimension_numbers<[1], [0], [0], [1], [0, 0, 1, 1], [], []>} : vector<8x4xf32>, vector<4x256xf32>, vector<8x256xf32> -> vector<8x256xf32>
    %23 = arith.addf %14, %22 : vector<8x256xf32>
    %c15_i32 = arith.constant 15 : i32
    %24 = tpu.dynamic_rotate %4 by %c15_i32 dim 1 : vector<4x256xf32>, i32 -> vector<4x256xf32>
    %c2 = arith.constant 2 : index
    %c0_16 = arith.constant 0 : index
    %c0_17 = arith.constant 0 : index
    %25 = vector.load %arg5[%c2, %c0_16, %c0_17] : memref<9x1x256xf32, #tpu.memory_space<vmem>>, vector<1x1x256xf32>
    %26 = vector.shape_cast %25 : vector<1x1x256xf32> to vector<1x256xf32>
    %27 = vector.broadcast %26 : vector<1x256xf32> to vector<4x256xf32>
    %28 = arith.mulf %24, %27 : vector<4x256xf32>
    %c2_18 = arith.constant 2 : index
    %c0_19 = arith.constant 0 : index
    %c0_20 = arith.constant 0 : index
    %29 = vector.load %arg4[%c2_18, %c0_19, %c0_20] : memref<9x8x4xf32, #tpu.memory_space<vmem>>, vector<1x8x4xf32>
    %30 = vector.shape_cast %29 : vector<1x8x4xf32> to vector<8x4xf32>
    %cst_21 = arith.constant dense<0.000000e+00> : vector<8x256xf32>
    %31 = tpu.matmul %30, %28, %cst_21 {dimension_numbers = #tpu.dot_dimension_numbers<[1], [0], [0], [1], [0, 0, 1, 1], [], []>} : vector<8x4xf32>, vector<4x256xf32>, vector<8x256xf32> -> vector<8x256xf32>
    %32 = arith.addf %23, %31 : vector<8x256xf32>
    %c1_i32 = arith.constant 1 : i32
    %33 = tpu.dynamic_rotate %4 by %c1_i32 dim 1 : vector<4x256xf32>, i32 -> vector<4x256xf32>
    %c3 = arith.constant 3 : index
    %c0_22 = arith.constant 0 : index
    %c0_23 = arith.constant 0 : index
    %34 = vector.load %arg5[%c3, %c0_22, %c0_23] : memref<9x1x256xf32, #tpu.memory_space<vmem>>, vector<1x1x256xf32>
    %35 = vector.shape_cast %34 : vector<1x1x256xf32> to vector<1x256xf32>
    %36 = vector.broadcast %35 : vector<1x256xf32> to vector<4x256xf32>
    %37 = arith.mulf %33, %36 : vector<4x256xf32>
    %c3_24 = arith.constant 3 : index
    %c0_25 = arith.constant 0 : index
    %c0_26 = arith.constant 0 : index
    %38 = vector.load %arg4[%c3_24, %c0_25, %c0_26] : memref<9x8x4xf32, #tpu.memory_space<vmem>>, vector<1x8x4xf32>
    %39 = vector.shape_cast %38 : vector<1x8x4xf32> to vector<8x4xf32>
    %cst_27 = arith.constant dense<0.000000e+00> : vector<8x256xf32>
    %40 = tpu.matmul %39, %37, %cst_27 {dimension_numbers = #tpu.dot_dimension_numbers<[1], [0], [0], [1], [0, 0, 1, 1], [], []>} : vector<8x4xf32>, vector<4x256xf32>, vector<8x256xf32> -> vector<8x256xf32>
    %41 = arith.addf %32, %40 : vector<8x256xf32>
    %c4 = arith.constant 4 : index
    %c0_28 = arith.constant 0 : index
    %c0_29 = arith.constant 0 : index
    %42 = vector.load %arg4[%c4, %c0_28, %c0_29] : memref<9x8x4xf32, #tpu.memory_space<vmem>>, vector<1x8x4xf32>
    %43 = vector.shape_cast %42 : vector<1x8x4xf32> to vector<8x4xf32>
    %cst_30 = arith.constant dense<0.000000e+00> : vector<8x256xf32>
    %44 = tpu.matmul %43, %4, %cst_30 {dimension_numbers = #tpu.dot_dimension_numbers<[1], [0], [0], [1], [0, 0, 1, 1], [], []>} : vector<8x4xf32>, vector<4x256xf32>, vector<8x256xf32> -> vector<8x256xf32>
    %45 = arith.addf %41, %44 : vector<8x256xf32>
    %c255_i32 = arith.constant 255 : i32
    %46 = tpu.dynamic_rotate %4 by %c255_i32 dim 1 : vector<4x256xf32>, i32 -> vector<4x256xf32>
    %c5 = arith.constant 5 : index
    %c0_31 = arith.constant 0 : index
    %c0_32 = arith.constant 0 : index
    %47 = vector.load %arg5[%c5, %c0_31, %c0_32] : memref<9x1x256xf32, #tpu.memory_space<vmem>>, vector<1x1x256xf32>
    %48 = vector.shape_cast %47 : vector<1x1x256xf32> to vector<1x256xf32>
    %49 = vector.broadcast %48 : vector<1x256xf32> to vector<4x256xf32>
    %50 = arith.mulf %46, %49 : vector<4x256xf32>
    %c5_33 = arith.constant 5 : index
    %c0_34 = arith.constant 0 : index
    %c0_35 = arith.constant 0 : index
    %51 = vector.load %arg4[%c5_33, %c0_34, %c0_35] : memref<9x8x4xf32, #tpu.memory_space<vmem>>, vector<1x8x4xf32>
    %52 = vector.shape_cast %51 : vector<1x8x4xf32> to vector<8x4xf32>
    %cst_36 = arith.constant dense<0.000000e+00> : vector<8x256xf32>
    %53 = tpu.matmul %52, %50, %cst_36 {dimension_numbers = #tpu.dot_dimension_numbers<[1], [0], [0], [1], [0, 0, 1, 1], [], []>} : vector<8x4xf32>, vector<4x256xf32>, vector<8x256xf32> -> vector<8x256xf32>
    %54 = arith.addf %45, %53 : vector<8x256xf32>
    %c241_i32 = arith.constant 241 : i32
    %55 = tpu.dynamic_rotate %4 by %c241_i32 dim 1 : vector<4x256xf32>, i32 -> vector<4x256xf32>
    %c6 = arith.constant 6 : index
    %c0_37 = arith.constant 0 : index
    %c0_38 = arith.constant 0 : index
    %56 = vector.load %arg5[%c6, %c0_37, %c0_38] : memref<9x1x256xf32, #tpu.memory_space<vmem>>, vector<1x1x256xf32>
    %57 = vector.shape_cast %56 : vector<1x1x256xf32> to vector<1x256xf32>
    %58 = vector.broadcast %57 : vector<1x256xf32> to vector<4x256xf32>
    %59 = arith.mulf %55, %58 : vector<4x256xf32>
    %c6_39 = arith.constant 6 : index
    %c0_40 = arith.constant 0 : index
    %c0_41 = arith.constant 0 : index
    %60 = vector.load %arg4[%c6_39, %c0_40, %c0_41] : memref<9x8x4xf32, #tpu.memory_space<vmem>>, vector<1x8x4xf32>
    %61 = vector.shape_cast %60 : vector<1x8x4xf32> to vector<8x4xf32>
    %cst_42 = arith.constant dense<0.000000e+00> : vector<8x256xf32>
    %62 = tpu.matmul %61, %59, %cst_42 {dimension_numbers = #tpu.dot_dimension_numbers<[1], [0], [0], [1], [0, 0, 1, 1], [], []>} : vector<8x4xf32>, vector<4x256xf32>, vector<8x256xf32> -> vector<8x256xf32>
    %63 = arith.addf %54, %62 : vector<8x256xf32>
    %c240_i32 = arith.constant 240 : i32
    %64 = tpu.dynamic_rotate %4 by %c240_i32 dim 1 : vector<4x256xf32>, i32 -> vector<4x256xf32>
    %c7 = arith.constant 7 : index
    %c0_43 = arith.constant 0 : index
    %c0_44 = arith.constant 0 : index
    %65 = vector.load %arg5[%c7, %c0_43, %c0_44] : memref<9x1x256xf32, #tpu.memory_space<vmem>>, vector<1x1x256xf32>
    %66 = vector.shape_cast %65 : vector<1x1x256xf32> to vector<1x256xf32>
    %67 = vector.broadcast %66 : vector<1x256xf32> to vector<4x256xf32>
    %68 = arith.mulf %64, %67 : vector<4x256xf32>
    %c7_45 = arith.constant 7 : index
    %c0_46 = arith.constant 0 : index
    %c0_47 = arith.constant 0 : index
    %69 = vector.load %arg4[%c7_45, %c0_46, %c0_47] : memref<9x8x4xf32, #tpu.memory_space<vmem>>, vector<1x8x4xf32>
    %70 = vector.shape_cast %69 : vector<1x8x4xf32> to vector<8x4xf32>
    %cst_48 = arith.constant dense<0.000000e+00> : vector<8x256xf32>
    %71 = tpu.matmul %70, %68, %cst_48 {dimension_numbers = #tpu.dot_dimension_numbers<[1], [0], [0], [1], [0, 0, 1, 1], [], []>} : vector<8x4xf32>, vector<4x256xf32>, vector<8x256xf32> -> vector<8x256xf32>
    %72 = arith.addf %63, %71 : vector<8x256xf32>
    %c239_i32 = arith.constant 239 : i32
    %73 = tpu.dynamic_rotate %4 by %c239_i32 dim 1 : vector<4x256xf32>, i32 -> vector<4x256xf32>
    %c8 = arith.constant 8 : index
    %c0_49 = arith.constant 0 : index
    %c0_50 = arith.constant 0 : index
    %74 = vector.load %arg5[%c8, %c0_49, %c0_50] : memref<9x1x256xf32, #tpu.memory_space<vmem>>, vector<1x1x256xf32>
    %75 = vector.shape_cast %74 : vector<1x1x256xf32> to vector<1x256xf32>
    %76 = vector.broadcast %75 : vector<1x256xf32> to vector<4x256xf32>
    %77 = arith.mulf %73, %76 : vector<4x256xf32>
    %c8_51 = arith.constant 8 : index
    %c0_52 = arith.constant 0 : index
    %c0_53 = arith.constant 0 : index
    %78 = vector.load %arg4[%c8_51, %c0_52, %c0_53] : memref<9x8x4xf32, #tpu.memory_space<vmem>>, vector<1x8x4xf32>
    %79 = vector.shape_cast %78 : vector<1x8x4xf32> to vector<8x4xf32>
    %cst_54 = arith.constant dense<0.000000e+00> : vector<8x256xf32>
    %80 = tpu.matmul %79, %77, %cst_54 {dimension_numbers = #tpu.dot_dimension_numbers<[1], [0], [0], [1], [0, 0, 1, 1], [], []>} : vector<8x4xf32>, vector<4x256xf32>, vector<8x256xf32> -> vector<8x256xf32>
    %81 = arith.addf %72, %80 : vector<8x256xf32>
    %c0_55 = arith.constant 0 : index
    %c0_56 = arith.constant 0 : index
    %c0_57 = arith.constant 0 : index
    %82 = vector.load %arg6[%c0_55, %c0_56, %c0_57] : memref<1x8x256xf32, #tpu.memory_space<vmem>>, vector<1x8x256xf32>
    %83 = vector.shape_cast %82 : vector<1x8x256xf32> to vector<8x256xf32>
    %84 = vector.shape_cast %81 : vector<8x256xf32> to vector<1x8x256xf32>
    tpu.vector_store %arg6[%c0_55, %c0_56, %c0_57], %84 {strides = array<i32>} : memref<1x8x256xf32, #tpu.memory_space<vmem>>, vector<1x8x256xf32>,
    %c0_58 = arith.constant 0 : index
    %c0_59 = arith.constant 0 : index
    %85 = vector.load %arg7[%c0_58, %c0_59] : memref<8x1xf32, #tpu.memory_space<vmem>>, vector<8x1xf32>
    %cst_60 = arith.constant dense<0.000000e+00> : vector<8xf32>
    %86 = vector.multi_reduction <add>, %81, %cst_60 [1] : vector<8x256xf32> to vector<8xf32>
    %87 = vector.shape_cast %86 : vector<8xf32> to vector<8x1xf32>
    %88 = arith.addf %85, %87 : vector<8x1xf32>
    %c0_61 = arith.constant 0 : index
    %c0_62 = arith.constant 0 : index
    %89 = vector.load %arg7[%c0_61, %c0_62] : memref<8x1xf32, #tpu.memory_space<vmem>>, vector<8x1xf32>
    tpu.vector_store %arg7[%c0_61, %c0_62], %88 {strides = array<i32>} : memref<8x1xf32, #tpu.memory_space<vmem>>, vector<8x1xf32>,
    %c0_63 = arith.constant 0 : index
    %c0_64 = arith.constant 0 : index
    %90 = vector.load %arg8[%c0_63, %c0_64] : memref<8x1xf32, #tpu.memory_space<vmem>>, vector<8x1xf32>
    %91 = arith.mulf %81, %81 : vector<8x256xf32>
    %cst_65 = arith.constant dense<0.000000e+00> : vector<8xf32>
    %92 = vector.multi_reduction <add>, %91, %cst_65 [1] : vector<8x256xf32> to vector<8xf32>
    %93 = vector.shape_cast %92 : vector<8xf32> to vector<8x1xf32>
    %94 = arith.addf %90, %93 : vector<8x1xf32>
    %c0_66 = arith.constant 0 : index
    %c0_67 = arith.constant 0 : index
    %95 = vector.load %arg8[%c0_66, %c0_67] : memref<8x1xf32, #tpu.memory_space<vmem>>, vector<8x1xf32>
    tpu.vector_store %arg8[%c0_66, %c0_67], %94 {strides = array<i32>} : memref<8x1xf32, #tpu.memory_space<vmem>>, vector<8x1xf32>,
    return
  }
  func.func @transform_0(%arg0: i32) -> (i32, i32, i32) {
    %c0_i32 = arith.constant 0 : i32
    %c0_i32_0 = arith.constant 0 : i32
    %c0_i32_1 = arith.constant 0 : i32
    return %arg0, %c0_i32, %c0_i32_0 : i32, i32, i32
  }
  func.func @transform_1(%arg0: i32) -> (i32, i32) {
    %c0_i32 = arith.constant 0 : i32
    %c0_i32_0 = arith.constant 0 : i32
    %c0_i32_1 = arith.constant 0 : i32
    return %c0_i32, %c0_i32_0 : i32, i32
  }
  func.func @transform_2(%arg0: i32) -> (i32, i32) {
    %c0_i32 = arith.constant 0 : i32
    %c0_i32_0 = arith.constant 0 : i32
    %c0_i32_1 = arith.constant 0 : i32
    return %c0_i32, %c0_i32_0 : i32, i32
  }
  func.func @transform_3(%arg0: i32) -> (i32, i32, i32) {
    %c0_i32 = arith.constant 0 : i32
    %c0_i32_0 = arith.constant 0 : i32
    %c0_i32_1 = arith.constant 0 : i32
    %c0_i32_2 = arith.constant 0 : i32
    return %c0_i32, %c0_i32_0, %c0_i32_1 : i32, i32, i32
  }
  func.func @transform_4(%arg0: i32) -> (i32, i32, i32) {
    %c0_i32 = arith.constant 0 : i32
    %c0_i32_0 = arith.constant 0 : i32
    %c0_i32_1 = arith.constant 0 : i32
    %c0_i32_2 = arith.constant 0 : i32
    return %c0_i32, %c0_i32_0, %c0_i32_1 : i32, i32, i32
  }
  func.func @transform_5(%arg0: i32) -> (i32, i32, i32) {
    %c0_i32 = arith.constant 0 : i32
    %c0_i32_0 = arith.constant 0 : i32
    %c0_i32_1 = arith.constant 0 : i32
    return %arg0, %c0_i32, %c0_i32_0 : i32, i32, i32
  }
  func.func @transform_6(%arg0: i32) -> (i32, i32) {
    %c0_i32 = arith.constant 0 : i32
    %c0_i32_0 = arith.constant 0 : i32
    %c0_i32_1 = arith.constant 0 : i32
    return %c0_i32, %c0_i32_0 : i32, i32
  }
  func.func @transform_7(%arg0: i32) -> (i32, i32) {
    %c0_i32 = arith.constant 0 : i32
    %c0_i32_0 = arith.constant 0 : i32
    %c0_i32_1 = arith.constant 0 : i32
    return %c0_i32, %c0_i32_0 : i32, i32
  }
}

module attributes {stable_mosaic.version = 11 : i64} {
  func.func @_conv3x3_stats_kernel(%arg0: i32, %arg1: memref<1x8x256xf32, #tpu.memory_space<vmem>>, %arg2: memref<8x1xf32, #tpu.memory_space<vmem>>, %arg3: memref<8x1xf32, #tpu.memory_space<vmem>>, %arg4: memref<9x4x8xf32, #tpu.memory_space<vmem>>, %arg5: memref<9x1x256xf32, #tpu.memory_space<vmem>>, %arg6: memref<1x4x256xf32, #tpu.memory_space<vmem>>, %arg7: memref<4x1xf32, #tpu.memory_space<vmem>>, %arg8: memref<4x1xf32, #tpu.memory_space<vmem>>) attributes {dimension_semantics = [#tpu.dimension_semantics<arbitrary>], iteration_bounds = array<i64: 2>, scalar_prefetch = 0 : i64, scratch_operands = 0 : i64, tpu.core_type = #tpu.core_type<tc>, window_params = [{transform_indices = @transform_0, window_bounds = array<i64: 1, 8, 256>}, {pipeline_mode = #tpu.pipeline_mode<synchronous>, transform_indices = @transform_1, window_bounds = array<i64: 8, 1>}, {pipeline_mode = #tpu.pipeline_mode<synchronous>, transform_indices = @transform_2, window_bounds = array<i64: 8, 1>}, {pipeline_mode = #tpu.pipeline_mode<synchronous>, transform_indices = @transform_3, window_bounds = array<i64: 9, 4, 8>}, {pipeline_mode = #tpu.pipeline_mode<synchronous>, transform_indices = @transform_4, window_bounds = array<i64: 9, 1, 256>}, {transform_indices = @transform_5, window_bounds = array<i64: 1, 4, 256>}, {pipeline_mode = #tpu.pipeline_mode<synchronous>, transform_indices = @transform_6, window_bounds = array<i64: 4, 1>}, {pipeline_mode = #tpu.pipeline_mode<synchronous>, transform_indices = @transform_7, window_bounds = array<i64: 4, 1>}]} {
    %c0_i32 = arith.constant 0 : i32
    %0 = arith.cmpi eq, %arg0, %c0_i32 : i32
    %1 = arith.extui %0 : i1 to i32
    %c0_i32_0 = arith.constant 0 : i32
    %2 = arith.cmpi ne, %1, %c0_i32_0 : i32
    scf.if %2 {
      %cst_73 = arith.constant 0.000000e+00 : f32
      %104 = vector.broadcast %cst_73 : f32 to vector<4x1xf32>
      %c0_74 = arith.constant 0 : index
      %c0_75 = arith.constant 0 : index
      %105 = vector.load %arg7[%c0_74, %c0_75] : memref<4x1xf32, #tpu.memory_space<vmem>>, vector<4x1xf32>
      tpu.vector_store %arg7[%c0_74, %c0_75], %104 {strides = array<i32>} : memref<4x1xf32, #tpu.memory_space<vmem>>, vector<4x1xf32>,
      %cst_76 = arith.constant 0.000000e+00 : f32
      %106 = vector.broadcast %cst_76 : f32 to vector<4x1xf32>
      %c0_77 = arith.constant 0 : index
      %c0_78 = arith.constant 0 : index
      %107 = vector.load %arg8[%c0_77, %c0_78] : memref<4x1xf32, #tpu.memory_space<vmem>>, vector<4x1xf32>
      tpu.vector_store %arg8[%c0_77, %c0_78], %106 {strides = array<i32>} : memref<4x1xf32, #tpu.memory_space<vmem>>, vector<4x1xf32>,
    } else {
    }
    %c0 = arith.constant 0 : index
    %c0_1 = arith.constant 0 : index
    %c0_2 = arith.constant 0 : index
    %3 = vector.load %arg1[%c0, %c0_1, %c0_2] : memref<1x8x256xf32, #tpu.memory_space<vmem>>, vector<1x8x256xf32>
    %4 = vector.shape_cast %3 : vector<1x8x256xf32> to vector<8x256xf32>
    %c0_3 = arith.constant 0 : index
    %c0_4 = arith.constant 0 : index
    %5 = vector.load %arg2[%c0_3, %c0_4] : memref<8x1xf32, #tpu.memory_space<vmem>>, vector<8x1xf32>
    %6 = vector.broadcast %5 : vector<8x1xf32> to vector<8x256xf32>
    %7 = arith.mulf %4, %6 : vector<8x256xf32>
    %c0_5 = arith.constant 0 : index
    %c0_6 = arith.constant 0 : index
    %8 = vector.load %arg3[%c0_5, %c0_6] : memref<8x1xf32, #tpu.memory_space<vmem>>, vector<8x1xf32>
    %9 = vector.broadcast %8 : vector<8x1xf32> to vector<8x256xf32>
    %10 = arith.addf %7, %9 : vector<8x256xf32>
    %cst = arith.constant 0.000000e+00 : f32
    %11 = vector.broadcast %cst : f32 to vector<8x256xf32>
    %12 = arith.maximumf %10, %11 : vector<8x256xf32>
    %cst_7 = arith.constant 0.000000e+00 : f32
    %13 = vector.broadcast %cst_7 : f32 to vector<4x256xf32>
    %c17_i32 = arith.constant 17 : i32
    %14 = tpu.dynamic_rotate %12 by %c17_i32 dim 1 : vector<8x256xf32>, i32 -> vector<8x256xf32>
    %c0_8 = arith.constant 0 : index
    %c0_9 = arith.constant 0 : index
    %c0_10 = arith.constant 0 : index
    %15 = vector.load %arg5[%c0_8, %c0_9, %c0_10] : memref<9x1x256xf32, #tpu.memory_space<vmem>>, vector<1x1x256xf32>
    %16 = vector.shape_cast %15 : vector<1x1x256xf32> to vector<1x256xf32>
    %17 = vector.broadcast %16 : vector<1x256xf32> to vector<8x256xf32>
    %18 = arith.mulf %14, %17 : vector<8x256xf32>
    %c0_11 = arith.constant 0 : index
    %c0_12 = arith.constant 0 : index
    %c0_13 = arith.constant 0 : index
    %19 = vector.load %arg4[%c0_11, %c0_12, %c0_13] : memref<9x4x8xf32, #tpu.memory_space<vmem>>, vector<1x4x8xf32>
    %20 = vector.shape_cast %19 : vector<1x4x8xf32> to vector<4x8xf32>
    %cst_14 = arith.constant dense<0.000000e+00> : vector<4x256xf32>
    %21 = tpu.matmul %20, %18, %cst_14 {dimension_numbers = #tpu.dot_dimension_numbers<[1], [0], [0], [1], [0, 0, 1, 1], [], []>} : vector<4x8xf32>, vector<8x256xf32>, vector<4x256xf32> -> vector<4x256xf32>
    %22 = arith.addf %13, %21 : vector<4x256xf32>
    %c16_i32 = arith.constant 16 : i32
    %23 = tpu.dynamic_rotate %12 by %c16_i32 dim 1 : vector<8x256xf32>, i32 -> vector<8x256xf32>
    %c1 = arith.constant 1 : index
    %c0_15 = arith.constant 0 : index
    %c0_16 = arith.constant 0 : index
    %24 = vector.load %arg5[%c1, %c0_15, %c0_16] : memref<9x1x256xf32, #tpu.memory_space<vmem>>, vector<1x1x256xf32>
    %25 = vector.shape_cast %24 : vector<1x1x256xf32> to vector<1x256xf32>
    %26 = vector.broadcast %25 : vector<1x256xf32> to vector<8x256xf32>
    %27 = arith.mulf %23, %26 : vector<8x256xf32>
    %c1_17 = arith.constant 1 : index
    %c0_18 = arith.constant 0 : index
    %c0_19 = arith.constant 0 : index
    %28 = vector.load %arg4[%c1_17, %c0_18, %c0_19] : memref<9x4x8xf32, #tpu.memory_space<vmem>>, vector<1x4x8xf32>
    %29 = vector.shape_cast %28 : vector<1x4x8xf32> to vector<4x8xf32>
    %cst_20 = arith.constant dense<0.000000e+00> : vector<4x256xf32>
    %30 = tpu.matmul %29, %27, %cst_20 {dimension_numbers = #tpu.dot_dimension_numbers<[1], [0], [0], [1], [0, 0, 1, 1], [], []>} : vector<4x8xf32>, vector<8x256xf32>, vector<4x256xf32> -> vector<4x256xf32>
    %31 = arith.addf %22, %30 : vector<4x256xf32>
    %c15_i32 = arith.constant 15 : i32
    %32 = tpu.dynamic_rotate %12 by %c15_i32 dim 1 : vector<8x256xf32>, i32 -> vector<8x256xf32>
    %c2 = arith.constant 2 : index
    %c0_21 = arith.constant 0 : index
    %c0_22 = arith.constant 0 : index
    %33 = vector.load %arg5[%c2, %c0_21, %c0_22] : memref<9x1x256xf32, #tpu.memory_space<vmem>>, vector<1x1x256xf32>
    %34 = vector.shape_cast %33 : vector<1x1x256xf32> to vector<1x256xf32>
    %35 = vector.broadcast %34 : vector<1x256xf32> to vector<8x256xf32>
    %36 = arith.mulf %32, %35 : vector<8x256xf32>
    %c2_23 = arith.constant 2 : index
    %c0_24 = arith.constant 0 : index
    %c0_25 = arith.constant 0 : index
    %37 = vector.load %arg4[%c2_23, %c0_24, %c0_25] : memref<9x4x8xf32, #tpu.memory_space<vmem>>, vector<1x4x8xf32>
    %38 = vector.shape_cast %37 : vector<1x4x8xf32> to vector<4x8xf32>
    %cst_26 = arith.constant dense<0.000000e+00> : vector<4x256xf32>
    %39 = tpu.matmul %38, %36, %cst_26 {dimension_numbers = #tpu.dot_dimension_numbers<[1], [0], [0], [1], [0, 0, 1, 1], [], []>} : vector<4x8xf32>, vector<8x256xf32>, vector<4x256xf32> -> vector<4x256xf32>
    %40 = arith.addf %31, %39 : vector<4x256xf32>
    %c1_i32 = arith.constant 1 : i32
    %41 = tpu.dynamic_rotate %12 by %c1_i32 dim 1 : vector<8x256xf32>, i32 -> vector<8x256xf32>
    %c3 = arith.constant 3 : index
    %c0_27 = arith.constant 0 : index
    %c0_28 = arith.constant 0 : index
    %42 = vector.load %arg5[%c3, %c0_27, %c0_28] : memref<9x1x256xf32, #tpu.memory_space<vmem>>, vector<1x1x256xf32>
    %43 = vector.shape_cast %42 : vector<1x1x256xf32> to vector<1x256xf32>
    %44 = vector.broadcast %43 : vector<1x256xf32> to vector<8x256xf32>
    %45 = arith.mulf %41, %44 : vector<8x256xf32>
    %c3_29 = arith.constant 3 : index
    %c0_30 = arith.constant 0 : index
    %c0_31 = arith.constant 0 : index
    %46 = vector.load %arg4[%c3_29, %c0_30, %c0_31] : memref<9x4x8xf32, #tpu.memory_space<vmem>>, vector<1x4x8xf32>
    %47 = vector.shape_cast %46 : vector<1x4x8xf32> to vector<4x8xf32>
    %cst_32 = arith.constant dense<0.000000e+00> : vector<4x256xf32>
    %48 = tpu.matmul %47, %45, %cst_32 {dimension_numbers = #tpu.dot_dimension_numbers<[1], [0], [0], [1], [0, 0, 1, 1], [], []>} : vector<4x8xf32>, vector<8x256xf32>, vector<4x256xf32> -> vector<4x256xf32>
    %49 = arith.addf %40, %48 : vector<4x256xf32>
    %c4 = arith.constant 4 : index
    %c0_33 = arith.constant 0 : index
    %c0_34 = arith.constant 0 : index
    %50 = vector.load %arg4[%c4, %c0_33, %c0_34] : memref<9x4x8xf32, #tpu.memory_space<vmem>>, vector<1x4x8xf32>
    %51 = vector.shape_cast %50 : vector<1x4x8xf32> to vector<4x8xf32>
    %cst_35 = arith.constant dense<0.000000e+00> : vector<4x256xf32>
    %52 = tpu.matmul %51, %12, %cst_35 {dimension_numbers = #tpu.dot_dimension_numbers<[1], [0], [0], [1], [0, 0, 1, 1], [], []>} : vector<4x8xf32>, vector<8x256xf32>, vector<4x256xf32> -> vector<4x256xf32>
    %53 = arith.addf %49, %52 : vector<4x256xf32>
    %c255_i32 = arith.constant 255 : i32
    %54 = tpu.dynamic_rotate %12 by %c255_i32 dim 1 : vector<8x256xf32>, i32 -> vector<8x256xf32>
    %c5 = arith.constant 5 : index
    %c0_36 = arith.constant 0 : index
    %c0_37 = arith.constant 0 : index
    %55 = vector.load %arg5[%c5, %c0_36, %c0_37] : memref<9x1x256xf32, #tpu.memory_space<vmem>>, vector<1x1x256xf32>
    %56 = vector.shape_cast %55 : vector<1x1x256xf32> to vector<1x256xf32>
    %57 = vector.broadcast %56 : vector<1x256xf32> to vector<8x256xf32>
    %58 = arith.mulf %54, %57 : vector<8x256xf32>
    %c5_38 = arith.constant 5 : index
    %c0_39 = arith.constant 0 : index
    %c0_40 = arith.constant 0 : index
    %59 = vector.load %arg4[%c5_38, %c0_39, %c0_40] : memref<9x4x8xf32, #tpu.memory_space<vmem>>, vector<1x4x8xf32>
    %60 = vector.shape_cast %59 : vector<1x4x8xf32> to vector<4x8xf32>
    %cst_41 = arith.constant dense<0.000000e+00> : vector<4x256xf32>
    %61 = tpu.matmul %60, %58, %cst_41 {dimension_numbers = #tpu.dot_dimension_numbers<[1], [0], [0], [1], [0, 0, 1, 1], [], []>} : vector<4x8xf32>, vector<8x256xf32>, vector<4x256xf32> -> vector<4x256xf32>
    %62 = arith.addf %53, %61 : vector<4x256xf32>
    %c241_i32 = arith.constant 241 : i32
    %63 = tpu.dynamic_rotate %12 by %c241_i32 dim 1 : vector<8x256xf32>, i32 -> vector<8x256xf32>
    %c6 = arith.constant 6 : index
    %c0_42 = arith.constant 0 : index
    %c0_43 = arith.constant 0 : index
    %64 = vector.load %arg5[%c6, %c0_42, %c0_43] : memref<9x1x256xf32, #tpu.memory_space<vmem>>, vector<1x1x256xf32>
    %65 = vector.shape_cast %64 : vector<1x1x256xf32> to vector<1x256xf32>
    %66 = vector.broadcast %65 : vector<1x256xf32> to vector<8x256xf32>
    %67 = arith.mulf %63, %66 : vector<8x256xf32>
    %c6_44 = arith.constant 6 : index
    %c0_45 = arith.constant 0 : index
    %c0_46 = arith.constant 0 : index
    %68 = vector.load %arg4[%c6_44, %c0_45, %c0_46] : memref<9x4x8xf32, #tpu.memory_space<vmem>>, vector<1x4x8xf32>
    %69 = vector.shape_cast %68 : vector<1x4x8xf32> to vector<4x8xf32>
    %cst_47 = arith.constant dense<0.000000e+00> : vector<4x256xf32>
    %70 = tpu.matmul %69, %67, %cst_47 {dimension_numbers = #tpu.dot_dimension_numbers<[1], [0], [0], [1], [0, 0, 1, 1], [], []>} : vector<4x8xf32>, vector<8x256xf32>, vector<4x256xf32> -> vector<4x256xf32>
    %71 = arith.addf %62, %70 : vector<4x256xf32>
    %c240_i32 = arith.constant 240 : i32
    %72 = tpu.dynamic_rotate %12 by %c240_i32 dim 1 : vector<8x256xf32>, i32 -> vector<8x256xf32>
    %c7 = arith.constant 7 : index
    %c0_48 = arith.constant 0 : index
    %c0_49 = arith.constant 0 : index
    %73 = vector.load %arg5[%c7, %c0_48, %c0_49] : memref<9x1x256xf32, #tpu.memory_space<vmem>>, vector<1x1x256xf32>
    %74 = vector.shape_cast %73 : vector<1x1x256xf32> to vector<1x256xf32>
    %75 = vector.broadcast %74 : vector<1x256xf32> to vector<8x256xf32>
    %76 = arith.mulf %72, %75 : vector<8x256xf32>
    %c7_50 = arith.constant 7 : index
    %c0_51 = arith.constant 0 : index
    %c0_52 = arith.constant 0 : index
    %77 = vector.load %arg4[%c7_50, %c0_51, %c0_52] : memref<9x4x8xf32, #tpu.memory_space<vmem>>, vector<1x4x8xf32>
    %78 = vector.shape_cast %77 : vector<1x4x8xf32> to vector<4x8xf32>
    %cst_53 = arith.constant dense<0.000000e+00> : vector<4x256xf32>
    %79 = tpu.matmul %78, %76, %cst_53 {dimension_numbers = #tpu.dot_dimension_numbers<[1], [0], [0], [1], [0, 0, 1, 1], [], []>} : vector<4x8xf32>, vector<8x256xf32>, vector<4x256xf32> -> vector<4x256xf32>
    %80 = arith.addf %71, %79 : vector<4x256xf32>
    %c239_i32 = arith.constant 239 : i32
    %81 = tpu.dynamic_rotate %12 by %c239_i32 dim 1 : vector<8x256xf32>, i32 -> vector<8x256xf32>
    %c8 = arith.constant 8 : index
    %c0_54 = arith.constant 0 : index
    %c0_55 = arith.constant 0 : index
    %82 = vector.load %arg5[%c8, %c0_54, %c0_55] : memref<9x1x256xf32, #tpu.memory_space<vmem>>, vector<1x1x256xf32>
    %83 = vector.shape_cast %82 : vector<1x1x256xf32> to vector<1x256xf32>
    %84 = vector.broadcast %83 : vector<1x256xf32> to vector<8x256xf32>
    %85 = arith.mulf %81, %84 : vector<8x256xf32>
    %c8_56 = arith.constant 8 : index
    %c0_57 = arith.constant 0 : index
    %c0_58 = arith.constant 0 : index
    %86 = vector.load %arg4[%c8_56, %c0_57, %c0_58] : memref<9x4x8xf32, #tpu.memory_space<vmem>>, vector<1x4x8xf32>
    %87 = vector.shape_cast %86 : vector<1x4x8xf32> to vector<4x8xf32>
    %cst_59 = arith.constant dense<0.000000e+00> : vector<4x256xf32>
    %88 = tpu.matmul %87, %85, %cst_59 {dimension_numbers = #tpu.dot_dimension_numbers<[1], [0], [0], [1], [0, 0, 1, 1], [], []>} : vector<4x8xf32>, vector<8x256xf32>, vector<4x256xf32> -> vector<4x256xf32>
    %89 = arith.addf %80, %88 : vector<4x256xf32>
    %c0_60 = arith.constant 0 : index
    %c0_61 = arith.constant 0 : index
    %c0_62 = arith.constant 0 : index
    %90 = vector.load %arg6[%c0_60, %c0_61, %c0_62] : memref<1x4x256xf32, #tpu.memory_space<vmem>>, vector<1x4x256xf32>
    %91 = vector.shape_cast %90 : vector<1x4x256xf32> to vector<4x256xf32>
    %92 = vector.shape_cast %89 : vector<4x256xf32> to vector<1x4x256xf32>
    tpu.vector_store %arg6[%c0_60, %c0_61, %c0_62], %92 {strides = array<i32>} : memref<1x4x256xf32, #tpu.memory_space<vmem>>, vector<1x4x256xf32>,
    %c0_63 = arith.constant 0 : index
    %c0_64 = arith.constant 0 : index
    %93 = vector.load %arg7[%c0_63, %c0_64] : memref<4x1xf32, #tpu.memory_space<vmem>>, vector<4x1xf32>
    %cst_65 = arith.constant dense<0.000000e+00> : vector<4xf32>
    %94 = vector.multi_reduction <add>, %89, %cst_65 [1] : vector<4x256xf32> to vector<4xf32>
    %95 = vector.shape_cast %94 : vector<4xf32> to vector<4x1xf32>
    %96 = arith.addf %93, %95 : vector<4x1xf32>
    %c0_66 = arith.constant 0 : index
    %c0_67 = arith.constant 0 : index
    %97 = vector.load %arg7[%c0_66, %c0_67] : memref<4x1xf32, #tpu.memory_space<vmem>>, vector<4x1xf32>
    tpu.vector_store %arg7[%c0_66, %c0_67], %96 {strides = array<i32>} : memref<4x1xf32, #tpu.memory_space<vmem>>, vector<4x1xf32>,
    %c0_68 = arith.constant 0 : index
    %c0_69 = arith.constant 0 : index
    %98 = vector.load %arg8[%c0_68, %c0_69] : memref<4x1xf32, #tpu.memory_space<vmem>>, vector<4x1xf32>
    %99 = arith.mulf %89, %89 : vector<4x256xf32>
    %cst_70 = arith.constant dense<0.000000e+00> : vector<4xf32>
    %100 = vector.multi_reduction <add>, %99, %cst_70 [1] : vector<4x256xf32> to vector<4xf32>
    %101 = vector.shape_cast %100 : vector<4xf32> to vector<4x1xf32>
    %102 = arith.addf %98, %101 : vector<4x1xf32>
    %c0_71 = arith.constant 0 : index
    %c0_72 = arith.constant 0 : index
    %103 = vector.load %arg8[%c0_71, %c0_72] : memref<4x1xf32, #tpu.memory_space<vmem>>, vector<4x1xf32>
    tpu.vector_store %arg8[%c0_71, %c0_72], %102 {strides = array<i32>} : memref<4x1xf32, #tpu.memory_space<vmem>>, vector<4x1xf32>,
    return
  }
  func.func @transform_0(%arg0: i32) -> (i32, i32, i32) {
    %c0_i32 = arith.constant 0 : i32
    %c0_i32_0 = arith.constant 0 : i32
    %c0_i32_1 = arith.constant 0 : i32
    return %arg0, %c0_i32, %c0_i32_0 : i32, i32, i32
  }
  func.func @transform_1(%arg0: i32) -> (i32, i32) {
    %c0_i32 = arith.constant 0 : i32
    %c0_i32_0 = arith.constant 0 : i32
    %c0_i32_1 = arith.constant 0 : i32
    return %c0_i32, %c0_i32_0 : i32, i32
  }
  func.func @transform_2(%arg0: i32) -> (i32, i32) {
    %c0_i32 = arith.constant 0 : i32
    %c0_i32_0 = arith.constant 0 : i32
    %c0_i32_1 = arith.constant 0 : i32
    return %c0_i32, %c0_i32_0 : i32, i32
  }
  func.func @transform_3(%arg0: i32) -> (i32, i32, i32) {
    %c0_i32 = arith.constant 0 : i32
    %c0_i32_0 = arith.constant 0 : i32
    %c0_i32_1 = arith.constant 0 : i32
    %c0_i32_2 = arith.constant 0 : i32
    return %c0_i32, %c0_i32_0, %c0_i32_1 : i32, i32, i32
  }
  func.func @transform_4(%arg0: i32) -> (i32, i32, i32) {
    %c0_i32 = arith.constant 0 : i32
    %c0_i32_0 = arith.constant 0 : i32
    %c0_i32_1 = arith.constant 0 : i32
    %c0_i32_2 = arith.constant 0 : i32
    return %c0_i32, %c0_i32_0, %c0_i32_1 : i32, i32, i32
  }
  func.func @transform_5(%arg0: i32) -> (i32, i32, i32) {
    %c0_i32 = arith.constant 0 : i32
    %c0_i32_0 = arith.constant 0 : i32
    %c0_i32_1 = arith.constant 0 : i32
    return %arg0, %c0_i32, %c0_i32_0 : i32, i32, i32
  }
  func.func @transform_6(%arg0: i32) -> (i32, i32) {
    %c0_i32 = arith.constant 0 : i32
    %c0_i32_0 = arith.constant 0 : i32
    %c0_i32_1 = arith.constant 0 : i32
    return %c0_i32, %c0_i32_0 : i32, i32
  }
  func.func @transform_7(%arg0: i32) -> (i32, i32) {
    %c0_i32 = arith.constant 0 : i32
    %c0_i32_0 = arith.constant 0 : i32
    %c0_i32_1 = arith.constant 0 : i32
    return %c0_i32, %c0_i32_0 : i32, i32
  }
}

module attributes {stable_mosaic.version = 11 : i64} {
  func.func @_bn_relu_residual_kernel(%arg0: i32, %arg1: memref<1x4x256xf32, #tpu.memory_space<vmem>>, %arg2: memref<1x4x256xf32, #tpu.memory_space<vmem>>, %arg3: memref<4x1xf32, #tpu.memory_space<vmem>>, %arg4: memref<4x1xf32, #tpu.memory_space<vmem>>, %arg5: memref<1x4x256xf32, #tpu.memory_space<vmem>>) attributes {dimension_semantics = [#tpu.dimension_semantics<parallel>], iteration_bounds = array<i64: 2>, scalar_prefetch = 0 : i64, scratch_operands = 0 : i64, tpu.core_type = #tpu.core_type<tc>, window_params = [{transform_indices = @transform_0, window_bounds = array<i64: 1, 4, 256>}, {transform_indices = @transform_1, window_bounds = array<i64: 1, 4, 256>}, {pipeline_mode = #tpu.pipeline_mode<synchronous>, transform_indices = @transform_2, window_bounds = array<i64: 4, 1>}, {pipeline_mode = #tpu.pipeline_mode<synchronous>, transform_indices = @transform_3, window_bounds = array<i64: 4, 1>}, {transform_indices = @transform_4, window_bounds = array<i64: 1, 4, 256>}]} {
    %c0 = arith.constant 0 : index
    %c0_0 = arith.constant 0 : index
    %c0_1 = arith.constant 0 : index
    %0 = vector.load %arg1[%c0, %c0_0, %c0_1] : memref<1x4x256xf32, #tpu.memory_space<vmem>>, vector<1x4x256xf32>
    %1 = vector.shape_cast %0 : vector<1x4x256xf32> to vector<4x256xf32>
    %c0_2 = arith.constant 0 : index
    %c0_3 = arith.constant 0 : index
    %2 = vector.load %arg3[%c0_2, %c0_3] : memref<4x1xf32, #tpu.memory_space<vmem>>, vector<4x1xf32>
    %3 = vector.broadcast %2 : vector<4x1xf32> to vector<4x256xf32>
    %4 = arith.mulf %1, %3 : vector<4x256xf32>
    %c0_4 = arith.constant 0 : index
    %c0_5 = arith.constant 0 : index
    %5 = vector.load %arg4[%c0_4, %c0_5] : memref<4x1xf32, #tpu.memory_space<vmem>>, vector<4x1xf32>
    %6 = vector.broadcast %5 : vector<4x1xf32> to vector<4x256xf32>
    %7 = arith.addf %4, %6 : vector<4x256xf32>
    %cst = arith.constant 0.000000e+00 : f32
    %8 = vector.broadcast %cst : f32 to vector<4x256xf32>
    %9 = arith.maximumf %7, %8 : vector<4x256xf32>
    %c0_6 = arith.constant 0 : index
    %c0_7 = arith.constant 0 : index
    %c0_8 = arith.constant 0 : index
    %10 = vector.load %arg2[%c0_6, %c0_7, %c0_8] : memref<1x4x256xf32, #tpu.memory_space<vmem>>, vector<1x4x256xf32>
    %11 = vector.shape_cast %10 : vector<1x4x256xf32> to vector<4x256xf32>
    %12 = arith.addf %9, %11 : vector<4x256xf32>
    %c0_9 = arith.constant 0 : index
    %c0_10 = arith.constant 0 : index
    %c0_11 = arith.constant 0 : index
    %13 = vector.load %arg5[%c0_9, %c0_10, %c0_11] : memref<1x4x256xf32, #tpu.memory_space<vmem>>, vector<1x4x256xf32>
    %14 = vector.shape_cast %13 : vector<1x4x256xf32> to vector<4x256xf32>
    %15 = vector.shape_cast %12 : vector<4x256xf32> to vector<1x4x256xf32>
    tpu.vector_store %arg5[%c0_9, %c0_10, %c0_11], %15 {strides = array<i32>} : memref<1x4x256xf32, #tpu.memory_space<vmem>>, vector<1x4x256xf32>,
    return
  }
  func.func @transform_0(%arg0: i32) -> (i32, i32, i32) {
    %c0_i32 = arith.constant 0 : i32
    %c0_i32_0 = arith.constant 0 : i32
    %c0_i32_1 = arith.constant 0 : i32
    return %arg0, %c0_i32, %c0_i32_0 : i32, i32, i32
  }
  func.func @transform_1(%arg0: i32) -> (i32, i32, i32) {
    %c0_i32 = arith.constant 0 : i32
    %c0_i32_0 = arith.constant 0 : i32
    %c0_i32_1 = arith.constant 0 : i32
    return %arg0, %c0_i32, %c0_i32_0 : i32, i32, i32
  }
  func.func @transform_2(%arg0: i32) -> (i32, i32) {
    %c0_i32 = arith.constant 0 : i32
    %c0_i32_0 = arith.constant 0 : i32
    %c0_i32_1 = arith.constant 0 : i32
    return %c0_i32, %c0_i32_0 : i32, i32
  }
  func.func @transform_3(%arg0: i32) -> (i32, i32) {
    %c0_i32 = arith.constant 0 : i32
    %c0_i32_0 = arith.constant 0 : i32
    %c0_i32_1 = arith.constant 0 : i32
    return %c0_i32, %c0_i32_0 : i32, i32
  }
  func.func @transform_4(%arg0: i32) -> (i32, i32, i32) {
    %c0_i32 = arith.constant 0 : i32
    %c0_i32_0 = arith.constant 0 : i32
    %c0_i32_1 = arith.constant 0 : i32
    return %arg0, %c0_i32, %c0_i32_0 : i32, i32, i32
  }
}

</mosaic_0001>

<llo_original>
// kernel: resblock_forward.5
$region0: #{resblock_forward.5}
  #allocation0 [shape = 'u32[]', space=smem, size = 0x4, offset = 0x4, fixed_abs, tag = 'smem constant byte address 0x4 - core index']
  #allocation1 [shape = 'u32[144,128]{1,0:T(1,128)}', space=vmem, size = 0x12000, scoped, tag = 'internal scratch']
  %s0 = inlined_call_operand.vmem [shape: f32[2,4,256], index: 0, kind: input, shape index: {}]
  %s1 = inlined_call_operand.vmem [shape: f32[2,4,256], index: 1, kind: input, shape index: {}]
  %s2 = inlined_call_operand.vmem [shape: f32[4,1], index: 2, kind: input, shape index: {}]
  %s3 = inlined_call_operand.vmem [shape: f32[4,1], index: 3, kind: input, shape index: {}]
  %s4 = inlined_call_operand.vmem [shape: f32[2,4,256], index: 4, kind: output, shape index: {}]
  %s5 = sld [smem:[#allocation0]]
  $region49: #{resblock_forward.5} parent=0
    _
  %s7 = ssub.s32 1, %s5
  %s8 = scalar_select 0, %s7, %s5
  loop: start=0, step=1, limit=4
  $region2: #{resblock_forward.5} parent=0 // loop_pre_header
    _
  $region3: #{resblock_forward.5} parent=0 // loop_header
    %s10 = sphi 0, %s14
    %p11 = scmp.ge.s32.totalorder %s10, 4
    %s20 = sphi 0, %s22
    %s23 = sphi 0, %s20
    %s24 = sphi 0, %s23
    %s40 = sphi 0, %s24
    %s46 = sphi 0, %s48
    %s49 = sphi 0, %s46
    %s50 = sphi 0, %s49
    %s66 = sphi 0, %s50
    %s70 = sphi 0, %s70
    %s72 = sphi 0, %s70
    %s73 = sphi 0, %s72
    %s87 = sphi 0, %s73
    %s91 = sphi 0, %s91
    %s93 = sphi 0, %s91
    %s94 = sphi 0, %s93
    %s108 = sphi 0, %s94
    %s114 = sphi 0, %s116
    %s117 = sphi 0, %s114
    %s118 = sphi 0, %s117
    %s134 = sphi 0, %s118
  $region4: #{resblock_forward.5} parent=0 // loop_header_branch
    %13 = sbr.rel (%p11) target = $region8
  $region5: #{resblock_forward.5} parent=0 // loop_body
    %s15 = ssub.s32 %s10, 1
    %s16 = ssub.s32 %s10, 2
    %s17 = sadd.s32 %s10, 1
    %s18 = ssub.s32 %s10, %s17
    %p19 = scmp.eq.s32.totalorder %s18, 0
    %s21 = sadd.s32 %s20, 1
    %s22 = scalar_select %p19, %s20, %s21
    %p25 = pneg %p19
    %p26 = scmp.eq.s32.totalorder %s10, 1
    %p27 = por %p25, %p26
    %p28 = scmp.ne.s32.totalorder %s20, %s23
    %p29 = scmp.eq.s32.totalorder %s10, 0
    %p30 = por %p28, %p29
    %p31 = scmp.ne.s32.totalorder %s20, %s23
    %p32 = scmp.eq.s32.totalorder %s15, 1
    %p33 = por %p31, %p32
    %p34 = scmp.ne.s32.totalorder %s23, %s24
    %p35 = scmp.eq.s32.totalorder %s15, 0
    %p36 = por %p34, %p35
    %p37 = scmp.ne.s32.totalorder %s23, %s24
    %p38 = scmp.eq.s32.totalorder %s16, 1
    %p39 = por %p37, %p38
    %p41 = scmp.ne.s32.totalorder %s24, %s40
    %p42 = scmp.eq.s32.totalorder %s16, 0
    %p43 = por %p41, %p42
    %s44 = ssub.s32 %s10, %s17
    %p45 = scmp.eq.s32.totalorder %s44, 0
    %s47 = sadd.s32 %s46, 1
    %s48 = scalar_select %p45, %s46, %s47
    %p51 = pneg %p45
    %p52 = scmp.eq.s32.totalorder %s10, 1
    %p53 = por %p51, %p52
    %p54 = scmp.ne.s32.totalorder %s46, %s49
    %p55 = scmp.eq.s32.totalorder %s10, 0
    %p56 = por %p54, %p55
    %p57 = scmp.ne.s32.totalorder %s46, %s49
    %p58 = scmp.eq.s32.totalorder %s15, 1
    %p59 = por %p57, %p58
    %p60 = scmp.ne.s32.totalorder %s49, %s50
    %p61 = scmp.eq.s32.totalorder %s15, 0
    %p62 = por %p60, %p61
    %p63 = scmp.ne.s32.totalorder %s49, %s50
    %p64 = scmp.eq.s32.totalorder %s16, 1
    %p65 = por %p63, %p64
    %p67 = scmp.ne.s32.totalorder %s50, %s66
    %p68 = scmp.eq.s32.totalorder %s16, 0
    %p69 = por %p67, %p68
    %s71 = sadd.s32 %s70, 1
    %p74 = scmp.eq.s32.totalorder %s10, 1
    %p75 = scmp.ne.s32.totalorder %s70, %s72
    %p76 = scmp.eq.s32.totalorder %s10, 0
    %p77 = por %p75, %p76
    %p78 = scmp.ne.s32.totalorder %s70, %s72
    %p79 = scmp.eq.s32.totalorder %s15, 1
    %p80 = por %p78, %p79
    %p81 = scmp.ne.s32.totalorder %s72, %s73
    %p82 = scmp.eq.s32.totalorder %s15, 0
    %p83 = por %p81, %p82
    %p84 = scmp.ne.s32.totalorder %s72, %s73
    %p85 = scmp.eq.s32.totalorder %s16, 1
    %p86 = por %p84, %p85
    %p88 = scmp.ne.s32.totalorder %s73, %s87
    %p89 = scmp.eq.s32.totalorder %s16, 0
    %p90 = por %p88, %p89
    %s92 = sadd.s32 %s91, 1
    %p95 = scmp.eq.s32.totalorder %s10, 1
    %p96 = scmp.ne.s32.totalorder %s91, %s93
    %p97 = scmp.eq.s32.totalorder %s10, 0
    %p98 = por %p96, %p97
    %p99 = scmp.ne.s32.totalorder %s91, %s93
    %p100 = scmp.eq.s32.totalorder %s15, 1
    %p101 = por %p99, %p100
    %p102 = scmp.ne.s32.totalorder %s93, %s94
    %p103 = scmp.eq.s32.totalorder %s15, 0
    %p104 = por %p102, %p103
    %p105 = scmp.ne.s32.totalorder %s93, %s94
    %p106 = scmp.eq.s32.totalorder %s16, 1
    %p107 = por %p105, %p106
    %p109 = scmp.ne.s32.totalorder %s94, %s108
    %p110 = scmp.eq.s32.totalorder %s16, 0
    %p111 = por %p109, %p110
    %s112 = ssub.s32 %s10, %s17
    %p113 = scmp.eq.s32.totalorder %s112, 0
    %s115 = sadd.s32 %s114, 1
    %s116 = scalar_select %p113, %s114, %s115
    %p119 = pneg %p113
    %p120 = scmp.eq.s32.totalorder %s10, 1
    %p121 = por %p119, %p120
    %p122 = scmp.ne.s32.totalorder %s114, %s117
    %p123 = scmp.eq.s32.totalorder %s10, 0
    %p124 = por %p122, %p123
    %p125 = scmp.ne.s32.totalorder %s114, %s117
    %p126 = scmp.eq.s32.totalorder %s15, 1
    %p127 = por %p125, %p126
    %p128 = scmp.ne.s32.totalorder %s117, %s118
    %p129 = scmp.eq.s32.totalorder %s15, 0
    %p130 = por %p128, %p129
    %p131 = scmp.ne.s32.totalorder %s117, %s118
    %p132 = scmp.eq.s32.totalorder %s16, 1
    %p133 = por %p131, %p132
    %p135 = scmp.ne.s32.totalorder %s118, %s134
    %p136 = scmp.eq.s32.totalorder %s16, 0
    %p137 = por %p135, %p136
    %p138 = scmp.le.s32.totalorder 1, %s10
    %p139 = scmp.lt.s32.totalorder %s10, 3
    %p140 = pnand %p138, %p139
    %p141 = pneg %p140
    // Predicated region
    $region9: #{resblock_forward.5} parent=5 // pred_check
      _
    $region10: #{resblock_forward.5} parent=5 // pred_check_branch
      %143 = sbr.rel (%p140) target = $region12
    $region11: #{resblock_forward.5} parent=5 // pred_region
      %s144 = ssub.s32 %s10, 1
      // Predicated region
      $region13: #{resblock_forward.5} parent=11 // pred_check
        %p145 = pneg %p83
      $region14: #{resblock_forward.5} parent=11 // pred_check_branch
        %147 = sbr.rel (%p145) target = $region16
      $region15: #{resblock_forward.5} parent=11 // pred_region
        _
      $region16: #{resblock_forward.5} parent=11 // pred_fallthru
        _
      // Predicated region
      $region17: #{resblock_forward.5} parent=11 // pred_check
        %p148 = pneg %p104
      $region18: #{resblock_forward.5} parent=11 // pred_check_branch
        %150 = sbr.rel (%p148) target = $region20
      $region19: #{resblock_forward.5} parent=11 // pred_region
        _
      $region20: #{resblock_forward.5} parent=11 // pred_fallthru
        _
    $region12: #{resblock_forward.5} parent=5 // pred_fallthru
      _
    %p151 = scmp.lt.s32.totalorder %s10, 2
    // Predicated region
    $region21: #{resblock_forward.5} parent=5 // pred_check
      %p152 = pneg %p151
    $region22: #{resblock_forward.5} parent=5 // pred_check_branch
      %154 = sbr.rel (%p152) target = $region24
    $region23: #{resblock_forward.5} parent=5 // pred_region
      // Predicated region
      $region25: #{resblock_forward.5} parent=23 // pred_check
        %p155 = pneg %p30
      $region26: #{resblock_forward.5} parent=23 // pred_check_branch
        %157 = sbr.rel (%p155) target = $region28
      $region27: #{resblock_forward.5} parent=23 // pred_region
        %p158 = scmp.lt.s32.totalorder %s10, 1
        %s159 = scalar_select %p158, %s10, 1
        %s160 = smul.addr %s159, 2
        %s161 = smul.addr %s160, 4
        %s162 = scalar_lea.vmem %s0, %s161
      $region28: #{resblock_forward.5} parent=23 // pred_fallthru
        _
      // Predicated region
      $region29: #{resblock_forward.5} parent=23 // pred_check
        %p163 = pneg %p56
      $region30: #{resblock_forward.5} parent=23 // pred_check_branch
        %165 = sbr.rel (%p163) target = $region32
      $region31: #{resblock_forward.5} parent=23 // pred_region
        %p166 = scmp.lt.s32.totalorder %s10, 1
        %s167 = scalar_select %p166, %s10, 1
        %s168 = smul.addr %s167, 2
        %s169 = smul.addr %s168, 4
        %s170 = scalar_lea.vmem %s1, %s169
      $region32: #{resblock_forward.5} parent=23 // pred_fallthru
        _
    $region24: #{resblock_forward.5} parent=5 // pred_fallthru
      _
    %p171 = scmp.le.s32.totalorder 1, %s10
    %p172 = scmp.lt.s32.totalorder %s10, 3
    %p173 = pnand %p171, %p172
    %p174 = pneg %p173
    // Predicated region
    $region33: #{resblock_forward.5} parent=5 // pred_check
      _
    $region34: #{resblock_forward.5} parent=5 // pred_check_branch
      %176 = sbr.rel (%p173) target = $region36
    $region35: #{resblock_forward.5} parent=5 // pred_region
      %s177 = ssub.s32 %s10, 1
      %p178 = scmp.lt.s32.totalorder %s15, 1
      %s179 = scalar_select %p178, %s15, 1
      %s180 = smul.addr %s179, 2
      %s181 = smul.addr %s180, 4
      %s182 = scalar_lea.vmem %s0, %s181
      %p183 = pneg %p36
      %p184 = pneg %p33
      %p185 = scmp.lt.s32.totalorder %s15, 1
      %s186 = scalar_select %p185, %s15, 1
      %s187 = smul.addr %s186, 2
      %s188 = smul.addr %s187, 4
      %s189 = scalar_lea.vmem %s1, %s188
      %p190 = pneg %p62
      %p191 = pneg %p59
      %p192 = pneg %p83
      %p193 = pneg %p80
      %p194 = pneg %p104
      %p195 = pneg %p101
      %p196 = pneg %p130
      %p197 = pneg %p127
      %p198 = scmp.lt.s32.totalorder %s15, 1
      %s199 = scalar_select %p198, %s15, 1
      %s200 = smul.addr %s199, 2
      %s201 = smul.addr %s200, 4
      %s202 = scalar_lea.vmem %s4, %s201
      %p203 = scmp.lt.s32.totalorder %s15, 1
      %s204 = scalar_select %p203, %s15, 1
      %s205 = smul.addr %s204, 2
      %s206 = smul.addr %s205, 4
      %s207 = scalar_lea.vmem %s0, %s206
      %p208 = scmp.lt.s32.totalorder %s15, 1
      %s209 = scalar_select %p208, %s15, 1
      %s210 = smul.addr %s209, 2
      %s211 = smul.addr %s210, 4
      %s212 = scalar_lea.vmem %s1, %s211
      %p213 = scmp.lt.s32.totalorder %s15, 1
      %s214 = scalar_select %p213, %s15, 1
      %s215 = smul.addr %s214, 2
      %s216 = smul.addr %s215, 4
      %s217 = scalar_lea.vmem %s4, %s216
      %v218 = vld [vmem:[%s207] sm:$0xff]
      %v219 = vld [vmem:[%s2] sm:$0xf]
      %221 = vset.pattern.permute.xlu0 0
      %222 = vperm.xlu0 %221, %v219
      %v223 = vpop.permute.xlu0 %222
      %v225 = vunpack.c.l.s4 839922192
      %v226 = vunpack.c.0.s8 %v225
      %v227 = vlaneseq
      %v228 = vshrl.u32 %v227, 7
      %v229 = vsub.s32 %v226, %v228
      %v230 = vrot.slane %v223, %v229
      %v232 = vmul.f32 %v218, %v230
      %v233 = vld [vmem:[%s3] sm:$0xf]
      %235 = vset.pattern.permute.xlu0 0
      %236 = vperm.xlu0 %235, %v233
      %v237 = vpop.permute.xlu0 %236
      %v239 = vunpack.c.l.s4 839922192
      %v240 = vunpack.c.0.s8 %v239
      %v241 = vlaneseq
      %v242 = vshrl.u32 %v241, 7
      %v243 = vsub.s32 %v240, %v242
      %v244 = vrot.slane %v237, %v243
      %v246 = vadd.f32 %v232, %v244
      %v247 = vmax.f32 %v246, 0.0
      %v248 = vld [vmem:[%s212] sm:$0xff]
      %v249 = vadd.f32 %v247, %v248
      %250 = vst [vmem:[%s217] sm:$0xff] %v249
      %p251 = scmp.lt.s32.totalorder %s15, 1
      %s252 = scalar_select %p251, %s15, 1
      %s253 = smul.addr %s252, 2
      %s254 = smul.addr %s253, 4
      %s255 = scalar_lea.vmem %s4, %s254
      // Predicated region
      $region37: #{resblock_forward.5} parent=35 // pred_check
        %p256 = pneg %p127
      $region38: #{resblock_forward.5} parent=35 // pred_check_branch
        %258 = sbr.rel (%p256) target = $region40
      $region39: #{resblock_forward.5} parent=35 // pred_region
        _
      $region40: #{resblock_forward.5} parent=35 // pred_fallthru
        _
    $region36: #{resblock_forward.5} parent=5 // pred_fallthru
      _
    %p259 = scmp.le.s32.totalorder 2, %s10
    // Predicated region
    $region41: #{resblock_forward.5} parent=5 // pred_check
      %p260 = pneg %p259
    $region42: #{resblock_forward.5} parent=5 // pred_check_branch
      %262 = sbr.rel (%p260) target = $region44
    $region43: #{resblock_forward.5} parent=5 // pred_region
      %s263 = ssub.s32 %s10, 2
      // Predicated region
      $region45: #{resblock_forward.5} parent=43 // pred_check
        %p264 = pneg %p133
      $region46: #{resblock_forward.5} parent=43 // pred_check_branch
        %266 = sbr.rel (%p264) target = $region48
      $region47: #{resblock_forward.5} parent=43 // pred_region
        %p267 = scmp.lt.s32.totalorder %s16, 1
        %s268 = scalar_select %p267, %s16, 1
        %s269 = smul.addr %s268, 2
        %s270 = smul.addr %s269, 4
        %s271 = scalar_lea.vmem %s4, %s270
      $region48: #{resblock_forward.5} parent=43 // pred_fallthru
        _
    $region44: #{resblock_forward.5} parent=5 // pred_fallthru
      _
  $region6: #{resblock_forward.5} parent=0 // loop_footer
    %s14 = sadd.s32 1, %s10
  $region7: #{resblock_forward.5} parent=0 // loop_footer_branch
    %9 = sbr.rel target = $region3
  $region8: #{resblock_forward.5} parent=0 // loop_exit
    _

// kernel: resblock_forward.3
$region0: #{resblock_forward.3}
  #allocation0 [shape = 'u32[]', space=smem, size = 0x4, offset = 0x4, fixed_abs, tag = 'smem constant byte address 0x4 - core index']
  #allocation1 [shape = 'u32[144,128]{1,0:T(1,128)}', space=vmem, size = 0x12000, scoped, tag = 'internal scratch']
  %s0 = inlined_call_operand.vmem [shape: f32[2,4,256], index: 0, kind: input, shape index: {}]
  %s1 = inlined_call_operand.vmem [shape: f32[4,1], index: 1, kind: input, shape index: {}, may-alias: {1,2}]
  %s2 = inlined_call_operand.vmem [shape: f32[4,1], index: 2, kind: input, shape index: {}, may-alias: {1,2}]
  %s3 = inlined_call_operand.vmem [shape: f32[9,8,4], index: 3, kind: input, shape index: {}]
  %s4 = inlined_call_operand.vmem [shape: f32[9,1,256], index: 4, kind: input, shape index: {}]
  %s5 = inlined_call_operand.vmem [shape: f32[2,8,256], index: 5, kind: output, shape index: {0}]
  %s6 = inlined_call_operand.vmem [shape: f32[8,1], index: 6, kind: output, shape index: {1}]
  %s7 = inlined_call_operand.vmem [shape: f32[8,1], index: 7, kind: output, shape index: {2}]
  %8 = xla_tuple %s5, %s6, %s7
  %s9 = sld [smem:[#allocation0]]
  $region73: #{resblock_forward.3} parent=0
    _
  %s11 = ssub.s32 1, %s9
  %s12 = scalar_select 0, %s11, %s9
  loop: start=0, step=1, limit=4
  $region2: #{resblock_forward.3} parent=0 // loop_pre_header
    _
  $region3: #{resblock_forward.3} parent=0 // loop_header
    %s14 = sphi 0, %s18
    %p15 = scmp.ge.s32.totalorder %s14, 4
    %s24 = sphi 0, %s26
    %s27 = sphi 0, %s24
    %s28 = sphi 0, %s27
    %s44 = sphi 0, %s28
    %s48 = sphi 0, %s48
    %s50 = sphi 0, %s48
    %s51 = sphi 0, %s50
    %s65 = sphi 0, %s51
    %s69 = sphi 0, %s69
    %s71 = sphi 0, %s69
    %s72 = sphi 0, %s71
    %s86 = sphi 0, %s72
    %s90 = sphi 0, %s90
    %s92 = sphi 0, %s90
    %s93 = sphi 0, %s92
    %s107 = sphi 0, %s93
    %s111 = sphi 0, %s111
    %s113 = sphi 0, %s111
    %s114 = sphi 0, %s113
    %s128 = sphi 0, %s114
    %s134 = sphi 0, %s136
    %s137 = sphi 0, %s134
    %s138 = sphi 0, %s137
    %s154 = sphi 0, %s138
    %s158 = sphi 0, %s158
    %s160 = sphi 0, %s158
    %s161 = sphi 0, %s160
    %s175 = sphi 0, %s161
    %s179 = sphi 0, %s179
    %s181 = sphi 0, %s179
    %s182 = sphi 0, %s181
    %s196 = sphi 0, %s182
  $region4: #{resblock_forward.3} parent=0 // loop_header_branch
    %17 = sbr.rel (%p15) target = $region8
  $region5: #{resblock_forward.3} parent=0 // loop_body
    %s19 = ssub.s32 %s14, 1
    %s20 = ssub.s32 %s14, 2
    %s21 = sadd.s32 %s14, 1
    %s22 = ssub.s32 %s14, %s21
    %p23 = scmp.eq.s32.totalorder %s22, 0
    %s25 = sadd.s32 %s24, 1
    %s26 = scalar_select %p23, %s24, %s25
    %p29 = pneg %p23
    %p30 = scmp.eq.s32.totalorder %s14, 1
    %p31 = por %p29, %p30
    %p32 = scmp.ne.s32.totalorder %s24, %s27
    %p33 = scmp.eq.s32.totalorder %s14, 0
    %p34 = por %p32, %p33
    %p35 = scmp.ne.s32.totalorder %s24, %s27
    %p36 = scmp.eq.s32.totalorder %s19, 1
    %p37 = por %p35, %p36
    %p38 = scmp.ne.s32.totalorder %s27, %s28
    %p39 = scmp.eq.s32.totalorder %s19, 0
    %p40 = por %p38, %p39
    %p41 = scmp.ne.s32.totalorder %s27, %s28
    %p42 = scmp.eq.s32.totalorder %s20, 1
    %p43 = por %p41, %p42
    %p45 = scmp.ne.s32.totalorder %s28, %s44
    %p46 = scmp.eq.s32.totalorder %s20, 0
    %p47 = por %p45, %p46
    %s49 = sadd.s32 %s48, 1
    %p52 = scmp.eq.s32.totalorder %s14, 1
    %p53 = scmp.ne.s32.totalorder %s48, %s50
    %p54 = scmp.eq.s32.totalorder %s14, 0
    %p55 = por %p53, %p54
    %p56 = scmp.ne.s32.totalorder %s48, %s50
    %p57 = scmp.eq.s32.totalorder %s19, 1
    %p58 = por %p56, %p57
    %p59 = scmp.ne.s32.totalorder %s50, %s51
    %p60 = scmp.eq.s32.totalorder %s19, 0
    %p61 = por %p59, %p60
    %p62 = scmp.ne.s32.totalorder %s50, %s51
    %p63 = scmp.eq.s32.totalorder %s20, 1
    %p64 = por %p62, %p63
    %p66 = scmp.ne.s32.totalorder %s51, %s65
    %p67 = scmp.eq.s32.totalorder %s20, 0
    %p68 = por %p66, %p67
    %s70 = sadd.s32 %s69, 1
    %p73 = scmp.eq.s32.totalorder %s14, 1
    %p74 = scmp.ne.s32.totalorder %s69, %s71
    %p75 = scmp.eq.s32.totalorder %s14, 0
    %p76 = por %p74, %p75
    %p77 = scmp.ne.s32.totalorder %s69, %s71
    %p78 = scmp.eq.s32.totalorder %s19, 1
    %p79 = por %p77, %p78
    %p80 = scmp.ne.s32.totalorder %s71, %s72
    %p81 = scmp.eq.s32.totalorder %s19, 0
    %p82 = por %p80, %p81
    %p83 = scmp.ne.s32.totalorder %s71, %s72
    %p84 = scmp.eq.s32.totalorder %s20, 1
    %p85 = por %p83, %p84
    %p87 = scmp.ne.s32.totalorder %s72, %s86
    %p88 = scmp.eq.s32.totalorder %s20, 0
    %p89 = por %p87, %p88
    %s91 = sadd.s32 %s90, 1
    %p94 = scmp.eq.s32.totalorder %s14, 1
    %p95 = scmp.ne.s32.totalorder %s90, %s92
    %p96 = scmp.eq.s32.totalorder %s14, 0
    %p97 = por %p95, %p96
    %p98 = scmp.ne.s32.totalorder %s90, %s92
    %p99 = scmp.eq.s32.totalorder %s19, 1
    %p100 = por %p98, %p99
    %p101 = scmp.ne.s32.totalorder %s92, %s93
    %p102 = scmp.eq.s32.totalorder %s19, 0
    %p103 = por %p101, %p102
    %p104 = scmp.ne.s32.totalorder %s92, %s93
    %p105 = scmp.eq.s32.totalorder %s20, 1
    %p106 = por %p104, %p105
    %p108 = scmp.ne.s32.totalorder %s93, %s107
    %p109 = scmp.eq.s32.totalorder %s20, 0
    %p110 = por %p108, %p109
    %s112 = sadd.s32 %s111, 1
    %p115 = scmp.eq.s32.totalorder %s14, 1
    %p116 = scmp.ne.s32.totalorder %s111, %s113
    %p117 = scmp.eq.s32.totalorder %s14, 0
    %p118 = por %p116, %p117
    %p119 = scmp.ne.s32.totalorder %s111, %s113
    %p120 = scmp.eq.s32.totalorder %s19, 1
    %p121 = por %p119, %p120
    %p122 = scmp.ne.s32.totalorder %s113, %s114
    %p123 = scmp.eq.s32.totalorder %s19, 0
    %p124 = por %p122, %p123
    %p125 = scmp.ne.s32.totalorder %s113, %s114
    %p126 = scmp.eq.s32.totalorder %s20, 1
    %p127 = por %p125, %p126
    %p129 = scmp.ne.s32.totalorder %s114, %s128
    %p130 = scmp.eq.s32.totalorder %s20, 0
    %p131 = por %p129, %p130
    %s132 = ssub.s32 %s14, %s21
    %p133 = scmp.eq.s32.totalorder %s132, 0
    %s135 = sadd.s32 %s134, 1
    %s136 = scalar_select %p133, %s134, %s135
    %p139 = pneg %p133
    %p140 = scmp.eq.s32.totalorder %s14, 1
    %p141 = por %p139, %p140
    %p142 = scmp.ne.s32.totalorder %s134, %s137
    %p143 = scmp.eq.s32.totalorder %s14, 0
    %p144 = por %p142, %p143
    %p145 = scmp.ne.s32.totalorder %s134, %s137
    %p146 = scmp.eq.s32.totalorder %s19, 1
    %p147 = por %p145, %p146
    %p148 = scmp.ne.s32.totalorder %s137, %s138
    %p149 = scmp.eq.s32.totalorder %s19, 0
    %p150 = por %p148, %p149
    %p151 = scmp.ne.s32.totalorder %s137, %s138
    %p152 = scmp.eq.s32.totalorder %s20, 1
    %p153 = por %p151, %p152
    %p155 = scmp.ne.s32.totalorder %s138, %s154
    %p156 = scmp.eq.s32.totalorder %s20, 0
    %p157 = por %p155, %p156
    %s159 = sadd.s32 %s158, 1
    %p162 = scmp.eq.s32.totalorder %s14, 1
    %p163 = scmp.ne.s32.totalorder %s158, %s160
    %p164 = scmp.eq.s32.totalorder %s14, 0
    %p165 = por %p163, %p164
    %p166 = scmp.ne.s32.totalorder %s158, %s160
    %p167 = scmp.eq.s32.totalorder %s19, 1
    %p168 = por %p166, %p167
    %p169 = scmp.ne.s32.totalorder %s160, %s161
    %p170 = scmp.eq.s32.totalorder %s19, 0
    %p171 = por %p169, %p170
    %p172 = scmp.ne.s32.totalorder %s160, %s161
    %p173 = scmp.eq.s32.totalorder %s20, 1
    %p174 = por %p172, %p173
    %p176 = scmp.ne.s32.totalorder %s161, %s175
    %p177 = scmp.eq.s32.totalorder %s20, 0
    %p178 = por %p176, %p177
    %s180 = sadd.s32 %s179, 1
    %p183 = scmp.eq.s32.totalorder %s14, 1
    %p184 = scmp.ne.s32.totalorder %s179, %s181
    %p185 = scmp.eq.s32.totalorder %s14, 0
    %p186 = por %p184, %p185
    %p187 = scmp.ne.s32.totalorder %s179, %s181
    %p188 = scmp.eq.s32.totalorder %s19, 1
    %p189 = por %p187, %p188
    %p190 = scmp.ne.s32.totalorder %s181, %s182
    %p191 = scmp.eq.s32.totalorder %s19, 0
    %p192 = por %p190, %p191
    %p193 = scmp.ne.s32.totalorder %s181, %s182
    %p194 = scmp.eq.s32.totalorder %s20, 1
    %p195 = por %p193, %p194
    %p197 = scmp.ne.s32.totalorder %s182, %s196
    %p198 = scmp.eq.s32.totalorder %s20, 0
    %p199 = por %p197, %p198
    %p200 = scmp.le.s32.totalorder 1, %s14
    %p201 = scmp.lt.s32.totalorder %s14, 3
    %p202 = pnand %p200, %p201
    %p203 = pneg %p202
    // Predicated region
    $region9: #{resblock_forward.3} parent=5 // pred_check
      _
    $region10: #{resblock_forward.3} parent=5 // pred_check_branch
      %205 = sbr.rel (%p202) target = $region12
    $region11: #{resblock_forward.3} parent=5 // pred_region
      %s206 = ssub.s32 %s14, 1
      // Predicated region
      $region13: #{resblock_forward.3} parent=11 // pred_check
        %p207 = pneg %p61
      $region14: #{resblock_forward.3} parent=11 // pred_check_branch
        %209 = sbr.rel (%p207) target = $region16
      $region15: #{resblock_forward.3} parent=11 // pred_region
        _
      $region16: #{resblock_forward.3} parent=11 // pred_fallthru
        _
      // Predicated region
      $region17: #{resblock_forward.3} parent=11 // pred_check
        %p210 = pneg %p82
      $region18: #{resblock_forward.3} parent=11 // pred_check_branch
        %212 = sbr.rel (%p210) target = $region20
      $region19: #{resblock_forward.3} parent=11 // pred_region
        _
      $region20: #{resblock_forward.3} parent=11 // pred_fallthru
        _
      // Predicated region
      $region21: #{resblock_forward.3} parent=11 // pred_check
        %p213 = pneg %p103
      $region22: #{resblock_forward.3} parent=11 // pred_check_branch
        %215 = sbr.rel (%p213) target = $region24
      $region23: #{resblock_forward.3} parent=11 // pred_region
        _
      $region24: #{resblock_forward.3} parent=11 // pred_fallthru
        _
      // Predicated region
      $region25: #{resblock_forward.3} parent=11 // pred_check
        %p216 = pneg %p124
      $region26: #{resblock_forward.3} parent=11 // pred_check_branch
        %218 = sbr.rel (%p216) target = $region28
      $region27: #{resblock_forward.3} parent=11 // pred_region
        _
      $region28: #{resblock_forward.3} parent=11 // pred_fallthru
        _
    $region12: #{resblock_forward.3} parent=5 // pred_fallthru
      _
    %p219 = scmp.lt.s32.totalorder %s14, 2
    // Predicated region
    $region29: #{resblock_forward.3} parent=5 // pred_check
      %p220 = pneg %p219
    $region30: #{resblock_forward.3} parent=5 // pred_check_branch
      %222 = sbr.rel (%p220) target = $region32
    $region31: #{resblock_forward.3} parent=5 // pred_region
      // Predicated region
      $region33: #{resblock_forward.3} parent=31 // pred_check
        %p223 = pneg %p34
      $region34: #{resblock_forward.3} parent=31 // pred_check_branch
        %225 = sbr.rel (%p223) target = $region36
      $region35: #{resblock_forward.3} parent=31 // pred_region
        %p226 = scmp.lt.s32.totalorder %s14, 1
        %s227 = scalar_select %p226, %s14, 1
        %s228 = smul.addr %s227, 2
        %s229 = smul.addr %s228, 4
        %s230 = scalar_lea.vmem %s0, %s229
      $region36: #{resblock_forward.3} parent=31 // pred_fallthru
        _
    $region32: #{resblock_forward.3} parent=5 // pred_fallthru
      _
    %p231 = scmp.le.s32.totalorder 1, %s14
    %p232 = scmp.lt.s32.totalorder %s14, 3
    %p233 = pnand %p231, %p232
    %p234 = pneg %p233
    // Predicated region
    $region37: #{resblock_forward.3} parent=5 // pred_check
      _
    $region38: #{resblock_forward.3} parent=5 // pred_check_branch
      %236 = sbr.rel (%p233) target = $region40
    $region39: #{resblock_forward.3} parent=5 // pred_region
      %s237 = ssub.s32 %s14, 1
      %p238 = scmp.lt.s32.totalorder %s19, 1
      %s239 = scalar_select %p238, %s19, 1
      %s240 = smul.addr %s239, 2
      %s241 = smul.addr %s240, 4
      %s242 = scalar_lea.vmem %s0, %s241
      %p243 = pneg %p40
      %p244 = pneg %p37
      %p245 = pneg %p61
      %p246 = pneg %p58
      %p247 = pneg %p82
      %p248 = pneg %p79
      %p249 = pneg %p103
      %p250 = pneg %p100
      %p251 = pneg %p124
      %p252 = pneg %p121
      %p253 = pneg %p150
      %p254 = pneg %p147
      %p255 = scmp.lt.s32.totalorder %s19, 1
      %s256 = scalar_select %p255, %s19, 1
      %s257 = smul.addr %s256, 2
      %s258 = smul.addr %s257, 8
      %s259 = scalar_lea.vmem %s5, %s258
      %p260 = pneg %p171
      %p261 = pneg %p168
      %p262 = pneg %p192
      %p263 = pneg %p189
      %p264 = scmp.lt.s32.totalorder %s19, 1
      %s265 = scalar_select %p264, %s19, 1
      %s266 = smul.addr %s265, 2
      %s267 = smul.addr %s266, 4
      %s268 = scalar_lea.vmem %s0, %s267
      %p269 = scmp.lt.s32.totalorder %s19, 1
      %s270 = scalar_select %p269, %s19, 1
      %s271 = smul.addr %s270, 2
      %s272 = smul.addr %s271, 8
      %s273 = scalar_lea.vmem %s5, %s272
      %p274 = scmp.eq.s32.totalorder %s19, 0
      // Predicated region
      $region41: #{resblock_forward.3} parent=39 // pred_check
        %p275 = pneg %p274
      $region42: #{resblock_forward.3} parent=39 // pred_check_branch
        %277 = sbr.rel (%p275) target = $region44
      $region43: #{resblock_forward.3} parent=39 // pred_region
        %vm278 = vcmask 7168
        %279 = vst.msk [vmem:[%s6] sm:$0xff] %vm278, 0.0
        %280 = vst.msk [vmem:[%s7] sm:$0xff] %vm278, 0.0
      $region44: #{resblock_forward.3} parent=39 // pred_fallthru
        _
      %v281 = vld [vmem:[%s268] sm:$0xff]
      %v283 = vcombine.high %v281, %v281
      %285 = vrot.lane.b32.xlu0 %v281, 17
      %v286 = vpop.permute.xlu0 %285
      %287 = vrot.lane.b32.xlu0 %v283, 17
      %v288 = vpop.permute.xlu0 %287
      %v289 = vlaneseq
      %v290 = vand.u32 %v289, 127
      %vm291 = vcmp.lt.s32.totalorder %v290, 17
      %v292 = vsel %vm291, %v286, %v288
      %v293 = vsel %vm291, %v288, %v286
      %v294 = vld [vmem:[%s4] sm:$0x3]
      %v296 = vlaneseq
      %v297 = vshrl.u32 %v296, 7
      %v298 = vsub.s32 0, %v297
      %v299 = vrot.slane %v294, %v298
      %v300 = vlaneseq
      %v301 = vshrl.u32 %v300, 7
      %v302 = vsub.s32 1, %v301
      %v303 = vrot.slane %v294, %v302
      %v306 = vmul.f32 %v293, %v299
      %v307 = vmul.f32 %v292, %v303
      %v308 = vld [vmem:[%s3] sm:$0xff]
      %309 = vrot.lane.b32.xlu0 %v281, 16
      %v310 = vpop.permute.xlu0 %309
      %311 = vrot.lane.b32.xlu0 %v283, 16
      %v312 = vpop.permute.xlu0 %311
      %vm313 = vcmp.lt.s32.totalorder %v290, 16
      %v314 = vsel %vm313, %v310, %v312
      %v315 = vsel %vm313, %v312, %v310
      %s316 = scalar_lea.vmem %s4, 2
      %v317 = vld [vmem:[%s316] sm:$0x3]
      %v319 = vlaneseq
      %v320 = vshrl.u32 %v319, 7
      %v321 = vsub.s32 0, %v320
      %v322 = vrot.slane %v317, %v321
      %v323 = vlaneseq
      %v324 = vshrl.u32 %v323, 7
      %v325 = vsub.s32 1, %v324
      %v326 = vrot.slane %v317, %v325
      %v329 = vmul.f32 %v315, %v322
      %v330 = vmul.f32 %v314, %v326
      %s331 = scalar_lea.vmem %s3, 8
      %v332 = vld [vmem:[%s331] sm:$0xff]
      %vm333 = vcmask 31744
      %v335 = vsel %vm333, %v332, 0
      %vm337 = vcmask 1043456
      %v339 = vsel %vm337, %v329, 0
      %v342 = vsel %vm337, %v330, 0
      %344 = vmatprep.subr.mxu0 %v342
      %345 = vmatpush1.msra.mxu0 %v339
      %346 = vmatprep.subr.mxu0 0.0
      %347 = vmatpush1.msra.mxu0 0.0
      %348 = vmatprep.subr.mxu0 0.0
      %349 = vmatpush1.msra.mxu0 0.0
      %350 = vmatprep.subr.mxu0 0.0
      %351 = vmatpush1.msra.mxu0 0.0
      %352 = vmatprep.subr.mxu0 0.0
      %353 = vmatpush1.msra.mxu0 0.0
      %354 = vmatprep.subr.mxu0 0.0
      %355 = vmatpush1.msra.mxu0 0.0
      %356 = vmatprep.subr.mxu0 0.0
      %357 = vmatpush1.msra.mxu0 0.0
      %358 = vmatprep.subr.mxu0 0.0
      %359 = vmatpush1.msra.mxu0 0.0
      %360 = vmatprep.subr.mxu0 0.0
      %361 = vmatpush1.msra.mxu0 0.0
      %362 = vmatprep.subr.mxu0 0.0
      %363 = vmatpush1.msra.mxu0 0.0
      %364 = vmatprep.subr.mxu0 0.0
      %365 = vmatpush1.msra.mxu0 0.0
      %366 = vmatprep.subr.mxu0 0.0
      %367 = vmatpush1.msra.mxu0 0.0
      %368 = vmatprep.subr.mxu0 0.0
      %369 = vmatpush1.msra.mxu0 0.0
      %370 = vmatprep.subr.mxu0 0.0
      %371 = vmatpush1.msra.mxu0 0.0
      %372 = vmatprep.subr.mxu0 0.0
      %373 = vmatpush1.msra.mxu0 0.0
      %374 = vmatprep.subr.mxu0 0.0
      %375 = vmatpush1.msra.mxu0 0.0
      %376 = vmatprep.subr.mxu0 0.0
      %377 = vmatpush1.msra.mxu0 0.0
      %378 = vmatprep.subr.mxu0 0.0
      %379 = vmatpush1.msra.mxu0 0.0
      %380 = vmatprep.subr.mxu0 0.0
      %381 = vmatpush1.msra.mxu0 0.0
      %382 = vmatprep.subr.mxu0 0.0
      %383 = vmatpush1.msra.mxu0 0.0
      %384 = vmatprep.subr.mxu0 0.0
      %385 = vmatpush1.msra.mxu0 0.0
      %386 = vmatprep.subr.mxu0 0.0
      %387 = vmatpush1.msra.mxu0 0.0
      %388 = vmatprep.subr.mxu0 0.0
      %389 = vmatpush1.msra.mxu0 0.0
      %390 = vmatprep.subr.mxu0 0.0
      %391 = vmatpush1.msra.mxu0 0.0
      %392 = vmatprep.subr.mxu0 0.0
      %393 = vmatpush1.msra.mxu0 0.0
      %394 = vmatprep.subr.mxu0 0.0
      %395 = vmatpush1.msra.mxu0 0.0
      %396 = vmatprep.subr.mxu0 0.0
      %397 = vmatpush1.msra.mxu0 0.0
      %398 = vmatprep.subr.mxu0 0.0
      %399 = vmatpush1.msra.mxu0 0.0
      %400 = vmatprep.subr.mxu0 0.0
      %401 = vmatpush1.msra.mxu0 0.0
      %402 = vmatprep.subr.mxu0 0.0
      %403 = vmatpush1.msra.mxu0 0.0
      %404 = vmatprep.subr.mxu0 0.0
      %405 = vmatpush1.msra.mxu0 0.0
      %406 = vmatprep.subr.mxu0 0.0
      %407 = vmatpush1.msra.mxu0 0.0
      %408 = vmatprep.mubr.f32.mxu0 0.0
      %409 = vmatmul.mubr.f32.gmra.mrb[0].mxu0 %v335
      %v410 = vpop.f32.mrb[0].mxu0
      %v411 = vadd.f32 0.0, %v410
      %v412 = vpop.f32.mrb[0].mxu0
      %v413 = vadd.f32 0.0, %v412
      %414 = vdwg.mxu0
      %v416 = vsel %vm333, %v308, 0
      %v419 = vsel %vm337, %v306, 0
      %v422 = vsel %vm337, %v307, 0
      %424 = vmatprep.subr.mxu0 %v422
      %425 = vmatpush1.msra.mxu0 %v419
      %426 = vmatprep.subr.mxu0 0.0
      %427 = vmatpush1.msra.mxu0 0.0
      %428 = vmatprep.subr.mxu0 0.0
      %429 = vmatpush1.msra.mxu0 0.0
      %430 = vmatprep.subr.mxu0 0.0
      %431 = vmatpush1.msra.mxu0 0.0
      %432 = vmatprep.subr.mxu0 0.0
      %433 = vmatpush1.msra.mxu0 0.0
      %434 = vmatprep.subr.mxu0 0.0
      %435 = vmatpush1.msra.mxu0 0.0
      %436 = vmatprep.subr.mxu0 0.0
      %437 = vmatpush1.msra.mxu0 0.0
      %438 = vmatprep.subr.mxu0 0.0
      %439 = vmatpush1.msra.mxu0 0.0
      %440 = vmatprep.subr.mxu0 0.0
      %441 = vmatpush1.msra.mxu0 0.0
      %442 = vmatprep.subr.mxu0 0.0
      %443 = vmatpush1.msra.mxu0 0.0
      %444 = vmatprep.subr.mxu0 0.0
      %445 = vmatpush1.msra.mxu0 0.0
      %446 = vmatprep.subr.mxu0 0.0
      %447 = vmatpush1.msra.mxu0 0.0
      %448 = vmatprep.subr.mxu0 0.0
      %449 = vmatpush1.msra.mxu0 0.0
      %450 = vmatprep.subr.mxu0 0.0
      %451 = vmatpush1.msra.mxu0 0.0
      %452 = vmatprep.subr.mxu0 0.0
      %453 = vmatpush1.msra.mxu0 0.0
      %454 = vmatprep.subr.mxu0 0.0
      %455 = vmatpush1.msra.mxu0 0.0
      %456 = vmatprep.subr.mxu0 0.0
      %457 = vmatpush1.msra.mxu0 0.0
      %458 = vmatprep.subr.mxu0 0.0
      %459 = vmatpush1.msra.mxu0 0.0
      %460 = vmatprep.subr.mxu0 0.0
      %461 = vmatpush1.msra.mxu0 0.0
      %462 = vmatprep.subr.mxu0 0.0
      %463 = vmatpush1.msra.mxu0 0.0
      %464 = vmatprep.subr.mxu0 0.0
      %465 = vmatpush1.msra.mxu0 0.0
      %466 = vmatprep.subr.mxu0 0.0
      %467 = vmatpush1.msra.mxu0 0.0
      %468 = vmatprep.subr.mxu0 0.0
      %469 = vmatpush1.msra.mxu0 0.0
      %470 = vmatprep.subr.mxu0 0.0
      %471 = vmatpush1.msra.mxu0 0.0
      %472 = vmatprep.subr.mxu0 0.0
      %473 = vmatpush1.msra.mxu0 0.0
      %474 = vmatprep.subr.mxu0 0.0
      %475 = vmatpush1.msra.mxu0 0.0
      %476 = vmatprep.subr.mxu0 0.0
      %477 = vmatpush1.msra.mxu0 0.0
      %478 = vmatprep.subr.mxu0 0.0
      %479 = vmatpush1.msra.mxu0 0.0
      %480 = vmatprep.subr.mxu0 0.0
      %481 = vmatpush1.msra.mxu0 0.0
      %482 = vmatprep.subr.mxu0 0.0
      %483 = vmatpush1.msra.mxu0 0.0
      %484 = vmatprep.subr.mxu0 0.0
      %485 = vmatpush1.msra.mxu0 0.0
      %486 = vmatprep.subr.mxu0 0.0
      %487 = vmatpush1.msra.mxu0 0.0
      %488 = vmatprep.mubr.f32.mxu0 0.0
      %489 = vmatmul.mubr.f32.gmra.mrb[0].mxu0 %v416
      %v490 = vpop.f32.mrb[0].mxu0
      %v491 = vadd.f32 %v411, %v490
      %v492 = vpop.f32.mrb[0].mxu0
      %v493 = vadd.f32 %v413, %v492
      %494 = vdwg.mxu0
      %495 = vrot.lane.b32.xlu0 %v281, 15
      %v496 = vpop.permute.xlu0 %495
      %497 = vrot.lane.b32.xlu0 %v283, 15
      %v498 = vpop.permute.xlu0 %497
      %vm499 = vcmp.lt.s32.totalorder %v290, 15
      %v500 = vsel %vm499, %v496, %v498
      %v501 = vsel %vm499, %v498, %v496
      %s502 = scalar_lea.vmem %s4, 4
      %v503 = vld [vmem:[%s502] sm:$0x3]
      %v505 = vlaneseq
      %v506 = vshrl.u32 %v505, 7
      %v507 = vsub.s32 0, %v506
      %v508 = vrot.slane %v503, %v507
      %v509 = vlaneseq
      %v510 = vshrl.u32 %v509, 7
      %v511 = vsub.s32 1, %v510
      %v512 = vrot.slane %v503, %v511
      %v515 = vmul.f32 %v501, %v508
      %v516 = vmul.f32 %v500, %v512
      %s517 = scalar_lea.vmem %s3, 16
      %v518 = vld [vmem:[%s517] sm:$0xff]
      %v520 = vsel %vm333, %v518, 0
      %v523 = vsel %vm337, %v515, 0
      %v526 = vsel %vm337, %v516, 0
      %528 = vmatprep.subr.mxu0 %v526
      %529 = vmatpush1.msra.mxu0 %v523
      %530 = vmatprep.subr.mxu0 0.0
      %531 = vmatpush1.msra.mxu0 0.0
      %532 = vmatprep.subr.mxu0 0.0
      %533 = vmatpush1.msra.mxu0 0.0
      %534 = vmatprep.subr.mxu0 0.0
      %535 = vmatpush1.msra.mxu0 0.0
      %536 = vmatprep.subr.mxu0 0.0
      %537 = vmatpush1.msra.mxu0 0.0
      %538 = vmatprep.subr.mxu0 0.0
      %539 = vmatpush1.msra.mxu0 0.0
      %540 = vmatprep.subr.mxu0 0.0
      %541 = vmatpush1.msra.mxu0 0.0
      %542 = vmatprep.subr.mxu0 0.0
      %543 = vmatpush1.msra.mxu0 0.0
      %544 = vmatprep.subr.mxu0 0.0
      %545 = vmatpush1.msra.mxu0 0.0
      %546 = vmatprep.subr.mxu0 0.0
      %547 = vmatpush1.msra.mxu0 0.0
      %548 = vmatprep.subr.mxu0 0.0
      %549 = vmatpush1.msra.mxu0 0.0
      %550 = vmatprep.subr.mxu0 0.0
      %551 = vmatpush1.msra.mxu0 0.0
      %552 = vmatprep.subr.mxu0 0.0
      %553 = vmatpush1.msra.mxu0 0.0
      %554 = vmatprep.subr.mxu0 0.0
      %555 = vmatpush1.msra.mxu0 0.0
      %556 = vmatprep.subr.mxu0 0.0
      %557 = vmatpush1.msra.mxu0 0.0
      %558 = vmatprep.subr.mxu0 0.0
      %559 = vmatpush1.msra.mxu0 0.0
      %560 = vmatprep.subr.mxu0 0.0
      %561 = vmatpush1.msra.mxu0 0.0
      %562 = vmatprep.subr.mxu0 0.0
      %563 = vmatpush1.msra.mxu0 0.0
      %564 = vmatprep.subr.mxu0 0.0
      %565 = vmatpush1.msra.mxu0 0.0
      %566 = vmatprep.subr.mxu0 0.0
      %567 = vmatpush1.msra.mxu0 0.0
      %568 = vmatprep.subr.mxu0 0.0
      %569 = vmatpush1.msra.mxu0 0.0
      %570 = vmatprep.subr.mxu0 0.0
      %571 = vmatpush1.msra.mxu0 0.0
      %572 = vmatprep.subr.mxu0 0.0
      %573 = vmatpush1.msra.mxu0 0.0
      %574 = vmatprep.subr.mxu0 0.0
      %575 = vmatpush1.msra.mxu0 0.0
      %576 = vmatprep.subr.mxu0 0.0
      %577 = vmatpush1.msra.mxu0 0.0
      %578 = vmatprep.subr.mxu0 0.0
      %579 = vmatpush1.msra.mxu0 0.0
      %580 = vmatprep.subr.mxu0 0.0
      %581 = vmatpush1.msra.mxu0 0.0
      %582 = vmatprep.subr.mxu0 0.0
      %583 = vmatpush1.msra.mxu0 0.0
      %584 = vmatprep.subr.mxu0 0.0
      %585 = vmatpush1.msra.mxu0 0.0
      %586 = vmatprep.subr.mxu0 0.0
      %587 = vmatpush1.msra.mxu0 0.0
      %588 = vmatprep.subr.mxu0 0.0
      %589 = vmatpush1.msra.mxu0 0.0
      %590 = vmatprep.subr.mxu0 0.0
      %591 = vmatpush1.msra.mxu0 0.0
      %592 = vmatprep.mubr.f32.mxu0 0.0
      %593 = vmatmul.mubr.f32.gmra.mrb[0].mxu0 %v520
      %v594 = vpop.f32.mrb[0].mxu0
      %v595 = vadd.f32 0.0, %v594
      %v596 = vpop.f32.mrb[0].mxu0
      %v597 = vadd.f32 0.0, %v596
      %598 = vdwg.mxu0
      %v599 = vadd.f32 %v491, %v595
      %v600 = vadd.f32 %v493, %v597
      %601 = vrot.lane.b32.xlu0 %v281, 1
      %v602 = vpop.permute.xlu0 %601
      %603 = vrot.lane.b32.xlu0 %v283, 1
      %v604 = vpop.permute.xlu0 %603
      %vm605 = vcmp.lt.s32.totalorder %v290, 1
      %v606 = vsel %vm605, %v602, %v604
      %v607 = vsel %vm605, %v604, %v602
      %s608 = scalar_lea.vmem %s4, 6
      %v609 = vld [vmem:[%s608] sm:$0x3]
      %v611 = vlaneseq
      %v612 = vshrl.u32 %v611, 7
      %v613 = vsub.s32 0, %v612
      %v614 = vrot.slane %v609, %v613
      %v615 = vlaneseq
      %v616 = vshrl.u32 %v615, 7
      %v617 = vsub.s32 1, %v616
      %v618 = vrot.slane %v609, %v617
      %v621 = vmul.f32 %v607, %v614
      %v622 = vmul.f32 %v606, %v618
      %s623 = scalar_lea.vmem %s3, 24
      %v624 = vld [vmem:[%s623] sm:$0xff]
      %v626 = vsel %vm333, %v624, 0
      %v629 = vsel %vm337, %v621, 0
      %v632 = vsel %vm337, %v622, 0
      %634 = vmatprep.subr.mxu0 %v632
      %635 = vmatpush1.msra.mxu0 %v629
      %636 = vmatprep.subr.mxu0 0.0
      %637 = vmatpush1.msra.mxu0 0.0
      %638 = vmatprep.subr.mxu0 0.0
      %639 = vmatpush1.msra.mxu0 0.0
      %640 = vmatprep.subr.mxu0 0.0
      %641 = vmatpush1.msra.mxu0 0.0
      %642 = vmatprep.subr.mxu0 0.0
      %643 = vmatpush1.msra.mxu0 0.0
      %644 = vmatprep.subr.mxu0 0.0
      %645 = vmatpush1.msra.mxu0 0.0
      %646 = vmatprep.subr.mxu0 0.0
      %647 = vmatpush1.msra.mxu0 0.0
      %648 = vmatprep.subr.mxu0 0.0
      %649 = vmatpush1.msra.mxu0 0.0
      %650 = vmatprep.subr.mxu0 0.0
      %651 = vmatpush1.msra.mxu0 0.0
      %652 = vmatprep.subr.mxu0 0.0
      %653 = vmatpush1.msra.mxu0 0.0
      %654 = vmatprep.subr.mxu0 0.0
      %655 = vmatpush1.msra.mxu0 0.0
      %656 = vmatprep.subr.mxu0 0.0
      %657 = vmatpush1.msra.mxu0 0.0
      %658 = vmatprep.subr.mxu0 0.0
      %659 = vmatpush1.msra.mxu0 0.0
      %660 = vmatprep.subr.mxu0 0.0
      %661 = vmatpush1.msra.mxu0 0.0
      %662 = vmatprep.subr.mxu0 0.0
      %663 = vmatpush1.msra.mxu0 0.0
      %664 = vmatprep.subr.mxu0 0.0
      %665 = vmatpush1.msra.mxu0 0.0
      %666 = vmatprep.subr.mxu0 0.0
      %667 = vmatpush1.msra.mxu0 0.0
      %668 = vmatprep.subr.mxu0 0.0
      %669 = vmatpush1.msra.mxu0 0.0
      %670 = vmatprep.subr.mxu0 0.0
      %671 = vmatpush1.msra.mxu0 0.0
      %672 = vmatprep.subr.mxu0 0.0
      %673 = vmatpush1.msra.mxu0 0.0
      %674 = vmatprep.subr.mxu0 0.0
      %675 = vmatpush1.msra.mxu0 0.0
      %676 = vmatprep.subr.mxu0 0.0
      %677 = vmatpush1.msra.mxu0 0.0
      %678 = vmatprep.subr.mxu0 0.0
      %679 = vmatpush1.msra.mxu0 0.0
      %680 = vmatprep.subr.mxu0 0.0
      %681 = vmatpush1.msra.mxu0 0.0
      %682 = vmatprep.subr.mxu0 0.0
      %683 = vmatpush1.msra.mxu0 0.0
      %684 = vmatprep.subr.mxu0 0.0
      %685 = vmatpush1.msra.mxu0 0.0
      %686 = vmatprep.subr.mxu0 0.0
      %687 = vmatpush1.msra.mxu0 0.0
      %688 = vmatprep.subr.mxu0 0.0
      %689 = vmatpush1.msra.mxu0 0.0
      %690 = vmatprep.subr.mxu0 0.0
      %691 = vmatpush1.msra.mxu0 0.0
      %692 = vmatprep.subr.mxu0 0.0
      %693 = vmatpush1.msra.mxu0 0.0
      %694 = vmatprep.subr.mxu0 0.0
      %695 = vmatpush1.msra.mxu0 0.0
      %696 = vmatprep.subr.mxu0 0.0
      %697 = vmatpush1.msra.mxu0 0.0
      %698 = vmatprep.mubr.f32.mxu0 0.0
      %699 = vmatmul.mubr.f32.gmra.mrb[0].mxu0 %v626
      %v700 = vpop.f32.mrb[0].mxu0
      %v701 = vadd.f32 0.0, %v700
      %v702 = vpop.f32.mrb[0].mxu0
      %v703 = vadd.f32 0.0, %v702
      %704 = vdwg.mxu0
      %v705 = vadd.f32 %v599, %v701
      %v706 = vadd.f32 %v600, %v703
      %s707 = scalar_lea.vmem %s3, 32
      %v708 = vld [vmem:[%s707] sm:$0xff]
      %v710 = vsel %vm333, %v708, 0
      %v712 = vsel %vm337, %v281, 0
      %v714 = vsel %vm337, %v283, 0
      %716 = vmatprep.subr.mxu0 %v714
      %717 = vmatpush1.msra.mxu0 %v712
      %718 = vmatprep.subr.mxu0 0.0
      %719 = vmatpush1.msra.mxu0 0.0
      %720 = vmatprep.subr.mxu0 0.0
      %721 = vmatpush1.msra.mxu0 0.0
      %722 = vmatprep.subr.mxu0 0.0
      %723 = vmatpush1.msra.mxu0 0.0
      %724 = vmatprep.subr.mxu0 0.0
      %725 = vmatpush1.msra.mxu0 0.0
      %726 = vmatprep.subr.mxu0 0.0
      %727 = vmatpush1.msra.mxu0 0.0
      %728 = vmatprep.subr.mxu0 0.0
      %729 = vmatpush1.msra.mxu0 0.0
      %730 = vmatprep.subr.mxu0 0.0
      %731 = vmatpush1.msra.mxu0 0.0
      %732 = vmatprep.subr.mxu0 0.0
      %733 = vmatpush1.msra.mxu0 0.0
      %734 = vmatprep.subr.mxu0 0.0
      %735 = vmatpush1.msra.mxu0 0.0
      %736 = vmatprep.subr.mxu0 0.0
      %737 = vmatpush1.msra.mxu0 0.0
      %738 = vmatprep.subr.mxu0 0.0
      %739 = vmatpush1.msra.mxu0 0.0
      %740 = vmatprep.subr.mxu0 0.0
      %741 = vmatpush1.msra.mxu0 0.0
      %742 = vmatprep.subr.mxu0 0.0
      %743 = vmatpush1.msra.mxu0 0.0
      %744 = vmatprep.subr.mxu0 0.0
      %745 = vmatpush1.msra.mxu0 0.0
      %746 = vmatprep.subr.mxu0 0.0
      %747 = vmatpush1.msra.mxu0 0.0
      %748 = vmatprep.subr.mxu0 0.0
      %749 = vmatpush1.msra.mxu0 0.0
      %750 = vmatprep.subr.mxu0 0.0
      %751 = vmatpush1.msra.mxu0 0.0
      %752 = vmatprep.subr.mxu0 0.0
      %753 = vmatpush1.msra.mxu0 0.0
      %754 = vmatprep.subr.mxu0 0.0
      %755 = vmatpush1.msra.mxu0 0.0
      %756 = vmatprep.subr.mxu0 0.0
      %757 = vmatpush1.msra.mxu0 0.0
      %758 = vmatprep.subr.mxu0 0.0
      %759 = vmatpush1.msra.mxu0 0.0
      %760 = vmatprep.subr.mxu0 0.0
      %761 = vmatpush1.msra.mxu0 0.0
      %762 = vmatprep.subr.mxu0 0.0
      %763 = vmatpush1.msra.mxu0 0.0
      %764 = vmatprep.subr.mxu0 0.0
      %765 = vmatpush1.msra.mxu0 0.0
      %766 = vmatprep.subr.mxu0 0.0
      %767 = vmatpush1.msra.mxu0 0.0
      %768 = vmatprep.subr.mxu0 0.0
      %769 = vmatpush1.msra.mxu0 0.0
      %770 = vmatprep.subr.mxu0 0.0
      %771 = vmatpush1.msra.mxu0 0.0
      %772 = vmatprep.subr.mxu0 0.0
      %773 = vmatpush1.msra.mxu0 0.0
      %774 = vmatprep.subr.mxu0 0.0
      %775 = vmatpush1.msra.mxu0 0.0
      %776 = vmatprep.subr.mxu0 0.0
      %777 = vmatpush1.msra.mxu0 0.0
      %778 = vmatprep.subr.mxu0 0.0
      %779 = vmatpush1.msra.mxu0 0.0
      %780 = vmatprep.mubr.f32.mxu0 0.0
      %781 = vmatmul.mubr.f32.gmra.mrb[0].mxu0 %v710
      %v782 = vpop.f32.mrb[0].mxu0
      %v783 = vadd.f32 0.0, %v782
      %v784 = vpop.f32.mrb[0].mxu0
      %v785 = vadd.f32 0.0, %v784
      %786 = vdwg.mxu0
      %v787 = vadd.f32 %v705, %v783
      %v788 = vadd.f32 %v706, %v785
      %789 = vrot.lane.b32.xlu0 %v281, 127
      %v790 = vpop.permute.xlu0 %789
      %791 = vrot.lane.b32.xlu0 %v283, 127
      %v792 = vpop.permute.xlu0 %791
      %vm793 = vcmp.lt.s32.totalorder %v290, 127
      %v794 = vsel %vm793, %v790, %v792
      %v795 = vsel %vm793, %v792, %v790
      %s796 = scalar_lea.vmem %s4, 10
      %v797 = vld [vmem:[%s796] sm:$0x3]
      %v799 = vlaneseq
      %v800 = vshrl.u32 %v799, 7
      %v801 = vsub.s32 0, %v800
      %v802 = vrot.slane %v797, %v801
      %v803 = vlaneseq
      %v804 = vshrl.u32 %v803, 7
      %v805 = vsub.s32 1, %v804
      %v806 = vrot.slane %v797, %v805
      %v809 = vmul.f32 %v794, %v802
      %v810 = vmul.f32 %v795, %v806
      %s811 = scalar_lea.vmem %s3, 40
      %v812 = vld [vmem:[%s811] sm:$0xff]
      %v814 = vsel %vm333, %v812, 0
      %v817 = vsel %vm337, %v809, 0
      %v820 = vsel %vm337, %v810, 0
      %822 = vmatprep.subr.mxu0 %v820
      %823 = vmatpush1.msra.mxu0 %v817
      %824 = vmatprep.subr.mxu0 0.0
      %825 = vmatpush1.msra.mxu0 0.0
      %826 = vmatprep.subr.mxu0 0.0
      %827 = vmatpush1.msra.mxu0 0.0
      %828 = vmatprep.subr.mxu0 0.0
      %829 = vmatpush1.msra.mxu0 0.0
      %830 = vmatprep.subr.mxu0 0.0
      %831 = vmatpush1.msra.mxu0 0.0
      %832 = vmatprep.subr.mxu0 0.0
      %833 = vmatpush1.msra.mxu0 0.0
      %834 = vmatprep.subr.mxu0 0.0
      %835 = vmatpush1.msra.mxu0 0.0
      %836 = vmatprep.subr.mxu0 0.0
      %837 = vmatpush1.msra.mxu0 0.0
      %838 = vmatprep.subr.mxu0 0.0
      %839 = vmatpush1.msra.mxu0 0.0
      %840 = vmatprep.subr.mxu0 0.0
      %841 = vmatpush1.msra.mxu0 0.0
      %842 = vmatprep.subr.mxu0 0.0
      %843 = vmatpush1.msra.mxu0 0.0
      %844 = vmatprep.subr.mxu0 0.0
      %845 = vmatpush1.msra.mxu0 0.0
      %846 = vmatprep.subr.mxu0 0.0
      %847 = vmatpush1.msra.mxu0 0.0
      %848 = vmatprep.subr.mxu0 0.0
      %849 = vmatpush1.msra.mxu0 0.0
      %850 = vmatprep.subr.mxu0 0.0
      %851 = vmatpush1.msra.mxu0 0.0
      %852 = vmatprep.subr.mxu0 0.0
      %853 = vmatpush1.msra.mxu0 0.0
      %854 = vmatprep.subr.mxu0 0.0
      %855 = vmatpush1.msra.mxu0 0.0
      %856 = vmatprep.subr.mxu0 0.0
      %857 = vmatpush1.msra.mxu0 0.0
      %858 = vmatprep.subr.mxu0 0.0
      %859 = vmatpush1.msra.mxu0 0.0
      %860 = vmatprep.subr.mxu0 0.0
      %861 = vmatpush1.msra.mxu0 0.0
      %862 = vmatprep.subr.mxu0 0.0
      %863 = vmatpush1.msra.mxu0 0.0
      %864 = vmatprep.subr.mxu0 0.0
      %865 = vmatpush1.msra.mxu0 0.0
      %866 = vmatprep.subr.mxu0 0.0
      %867 = vmatpush1.msra.mxu0 0.0
      %868 = vmatprep.subr.mxu0 0.0
      %869 = vmatpush1.msra.mxu0 0.0
      %870 = vmatprep.subr.mxu0 0.0
      %871 = vmatpush1.msra.mxu0 0.0
      %872 = vmatprep.subr.mxu0 0.0
      %873 = vmatpush1.msra.mxu0 0.0
      %874 = vmatprep.subr.mxu0 0.0
      %875 = vmatpush1.msra.mxu0 0.0
      %876 = vmatprep.subr.mxu0 0.0
      %877 = vmatpush1.msra.mxu0 0.0
      %878 = vmatprep.subr.mxu0 0.0
      %879 = vmatpush1.msra.mxu0 0.0
      %880 = vmatprep.subr.mxu0 0.0
      %881 = vmatpush1.msra.mxu0 0.0
      %882 = vmatprep.subr.mxu0 0.0
      %883 = vmatpush1.msra.mxu0 0.0
      %884 = vmatprep.subr.mxu0 0.0
      %885 = vmatpush1.msra.mxu0 0.0
      %886 = vmatprep.mubr.f32.mxu0 0.0
      %887 = vmatmul.mubr.f32.gmra.mrb[0].mxu0 %v814
      %v888 = vpop.f32.mrb[0].mxu0
      %v889 = vadd.f32 0.0, %v888
      %v890 = vpop.f32.mrb[0].mxu0
      %v891 = vadd.f32 0.0, %v890
      %892 = vdwg.mxu0
      %v893 = vadd.f32 %v787, %v889
      %v894 = vadd.f32 %v788, %v891
      %895 = vrot.lane.b32.xlu0 %v281, 113
      %v896 = vpop.permute.xlu0 %895
      %897 = vrot.lane.b32.xlu0 %v283, 113
      %v898 = vpop.permute.xlu0 %897
      %vm899 = vcmp.lt.s32.totalorder %v290, 113
      %v900 = vsel %vm899, %v896, %v898
      %v901 = vsel %vm899, %v898, %v896
      %s902 = scalar_lea.vmem %s4, 12
      %v903 = vld [vmem:[%s902] sm:$0x3]
      %v905 = vlaneseq
      %v906 = vshrl.u32 %v905, 7
      %v907 = vsub.s32 0, %v906
      %v908 = vrot.slane %v903, %v907
      %v909 = vlaneseq
      %v910 = vshrl.u32 %v909, 7
      %v911 = vsub.s32 1, %v910
      %v912 = vrot.slane %v903, %v911
      %v915 = vmul.f32 %v900, %v908
      %v916 = vmul.f32 %v901, %v912
      %s917 = scalar_lea.vmem %s3, 48
      %v918 = vld [vmem:[%s917] sm:$0xff]
      %v920 = vsel %vm333, %v918, 0
      %v923 = vsel %vm337, %v915, 0
      %v926 = vsel %vm337, %v916, 0
      %928 = vmatprep.subr.mxu0 %v926
      %929 = vmatpush1.msra.mxu0 %v923
      %930 = vmatprep.subr.mxu0 0.0
      %931 = vmatpush1.msra.mxu0 0.0
      %932 = vmatprep.subr.mxu0 0.0
      %933 = vmatpush1.msra.mxu0 0.0
      %934 = vmatprep.subr.mxu0 0.0
      %935 = vmatpush1.msra.mxu0 0.0
      %936 = vmatprep.subr.mxu0 0.0
      %937 = vmatpush1.msra.mxu0 0.0
      %938 = vmatprep.subr.mxu0 0.0
      %939 = vmatpush1.msra.mxu0 0.0
      %940 = vmatprep.subr.mxu0 0.0
      %941 = vmatpush1.msra.mxu0 0.0
      %942 = vmatprep.subr.mxu0 0.0
      %943 = vmatpush1.msra.mxu0 0.0
      %944 = vmatprep.subr.mxu0 0.0
      %945 = vmatpush1.msra.mxu0 0.0
      %946 = vmatprep.subr.mxu0 0.0
      %947 = vmatpush1.msra.mxu0 0.0
      %948 = vmatprep.subr.mxu0 0.0
      %949 = vmatpush1.msra.mxu0 0.0
      %950 = vmatprep.subr.mxu0 0.0
      %951 = vmatpush1.msra.mxu0 0.0
      %952 = vmatprep.subr.mxu0 0.0
      %953 = vmatpush1.msra.mxu0 0.0
      %954 = vmatprep.subr.mxu0 0.0
      %955 = vmatpush1.msra.mxu0 0.0
      %956 = vmatprep.subr.mxu0 0.0
      %957 = vmatpush1.msra.mxu0 0.0
      %958 = vmatprep.subr.mxu0 0.0
      %959 = vmatpush1.msra.mxu0 0.0
      %960 = vmatprep.subr.mxu0 0.0
      %961 = vmatpush1.msra.mxu0 0.0
      %962 = vmatprep.subr.mxu0 0.0
      %963 = vmatpush1.msra.mxu0 0.0
      %964 = vmatprep.subr.mxu0 0.0
      %965 = vmatpush1.msra.mxu0 0.0
      %966 = vmatprep.subr.mxu0 0.0
      %967 = vmatpush1.msra.mxu0 0.0
      %968 = vmatprep.subr.mxu0 0.0
      %969 = vmatpush1.msra.mxu0 0.0
      %970 = vmatprep.subr.mxu0 0.0
      %971 = vmatpush1.msra.mxu0 0.0
      %972 = vmatprep.subr.mxu0 0.0
      %973 = vmatpush1.msra.mxu0 0.0
      %974 = vmatprep.subr.mxu0 0.0
      %975 = vmatpush1.msra.mxu0 0.0
      %976 = vmatprep.subr.mxu0 0.0
      %977 = vmatpush1.msra.mxu0 0.0
      %978 = vmatprep.subr.mxu0 0.0
      %979 = vmatpush1.msra.mxu0 0.0
      %980 = vmatprep.subr.mxu0 0.0
      %981 = vmatpush1.msra.mxu0 0.0
      %982 = vmatprep.subr.mxu0 0.0
      %983 = vmatpush1.msra.mxu0 0.0
      %984 = vmatprep.subr.mxu0 0.0
      %985 = vmatpush1.msra.mxu0 0.0
      %986 = vmatprep.subr.mxu0 0.0
      %987 = vmatpush1.msra.mxu0 0.0
      %988 = vmatprep.subr.mxu0 0.0
      %989 = vmatpush1.msra.mxu0 0.0
      %990 = vmatprep.subr.mxu0 0.0
      %991 = vmatpush1.msra.mxu0 0.0
      %992 = vmatprep.mubr.f32.mxu0 0.0
      %993 = vmatmul.mubr.f32.gmra.mrb[0].mxu0 %v920
      %v994 = vpop.f32.mrb[0].mxu0
      %v995 = vadd.f32 0.0, %v994
      %v996 = vpop.f32.mrb[0].mxu0
      %v997 = vadd.f32 0.0, %v996
      %998 = vdwg.mxu0
      %v999 = vadd.f32 %v893, %v995
      %v1000 = vadd.f32 %v894, %v997
      %1001 = vrot.lane.b32.xlu0 %v281, 112
      %v1002 = vpop.permute.xlu0 %1001
      %1003 = vrot.lane.b32.xlu0 %v283, 112
      %v1004 = vpop.permute.xlu0 %1003
      %vm1005 = vcmp.lt.s32.totalorder %v290, 112
      %v1006 = vsel %vm1005, %v1002, %v1004
      %v1007 = vsel %vm1005, %v1004, %v1002
      %s1008 = scalar_lea.vmem %s4, 14
      %v1009 = vld [vmem:[%s1008] sm:$0x3]
      %v1011 = vlaneseq
      %v1012 = vshrl.u32 %v1011, 7
      %v1013 = vsub.s32 0, %v1012
      %v1014 = vrot.slane %v1009, %v1013
      %v1015 = vlaneseq
      %v1016 = vshrl.u32 %v1015, 7
      %v1017 = vsub.s32 1, %v1016
      %v1018 = vrot.slane %v1009, %v1017
      %v1021 = vmul.f32 %v1006, %v1014
      %v1022 = vmul.f32 %v1007, %v1018
      %s1023 = scalar_lea.vmem %s3, 56
      %v1024 = vld [vmem:[%s1023] sm:$0xff]
      %v1026 = vsel %vm333, %v1024, 0
      %v1029 = vsel %vm337, %v1021, 0
      %v1032 = vsel %vm337, %v1022, 0
      %1034 = vmatprep.subr.mxu0 %v1032
      %1035 = vmatpush1.msra.mxu0 %v1029
      %1036 = vmatprep.subr.mxu0 0.0
      %1037 = vmatpush1.msra.mxu0 0.0
      %1038 = vmatprep.subr.mxu0 0.0
      %1039 = vmatpush1.msra.mxu0 0.0
      %1040 = vmatprep.subr.mxu0 0.0
      %1041 = vmatpush1.msra.mxu0 0.0
      %1042 = vmatprep.subr.mxu0 0.0
      %1043 = vmatpush1.msra.mxu0 0.0
      %1044 = vmatprep.subr.mxu0 0.0
      %1045 = vmatpush1.msra.mxu0 0.0
      %1046 = vmatprep.subr.mxu0 0.0
      %1047 = vmatpush1.msra.mxu0 0.0
      %1048 = vmatprep.subr.mxu0 0.0
      %1049 = vmatpush1.msra.mxu0 0.0
      %1050 = vmatprep.subr.mxu0 0.0
      %1051 = vmatpush1.msra.mxu0 0.0
      %1052 = vmatprep.subr.mxu0 0.0
      %1053 = vmatpush1.msra.mxu0 0.0
      %1054 = vmatprep.subr.mxu0 0.0
      %1055 = vmatpush1.msra.mxu0 0.0
      %1056 = vmatprep.subr.mxu0 0.0
      %1057 = vmatpush1.msra.mxu0 0.0
      %1058 = vmatprep.subr.mxu0 0.0
      %1059 = vmatpush1.msra.mxu0 0.0
      %1060 = vmatprep.subr.mxu0 0.0
      %1061 = vmatpush1.msra.mxu0 0.0
      %1062 = vmatprep.subr.mxu0 0.0
      %1063 = vmatpush1.msra.mxu0 0.0
      %1064 = vmatprep.subr.mxu0 0.0
      %1065 = vmatpush1.msra.mxu0 0.0
      %1066 = vmatprep.subr.mxu0 0.0
      %1067 = vmatpush1.msra.mxu0 0.0
      %1068 = vmatprep.subr.mxu0 0.0
      %1069 = vmatpush1.msra.mxu0 0.0
      %1070 = vmatprep.subr.mxu0 0.0
      %1071 = vmatpush1.msra.mxu0 0.0
      %1072 = vmatprep.subr.mxu0 0.0
      %1073 = vmatpush1.msra.mxu0 0.0
      %1074 = vmatprep.subr.mxu0 0.0
      %1075 = vmatpush1.msra.mxu0 0.0
      %1076 = vmatprep.subr.mxu0 0.0
      %1077 = vmatpush1.msra.mxu0 0.0
      %1078 = vmatprep.subr.mxu0 0.0
      %1079 = vmatpush1.msra.mxu0 0.0
      %1080 = vmatprep.subr.mxu0 0.0
      %1081 = vmatpush1.msra.mxu0 0.0
      %1082 = vmatprep.subr.mxu0 0.0
      %1083 = vmatpush1.msra.mxu0 0.0
      %1084 = vmatprep.subr.mxu0 0.0
      %1085 = vmatpush1.msra.mxu0 0.0
      %1086 = vmatprep.subr.mxu0 0.0
      %1087 = vmatpush1.msra.mxu0 0.0
      %1088 = vmatprep.subr.mxu0 0.0
      %1089 = vmatpush1.msra.mxu0 0.0
      %1090 = vmatprep.subr.mxu0 0.0
      %1091 = vmatpush1.msra.mxu0 0.0
      %1092 = vmatprep.subr.mxu0 0.0
      %1093 = vmatpush1.msra.mxu0 0.0
      %1094 = vmatprep.subr.mxu0 0.0
      %1095 = vmatpush1.msra.mxu0 0.0
      %1096 = vmatprep.subr.mxu0 0.0
      %1097 = vmatpush1.msra.mxu0 0.0
      %1098 = vmatprep.mubr.f32.mxu0 0.0
      %1099 = vmatmul.mubr.f32.gmra.mrb[0].mxu0 %v1026
      %v1100 = vpop.f32.mrb[0].mxu0
      %v1101 = vadd.f32 0.0, %v1100
      %v1102 = vpop.f32.mrb[0].mxu0
      %v1103 = vadd.f32 0.0, %v1102
      %1104 = vdwg.mxu0
      %v1105 = vadd.f32 %v999, %v1101
      %v1106 = vadd.f32 %v1000, %v1103
      %1107 = vrot.lane.b32.xlu0 %v281, 111
      %v1108 = vpop.permute.xlu0 %1107
      %1109 = vrot.lane.b32.xlu0 %v283, 111
      %v1110 = vpop.permute.xlu0 %1109
      %vm1111 = vcmp.lt.s32.totalorder %v290, 111
      %v1112 = vsel %vm1111, %v1108, %v1110
      %v1113 = vsel %vm1111, %v1110, %v1108
      %s1114 = scalar_lea.vmem %s4, 16
      %v1115 = vld [vmem:[%s1114] sm:$0x3]
      %v1117 = vlaneseq
      %v1118 = vshrl.u32 %v1117, 7
      %v1119 = vsub.s32 0, %v1118
      %v1120 = vrot.slane %v1115, %v1119
      %v1121 = vlaneseq
      %v1122 = vshrl.u32 %v1121, 7
      %v1123 = vsub.s32 1, %v1122
      %v1124 = vrot.slane %v1115, %v1123
      %v1127 = vmul.f32 %v1112, %v1120
      %v1128 = vmul.f32 %v1113, %v1124
      %s1129 = scalar_lea.vmem %s3, 64
      %v1130 = vld [vmem:[%s1129] sm:$0xff]
      %v1132 = vsel %vm333, %v1130, 0
      %v1135 = vsel %vm337, %v1127, 0
      %v1138 = vsel %vm337, %v1128, 0
      %1140 = vmatprep.subr.mxu0 %v1138
      %1141 = vmatpush1.msra.mxu0 %v1135
      %1142 = vmatprep.subr.mxu0 0.0
      %1143 = vmatpush1.msra.mxu0 0.0
      %1144 = vmatprep.subr.mxu0 0.0
      %1145 = vmatpush1.msra.mxu0 0.0
      %1146 = vmatprep.subr.mxu0 0.0
      %1147 = vmatpush1.msra.mxu0 0.0
      %1148 = vmatprep.subr.mxu0 0.0
      %1149 = vmatpush1.msra.mxu0 0.0
      %1150 = vmatprep.subr.mxu0 0.0
      %1151 = vmatpush1.msra.mxu0 0.0
      %1152 = vmatprep.subr.mxu0 0.0
      %1153 = vmatpush1.msra.mxu0 0.0
      %1154 = vmatprep.subr.mxu0 0.0
      %1155 = vmatpush1.msra.mxu0 0.0
      %1156 = vmatprep.subr.mxu0 0.0
      %1157 = vmatpush1.msra.mxu0 0.0
      %1158 = vmatprep.subr.mxu0 0.0
      %1159 = vmatpush1.msra.mxu0 0.0
      %1160 = vmatprep.subr.mxu0 0.0
      %1161 = vmatpush1.msra.mxu0 0.0
      %1162 = vmatprep.subr.mxu0 0.0
      %1163 = vmatpush1.msra.mxu0 0.0
      %1164 = vmatprep.subr.mxu0 0.0
      %1165 = vmatpush1.msra.mxu0 0.0
      %1166 = vmatprep.subr.mxu0 0.0
      %1167 = vmatpush1.msra.mxu0 0.0
      %1168 = vmatprep.subr.mxu0 0.0
      %1169 = vmatpush1.msra.mxu0 0.0
      %1170 = vmatprep.subr.mxu0 0.0
      %1171 = vmatpush1.msra.mxu0 0.0
      %1172 = vmatprep.subr.mxu0 0.0
      %1173 = vmatpush1.msra.mxu0 0.0
      %1174 = vmatprep.subr.mxu0 0.0
      %1175 = vmatpush1.msra.mxu0 0.0
      %1176 = vmatprep.subr.mxu0 0.0
      %1177 = vmatpush1.msra.mxu0 0.0
      %1178 = vmatprep.subr.mxu0 0.0
      %1179 = vmatpush1.msra.mxu0 0.0
      %1180 = vmatprep.subr.mxu0 0.0
      %1181 = vmatpush1.msra.mxu0 0.0
      %1182 = vmatprep.subr.mxu0 0.0
      %1183 = vmatpush1.msra.mxu0 0.0
      %1184 = vmatprep.subr.mxu0 0.0
      %1185 = vmatpush1.msra.mxu0 0.0
      %1186 = vmatprep.subr.mxu0 0.0
      %1187 = vmatpush1.msra.mxu0 0.0
      %1188 = vmatprep.subr.mxu0 0.0
      %1189 = vmatpush1.msra.mxu0 0.0
      %1190 = vmatprep.subr.mxu0 0.0
      %1191 = vmatpush1.msra.mxu0 0.0
      %1192 = vmatprep.subr.mxu0 0.0
      %1193 = vmatpush1.msra.mxu0 0.0
      %1194 = vmatprep.subr.mxu0 0.0
      %1195 = vmatpush1.msra.mxu0 0.0
      %1196 = vmatprep.subr.mxu0 0.0
      %1197 = vmatpush1.msra.mxu0 0.0
      %1198 = vmatprep.subr.mxu0 0.0
      %1199 = vmatpush1.msra.mxu0 0.0
      %1200 = vmatprep.subr.mxu0 0.0
      %1201 = vmatpush1.msra.mxu0 0.0
      %1202 = vmatprep.subr.mxu0 0.0
      %1203 = vmatpush1.msra.mxu0 0.0
      %1204 = vmatprep.mubr.f32.mxu0 0.0
      %1205 = vmatmul.mubr.f32.gmra.mrb[0].mxu0 %v1132
      %v1206 = vpop.f32.mrb[0].mxu0
      %v1207 = vadd.f32 0.0, %v1206
      %v1208 = vpop.f32.mrb[0].mxu0
      %v1209 = vadd.f32 0.0, %v1208
      %1210 = vdwg.mxu0
      %v1211 = vadd.f32 %v1105, %v1207
      %v1212 = vadd.f32 %v1106, %v1209
      %1213 = vst [vmem:[%s273] sm:$0xff] %v1211
      %1214 = vst [vmem:[%s273 + $0x8] sm:$0xff] %v1212
      %v1215 = vld [vmem:[%s6] sm:$0xff]
      %v1216 = vadd.f32 %v1211, %v1212
      %1217 = vadd.xlane.f32.xlu0 %v1216
      %v1218 = vpop.xlane.xlu0 %1217
      %v1219 = vadd.f32 %v1215, %v1218
      %vm1220 = vcmask 7168
      %1221 = vst.msk [vmem:[%s6] sm:$0xff] %vm1220, %v1219
      %v1222 = vld [vmem:[%s7] sm:$0xff]
      %v1223 = vmul.f32 %v1211, %v1211
      %v1224 = vmul.f32 %v1212, %v1212
      %v1225 = vadd.f32 %v1223, %v1224
      %1226 = vadd.xlane.f32.xlu0 %v1225
      %v1227 = vpop.xlane.xlu0 %1226
      %v1228 = vadd.f32 %v1222, %v1227
      %1229 = vst.msk [vmem:[%s7] sm:$0xff] %vm1220, %v1228
      %p1230 = scmp.lt.s32.totalorder %s19, 1
      %s1231 = scalar_select %p1230, %s19, 1
      %s1232 = smul.addr %s1231, 2
      %s1233 = smul.addr %s1232, 8
      %s1234 = scalar_lea.vmem %s5, %s1233
      // Predicated region
      $region45: #{resblock_forward.3} parent=39 // pred_check
        %p1235 = pneg %p147
      $region46: #{resblock_forward.3} parent=39 // pred_check_branch
        %1237 = sbr.rel (%p1235) target = $region48
      $region47: #{resblock_forward.3} parent=39 // pred_region
        _
      $region48: #{resblock_forward.3} parent=39 // pred_fallthru
        _
      // Predicated region
      $region49: #{resblock_forward.3} parent=39 // pred_check
        %p1238 = pneg %p168
      $region50: #{resblock_forward.3} parent=39 // pred_check_branch
        %1240 = sbr.rel (%p1238) target = $region52
      $region51: #{resblock_forward.3} parent=39 // pred_region
        _
      $region52: #{resblock_forward.3} parent=39 // pred_fallthru
        _
      // Predicated region
      $region53: #{resblock_forward.3} parent=39 // pred_check
        %p1241 = pneg %p189
      $region54: #{resblock_forward.3} parent=39 // pred_check_branch
        %1243 = sbr.rel (%p1241) target = $region56
      $region55: #{resblock_forward.3} parent=39 // pred_region
        _
      $region56: #{resblock_forward.3} parent=39 // pred_fallthru
        _
      // Predicated region
      $region57: #{resblock_forward.3} parent=39 // pred_check
        %p1244 = pneg %p168
      $region58: #{resblock_forward.3} parent=39 // pred_check_branch
        %1246 = sbr.rel (%p1244) target = $region60
      $region59: #{resblock_forward.3} parent=39 // pred_region
        _
      $region60: #{resblock_forward.3} parent=39 // pred_fallthru
        _
      // Predicated region
      $region61: #{resblock_forward.3} parent=39 // pred_check
        %p1247 = pneg %p189
      $region62: #{resblock_forward.3} parent=39 // pred_check_branch
        %1249 = sbr.rel (%p1247) target = $region64
      $region63: #{resblock_forward.3} parent=39 // pred_region
        _
      $region64: #{resblock_forward.3} parent=39 // pred_fallthru
        _
    $region40: #{resblock_forward.3} parent=5 // pred_fallthru
      _
    %p1250 = scmp.le.s32.totalorder 2, %s14
    // Predicated region
    $region65: #{resblock_forward.3} parent=5 // pred_check
      %p1251 = pneg %p1250
    $region66: #{resblock_forward.3} parent=5 // pred_check_branch
      %1253 = sbr.rel (%p1251) target = $region68
    $region67: #{resblock_forward.3} parent=5 // pred_region
      %s1254 = ssub.s32 %s14, 2
      // Predicated region
      $region69: #{resblock_forward.3} parent=67 // pred_check
        %p1255 = pneg %p153
      $region70: #{resblock_forward.3} parent=67 // pred_check_branch
        %1257 = sbr.rel (%p1255) target = $region72
      $region71: #{resblock_forward.3} parent=67 // pred_region
        %p1258 = scmp.lt.s32.totalorder %s20, 1
        %s1259 = scalar_select %p1258, %s20, 1
        %s1260 = smul.addr %s1259, 2
        %s1261 = smul.addr %s1260, 8
        %s1262 = scalar_lea.vmem %s5, %s1261
      $region72: #{resblock_forward.3} parent=67 // pred_fallthru
        _
    $region68: #{resblock_forward.3} parent=5 // pred_fallthru
      _
  $region6: #{resblock_forward.3} parent=0 // loop_footer
    %s18 = sadd.s32 1, %s14
  $region7: #{resblock_forward.3} parent=0 // loop_footer_branch
    %13 = sbr.rel target = $region3
  $region8: #{resblock_forward.3} parent=0 // loop_exit
    _

// kernel: resblock_forward.4
$region0: #{resblock_forward.4}
  #allocation0 [shape = 'u32[]', space=smem, size = 0x4, offset = 0x4, fixed_abs, tag = 'smem constant byte address 0x4 - core index']
  #allocation1 [shape = 'u32[144,128]{1,0:T(1,128)}', space=vmem, size = 0x12000, scoped, tag = 'internal scratch']
  %s0 = inlined_call_operand.vmem [shape: f32[2,8,256], index: 0, kind: input, shape index: {}]
  %s1 = inlined_call_operand.vmem [shape: f32[8,1], index: 1, kind: input, shape index: {}]
  %s2 = inlined_call_operand.vmem [shape: f32[8,1], index: 2, kind: input, shape index: {}]
  %s3 = inlined_call_operand.vmem [shape: f32[9,4,8], index: 3, kind: input, shape index: {}]
  %s4 = inlined_call_operand.vmem [shape: f32[9,1,256], index: 4, kind: input, shape index: {}]
  %s5 = inlined_call_operand.vmem [shape: f32[2,4,256], index: 5, kind: output, shape index: {0}]
  %s6 = inlined_call_operand.vmem [shape: f32[4,1], index: 6, kind: output, shape index: {1}]
  %s7 = inlined_call_operand.vmem [shape: f32[4,1], index: 7, kind: output, shape index: {2}]
  %8 = xla_tuple %s5, %s6, %s7
  %s9 = sld [smem:[#allocation0]]
  $region73: #{resblock_forward.4} parent=0
    _
  %s11 = ssub.s32 1, %s9
  %s12 = scalar_select 0, %s11, %s9
  loop: start=0, step=1, limit=4
  $region2: #{resblock_forward.4} parent=0 // loop_pre_header
    _
  $region3: #{resblock_forward.4} parent=0 // loop_header
    %s14 = sphi 0, %s18
    %p15 = scmp.ge.s32.totalorder %s14, 4
    %s24 = sphi 0, %s26
    %s27 = sphi 0, %s24
    %s28 = sphi 0, %s27
    %s44 = sphi 0, %s28
    %s48 = sphi 0, %s48
    %s50 = sphi 0, %s48
    %s51 = sphi 0, %s50
    %s65 = sphi 0, %s51
    %s69 = sphi 0, %s69
    %s71 = sphi 0, %s69
    %s72 = sphi 0, %s71
    %s86 = sphi 0, %s72
    %s90 = sphi 0, %s90
    %s92 = sphi 0, %s90
    %s93 = sphi 0, %s92
    %s107 = sphi 0, %s93
    %s111 = sphi 0, %s111
    %s113 = sphi 0, %s111
    %s114 = sphi 0, %s113
    %s128 = sphi 0, %s114
    %s134 = sphi 0, %s136
    %s137 = sphi 0, %s134
    %s138 = sphi 0, %s137
    %s154 = sphi 0, %s138
    %s158 = sphi 0, %s158
    %s160 = sphi 0, %s158
    %s161 = sphi 0, %s160
    %s175 = sphi 0, %s161
    %s179 = sphi 0, %s179
    %s181 = sphi 0, %s179
    %s182 = sphi 0, %s181
    %s196 = sphi 0, %s182
  $region4: #{resblock_forward.4} parent=0 // loop_header_branch
    %17 = sbr.rel (%p15) target = $region8
  $region5: #{resblock_forward.4} parent=0 // loop_body
    %s19 = ssub.s32 %s14, 1
    %s20 = ssub.s32 %s14, 2
    %s21 = sadd.s32 %s14, 1
    %s22 = ssub.s32 %s14, %s21
    %p23 = scmp.eq.s32.totalorder %s22, 0
    %s25 = sadd.s32 %s24, 1
    %s26 = scalar_select %p23, %s24, %s25
    %p29 = pneg %p23
    %p30 = scmp.eq.s32.totalorder %s14, 1
    %p31 = por %p29, %p30
    %p32 = scmp.ne.s32.totalorder %s24, %s27
    %p33 = scmp.eq.s32.totalorder %s14, 0
    %p34 = por %p32, %p33
    %p35 = scmp.ne.s32.totalorder %s24, %s27
    %p36 = scmp.eq.s32.totalorder %s19, 1
    %p37 = por %p35, %p36
    %p38 = scmp.ne.s32.totalorder %s27, %s28
    %p39 = scmp.eq.s32.totalorder %s19, 0
    %p40 = por %p38, %p39
    %p41 = scmp.ne.s32.totalorder %s27, %s28
    %p42 = scmp.eq.s32.totalorder %s20, 1
    %p43 = por %p41, %p42
    %p45 = scmp.ne.s32.totalorder %s28, %s44
    %p46 = scmp.eq.s32.totalorder %s20, 0
    %p47 = por %p45, %p46
    %s49 = sadd.s32 %s48, 1
    %p52 = scmp.eq.s32.totalorder %s14, 1
    %p53 = scmp.ne.s32.totalorder %s48, %s50
    %p54 = scmp.eq.s32.totalorder %s14, 0
    %p55 = por %p53, %p54
    %p56 = scmp.ne.s32.totalorder %s48, %s50
    %p57 = scmp.eq.s32.totalorder %s19, 1
    %p58 = por %p56, %p57
    %p59 = scmp.ne.s32.totalorder %s50, %s51
    %p60 = scmp.eq.s32.totalorder %s19, 0
    %p61 = por %p59, %p60
    %p62 = scmp.ne.s32.totalorder %s50, %s51
    %p63 = scmp.eq.s32.totalorder %s20, 1
    %p64 = por %p62, %p63
    %p66 = scmp.ne.s32.totalorder %s51, %s65
    %p67 = scmp.eq.s32.totalorder %s20, 0
    %p68 = por %p66, %p67
    %s70 = sadd.s32 %s69, 1
    %p73 = scmp.eq.s32.totalorder %s14, 1
    %p74 = scmp.ne.s32.totalorder %s69, %s71
    %p75 = scmp.eq.s32.totalorder %s14, 0
    %p76 = por %p74, %p75
    %p77 = scmp.ne.s32.totalorder %s69, %s71
    %p78 = scmp.eq.s32.totalorder %s19, 1
    %p79 = por %p77, %p78
    %p80 = scmp.ne.s32.totalorder %s71, %s72
    %p81 = scmp.eq.s32.totalorder %s19, 0
    %p82 = por %p80, %p81
    %p83 = scmp.ne.s32.totalorder %s71, %s72
    %p84 = scmp.eq.s32.totalorder %s20, 1
    %p85 = por %p83, %p84
    %p87 = scmp.ne.s32.totalorder %s72, %s86
    %p88 = scmp.eq.s32.totalorder %s20, 0
    %p89 = por %p87, %p88
    %s91 = sadd.s32 %s90, 1
    %p94 = scmp.eq.s32.totalorder %s14, 1
    %p95 = scmp.ne.s32.totalorder %s90, %s92
    %p96 = scmp.eq.s32.totalorder %s14, 0
    %p97 = por %p95, %p96
    %p98 = scmp.ne.s32.totalorder %s90, %s92
    %p99 = scmp.eq.s32.totalorder %s19, 1
    %p100 = por %p98, %p99
    %p101 = scmp.ne.s32.totalorder %s92, %s93
    %p102 = scmp.eq.s32.totalorder %s19, 0
    %p103 = por %p101, %p102
    %p104 = scmp.ne.s32.totalorder %s92, %s93
    %p105 = scmp.eq.s32.totalorder %s20, 1
    %p106 = por %p104, %p105
    %p108 = scmp.ne.s32.totalorder %s93, %s107
    %p109 = scmp.eq.s32.totalorder %s20, 0
    %p110 = por %p108, %p109
    %s112 = sadd.s32 %s111, 1
    %p115 = scmp.eq.s32.totalorder %s14, 1
    %p116 = scmp.ne.s32.totalorder %s111, %s113
    %p117 = scmp.eq.s32.totalorder %s14, 0
    %p118 = por %p116, %p117
    %p119 = scmp.ne.s32.totalorder %s111, %s113
    %p120 = scmp.eq.s32.totalorder %s19, 1
    %p121 = por %p119, %p120
    %p122 = scmp.ne.s32.totalorder %s113, %s114
    %p123 = scmp.eq.s32.totalorder %s19, 0
    %p124 = por %p122, %p123
    %p125 = scmp.ne.s32.totalorder %s113, %s114
    %p126 = scmp.eq.s32.totalorder %s20, 1
    %p127 = por %p125, %p126
    %p129 = scmp.ne.s32.totalorder %s114, %s128
    %p130 = scmp.eq.s32.totalorder %s20, 0
    %p131 = por %p129, %p130
    %s132 = ssub.s32 %s14, %s21
    %p133 = scmp.eq.s32.totalorder %s132, 0
    %s135 = sadd.s32 %s134, 1
    %s136 = scalar_select %p133, %s134, %s135
    %p139 = pneg %p133
    %p140 = scmp.eq.s32.totalorder %s14, 1
    %p141 = por %p139, %p140
    %p142 = scmp.ne.s32.totalorder %s134, %s137
    %p143 = scmp.eq.s32.totalorder %s14, 0
    %p144 = por %p142, %p143
    %p145 = scmp.ne.s32.totalorder %s134, %s137
    %p146 = scmp.eq.s32.totalorder %s19, 1
    %p147 = por %p145, %p146
    %p148 = scmp.ne.s32.totalorder %s137, %s138
    %p149 = scmp.eq.s32.totalorder %s19, 0
    %p150 = por %p148, %p149
    %p151 = scmp.ne.s32.totalorder %s137, %s138
    %p152 = scmp.eq.s32.totalorder %s20, 1
    %p153 = por %p151, %p152
    %p155 = scmp.ne.s32.totalorder %s138, %s154
    %p156 = scmp.eq.s32.totalorder %s20, 0
    %p157 = por %p155, %p156
    %s159 = sadd.s32 %s158, 1
    %p162 = scmp.eq.s32.totalorder %s14, 1
    %p163 = scmp.ne.s32.totalorder %s158, %s160
    %p164 = scmp.eq.s32.totalorder %s14, 0
    %p165 = por %p163, %p164
    %p166 = scmp.ne.s32.totalorder %s158, %s160
    %p167 = scmp.eq.s32.totalorder %s19, 1
    %p168 = por %p166, %p167
    %p169 = scmp.ne.s32.totalorder %s160, %s161
    %p170 = scmp.eq.s32.totalorder %s19, 0
    %p171 = por %p169, %p170
    %p172 = scmp.ne.s32.totalorder %s160, %s161
    %p173 = scmp.eq.s32.totalorder %s20, 1
    %p174 = por %p172, %p173
    %p176 = scmp.ne.s32.totalorder %s161, %s175
    %p177 = scmp.eq.s32.totalorder %s20, 0
    %p178 = por %p176, %p177
    %s180 = sadd.s32 %s179, 1
    %p183 = scmp.eq.s32.totalorder %s14, 1
    %p184 = scmp.ne.s32.totalorder %s179, %s181
    %p185 = scmp.eq.s32.totalorder %s14, 0
    %p186 = por %p184, %p185
    %p187 = scmp.ne.s32.totalorder %s179, %s181
    %p188 = scmp.eq.s32.totalorder %s19, 1
    %p189 = por %p187, %p188
    %p190 = scmp.ne.s32.totalorder %s181, %s182
    %p191 = scmp.eq.s32.totalorder %s19, 0
    %p192 = por %p190, %p191
    %p193 = scmp.ne.s32.totalorder %s181, %s182
    %p194 = scmp.eq.s32.totalorder %s20, 1
    %p195 = por %p193, %p194
    %p197 = scmp.ne.s32.totalorder %s182, %s196
    %p198 = scmp.eq.s32.totalorder %s20, 0
    %p199 = por %p197, %p198
    %p200 = scmp.le.s32.totalorder 1, %s14
    %p201 = scmp.lt.s32.totalorder %s14, 3
    %p202 = pnand %p200, %p201
    %p203 = pneg %p202
    // Predicated region
    $region9: #{resblock_forward.4} parent=5 // pred_check
      _
    $region10: #{resblock_forward.4} parent=5 // pred_check_branch
      %205 = sbr.rel (%p202) target = $region12
    $region11: #{resblock_forward.4} parent=5 // pred_region
      %s206 = ssub.s32 %s14, 1
      // Predicated region
      $region13: #{resblock_forward.4} parent=11 // pred_check
        %p207 = pneg %p61
      $region14: #{resblock_forward.4} parent=11 // pred_check_branch
        %209 = sbr.rel (%p207) target = $region16
      $region15: #{resblock_forward.4} parent=11 // pred_region
        _
      $region16: #{resblock_forward.4} parent=11 // pred_fallthru
        _
      // Predicated region
      $region17: #{resblock_forward.4} parent=11 // pred_check
        %p210 = pneg %p82
      $region18: #{resblock_forward.4} parent=11 // pred_check_branch
        %212 = sbr.rel (%p210) target = $region20
      $region19: #{resblock_forward.4} parent=11 // pred_region
        _
      $region20: #{resblock_forward.4} parent=11 // pred_fallthru
        _
      // Predicated region
      $region21: #{resblock_forward.4} parent=11 // pred_check
        %p213 = pneg %p103
      $region22: #{resblock_forward.4} parent=11 // pred_check_branch
        %215 = sbr.rel (%p213) target = $region24
      $region23: #{resblock_forward.4} parent=11 // pred_region
        _
      $region24: #{resblock_forward.4} parent=11 // pred_fallthru
        _
      // Predicated region
      $region25: #{resblock_forward.4} parent=11 // pred_check
        %p216 = pneg %p124
      $region26: #{resblock_forward.4} parent=11 // pred_check_branch
        %218 = sbr.rel (%p216) target = $region28
      $region27: #{resblock_forward.4} parent=11 // pred_region
        _
      $region28: #{resblock_forward.4} parent=11 // pred_fallthru
        _
    $region12: #{resblock_forward.4} parent=5 // pred_fallthru
      _
    %p219 = scmp.lt.s32.totalorder %s14, 2
    // Predicated region
    $region29: #{resblock_forward.4} parent=5 // pred_check
      %p220 = pneg %p219
    $region30: #{resblock_forward.4} parent=5 // pred_check_branch
      %222 = sbr.rel (%p220) target = $region32
    $region31: #{resblock_forward.4} parent=5 // pred_region
      // Predicated region
      $region33: #{resblock_forward.4} parent=31 // pred_check
        %p223 = pneg %p34
      $region34: #{resblock_forward.4} parent=31 // pred_check_branch
        %225 = sbr.rel (%p223) target = $region36
      $region35: #{resblock_forward.4} parent=31 // pred_region
        %p226 = scmp.lt.s32.totalorder %s14, 1
        %s227 = scalar_select %p226, %s14, 1
        %s228 = smul.addr %s227, 2
        %s229 = smul.addr %s228, 8
        %s230 = scalar_lea.vmem %s0, %s229
      $region36: #{resblock_forward.4} parent=31 // pred_fallthru
        _
    $region32: #{resblock_forward.4} parent=5 // pred_fallthru
      _
    %p231 = scmp.le.s32.totalorder 1, %s14
    %p232 = scmp.lt.s32.totalorder %s14, 3
    %p233 = pnand %p231, %p232
    %p234 = pneg %p233
    // Predicated region
    $region37: #{resblock_forward.4} parent=5 // pred_check
      _
    $region38: #{resblock_forward.4} parent=5 // pred_check_branch
      %236 = sbr.rel (%p233) target = $region40
    $region39: #{resblock_forward.4} parent=5 // pred_region
      %s237 = ssub.s32 %s14, 1
      %p238 = scmp.lt.s32.totalorder %s19, 1
      %s239 = scalar_select %p238, %s19, 1
      %s240 = smul.addr %s239, 2
      %s241 = smul.addr %s240, 8
      %s242 = scalar_lea.vmem %s0, %s241
      %p243 = pneg %p40
      %p244 = pneg %p37
      %p245 = pneg %p61
      %p246 = pneg %p58
      %p247 = pneg %p82
      %p248 = pneg %p79
      %p249 = pneg %p103
      %p250 = pneg %p100
      %p251 = pneg %p124
      %p252 = pneg %p121
      %p253 = pneg %p150
      %p254 = pneg %p147
      %p255 = scmp.lt.s32.totalorder %s19, 1
      %s256 = scalar_select %p255, %s19, 1
      %s257 = smul.addr %s256, 2
      %s258 = smul.addr %s257, 4
      %s259 = scalar_lea.vmem %s5, %s258
      %p260 = pneg %p171
      %p261 = pneg %p168
      %p262 = pneg %p192
      %p263 = pneg %p189
      %p264 = scmp.lt.s32.totalorder %s19, 1
      %s265 = scalar_select %p264, %s19, 1
      %s266 = smul.addr %s265, 2
      %s267 = smul.addr %s266, 8
      %s268 = scalar_lea.vmem %s0, %s267
      %p269 = scmp.lt.s32.totalorder %s19, 1
      %s270 = scalar_select %p269, %s19, 1
      %s271 = smul.addr %s270, 2
      %s272 = smul.addr %s271, 4
      %s273 = scalar_lea.vmem %s5, %s272
      %p274 = scmp.eq.s32.totalorder %s19, 0
      // Predicated region
      $region41: #{resblock_forward.4} parent=39 // pred_check
        %p275 = pneg %p274
      $region42: #{resblock_forward.4} parent=39 // pred_check_branch
        %277 = sbr.rel (%p275) target = $region44
      $region43: #{resblock_forward.4} parent=39 // pred_region
        %vm278 = vcmask 3072
        %279 = vst.msk [vmem:[%s6] sm:$0xf] %vm278, 0.0
        %280 = vst.msk [vmem:[%s7] sm:$0xf] %vm278, 0.0
      $region44: #{resblock_forward.4} parent=39 // pred_fallthru
        _
      %v281 = vld [vmem:[%s268] sm:$0xff]
      %v282 = vld [vmem:[%s268 + $0x8] sm:$0xff]
      %v283 = vld [vmem:[%s1] sm:$0xff]
      %285 = vset.pattern.permute.xlu0 0
      %286 = vperm.xlu0 %285, %v283
      %v287 = vpop.permute.xlu0 %286
      %v289 = vmul.f32 %v281, %v287
      %v290 = vmul.f32 %v282, %v287
      %v291 = vld [vmem:[%s2] sm:$0xff]
      %293 = vset.pattern.permute.xlu0 0
      %294 = vperm.xlu0 %293, %v291
      %v295 = vpop.permute.xlu0 %294
      %v297 = vadd.f32 %v289, %v295
      %v298 = vadd.f32 %v290, %v295
      %v299 = vmax.f32 %v297, 0.0
      %v300 = vmax.f32 %v298, 0.0
      %301 = vrot.lane.b32.xlu0 %v299, 17
      %v302 = vpop.permute.xlu0 %301
      %303 = vrot.lane.b32.xlu0 %v300, 17
      %v304 = vpop.permute.xlu0 %303
      %v305 = vlaneseq
      %v306 = vand.u32 %v305, 127
      %vm307 = vcmp.lt.s32.totalorder %v306, 17
      %v308 = vsel %vm307, %v302, %v304
      %v309 = vsel %vm307, %v304, %v302
      %v310 = vld [vmem:[%s4] sm:$0x3]
      %v312 = vlaneseq
      %v313 = vshrl.u32 %v312, 7
      %v314 = vsub.s32 0, %v313
      %v315 = vrot.slane %v310, %v314
      %v316 = vlaneseq
      %v317 = vshrl.u32 %v316, 7
      %v318 = vsub.s32 1, %v317
      %v319 = vrot.slane %v310, %v318
      %v322 = vmul.f32 %v309, %v315
      %v323 = vmul.f32 %v308, %v319
      %v324 = vld [vmem:[%s3] sm:$0xf]
      %325 = vrot.lane.b32.xlu0 %v299, 16
      %v326 = vpop.permute.xlu0 %325
      %327 = vrot.lane.b32.xlu0 %v300, 16
      %v328 = vpop.permute.xlu0 %327
      %vm329 = vcmp.lt.s32.totalorder %v306, 16
      %v330 = vsel %vm329, %v326, %v328
      %v331 = vsel %vm329, %v328, %v326
      %s332 = scalar_lea.vmem %s4, 2
      %v333 = vld [vmem:[%s332] sm:$0x3]
      %v335 = vlaneseq
      %v336 = vshrl.u32 %v335, 7
      %v337 = vsub.s32 0, %v336
      %v338 = vrot.slane %v333, %v337
      %v339 = vlaneseq
      %v340 = vshrl.u32 %v339, 7
      %v341 = vsub.s32 1, %v340
      %v342 = vrot.slane %v333, %v341
      %v345 = vmul.f32 %v331, %v338
      %v346 = vmul.f32 %v330, %v342
      %s347 = scalar_lea.vmem %s3, 4
      %v348 = vld [vmem:[%s347] sm:$0xf]
      %vm349 = vcmask 64512
      %v351 = vsel %vm349, %v348, 0
      %353 = vmatprep.subr.mxu0 %v346
      %354 = vmatpush1.msra.mxu0 %v345
      %355 = vmatprep.subr.mxu0 0.0
      %356 = vmatpush1.msra.mxu0 0.0
      %357 = vmatprep.subr.mxu0 0.0
      %358 = vmatpush1.msra.mxu0 0.0
      %359 = vmatprep.subr.mxu0 0.0
      %360 = vmatpush1.msra.mxu0 0.0
      %361 = vmatprep.subr.mxu0 0.0
      %362 = vmatpush1.msra.mxu0 0.0
      %363 = vmatprep.subr.mxu0 0.0
      %364 = vmatpush1.msra.mxu0 0.0
      %365 = vmatprep.subr.mxu0 0.0
      %366 = vmatpush1.msra.mxu0 0.0
      %367 = vmatprep.subr.mxu0 0.0
      %368 = vmatpush1.msra.mxu0 0.0
      %369 = vmatprep.subr.mxu0 0.0
      %370 = vmatpush1.msra.mxu0 0.0
      %371 = vmatprep.subr.mxu0 0.0
      %372 = vmatpush1.msra.mxu0 0.0
      %373 = vmatprep.subr.mxu0 0.0
      %374 = vmatpush1.msra.mxu0 0.0
      %375 = vmatprep.subr.mxu0 0.0
      %376 = vmatpush1.msra.mxu0 0.0
      %377 = vmatprep.subr.mxu0 0.0
      %378 = vmatpush1.msra.mxu0 0.0
      %379 = vmatprep.subr.mxu0 0.0
      %380 = vmatpush1.msra.mxu0 0.0
      %381 = vmatprep.subr.mxu0 0.0
      %382 = vmatpush1.msra.mxu0 0.0
      %383 = vmatprep.subr.mxu0 0.0
      %384 = vmatpush1.msra.mxu0 0.0
      %385 = vmatprep.subr.mxu0 0.0
      %386 = vmatpush1.msra.mxu0 0.0
      %387 = vmatprep.subr.mxu0 0.0
      %388 = vmatpush1.msra.mxu0 0.0
      %389 = vmatprep.subr.mxu0 0.0
      %390 = vmatpush1.msra.mxu0 0.0
      %391 = vmatprep.subr.mxu0 0.0
      %392 = vmatpush1.msra.mxu0 0.0
      %393 = vmatprep.subr.mxu0 0.0
      %394 = vmatpush1.msra.mxu0 0.0
      %395 = vmatprep.subr.mxu0 0.0
      %396 = vmatpush1.msra.mxu0 0.0
      %397 = vmatprep.subr.mxu0 0.0
      %398 = vmatpush1.msra.mxu0 0.0
      %399 = vmatprep.subr.mxu0 0.0
      %400 = vmatpush1.msra.mxu0 0.0
      %401 = vmatprep.subr.mxu0 0.0
      %402 = vmatpush1.msra.mxu0 0.0
      %403 = vmatprep.subr.mxu0 0.0
      %404 = vmatpush1.msra.mxu0 0.0
      %405 = vmatprep.subr.mxu0 0.0
      %406 = vmatpush1.msra.mxu0 0.0
      %407 = vmatprep.subr.mxu0 0.0
      %408 = vmatpush1.msra.mxu0 0.0
      %409 = vmatprep.subr.mxu0 0.0
      %410 = vmatpush1.msra.mxu0 0.0
      %411 = vmatprep.subr.mxu0 0.0
      %412 = vmatpush1.msra.mxu0 0.0
      %413 = vmatprep.subr.mxu0 0.0
      %414 = vmatpush1.msra.mxu0 0.0
      %415 = vmatprep.subr.mxu0 0.0
      %416 = vmatpush1.msra.mxu0 0.0
      %417 = vmatprep.mubr.f32.mxu0 0.0
      %418 = vmatmul.mubr.f32.gmra.mrb[0].mxu0 %v351
      %v419 = vpop.f32.mrb[0].mxu0
      %v420 = vadd.f32 0.0, %v419
      %v421 = vpop.f32.mrb[0].mxu0
      %v422 = vadd.f32 0.0, %v421
      %423 = vdwg.mxu0
      %v425 = vsel %vm349, %v324, 0
      %427 = vmatprep.subr.mxu0 %v323
      %428 = vmatpush1.msra.mxu0 %v322
      %429 = vmatprep.subr.mxu0 0.0
      %430 = vmatpush1.msra.mxu0 0.0
      %431 = vmatprep.subr.mxu0 0.0
      %432 = vmatpush1.msra.mxu0 0.0
      %433 = vmatprep.subr.mxu0 0.0
      %434 = vmatpush1.msra.mxu0 0.0
      %435 = vmatprep.subr.mxu0 0.0
      %436 = vmatpush1.msra.mxu0 0.0
      %437 = vmatprep.subr.mxu0 0.0
      %438 = vmatpush1.msra.mxu0 0.0
      %439 = vmatprep.subr.mxu0 0.0
      %440 = vmatpush1.msra.mxu0 0.0
      %441 = vmatprep.subr.mxu0 0.0
      %442 = vmatpush1.msra.mxu0 0.0
      %443 = vmatprep.subr.mxu0 0.0
      %444 = vmatpush1.msra.mxu0 0.0
      %445 = vmatprep.subr.mxu0 0.0
      %446 = vmatpush1.msra.mxu0 0.0
      %447 = vmatprep.subr.mxu0 0.0
      %448 = vmatpush1.msra.mxu0 0.0
      %449 = vmatprep.subr.mxu0 0.0
      %450 = vmatpush1.msra.mxu0 0.0
      %451 = vmatprep.subr.mxu0 0.0
      %452 = vmatpush1.msra.mxu0 0.0
      %453 = vmatprep.subr.mxu0 0.0
      %454 = vmatpush1.msra.mxu0 0.0
      %455 = vmatprep.subr.mxu0 0.0
      %456 = vmatpush1.msra.mxu0 0.0
      %457 = vmatprep.subr.mxu0 0.0
      %458 = vmatpush1.msra.mxu0 0.0
      %459 = vmatprep.subr.mxu0 0.0
      %460 = vmatpush1.msra.mxu0 0.0
      %461 = vmatprep.subr.mxu0 0.0
      %462 = vmatpush1.msra.mxu0 0.0
      %463 = vmatprep.subr.mxu0 0.0
      %464 = vmatpush1.msra.mxu0 0.0
      %465 = vmatprep.subr.mxu0 0.0
      %466 = vmatpush1.msra.mxu0 0.0
      %467 = vmatprep.subr.mxu0 0.0
      %468 = vmatpush1.msra.mxu0 0.0
      %469 = vmatprep.subr.mxu0 0.0
      %470 = vmatpush1.msra.mxu0 0.0
      %471 = vmatprep.subr.mxu0 0.0
      %472 = vmatpush1.msra.mxu0 0.0
      %473 = vmatprep.subr.mxu0 0.0
      %474 = vmatpush1.msra.mxu0 0.0
      %475 = vmatprep.subr.mxu0 0.0
      %476 = vmatpush1.msra.mxu0 0.0
      %477 = vmatprep.subr.mxu0 0.0
      %478 = vmatpush1.msra.mxu0 0.0
      %479 = vmatprep.subr.mxu0 0.0
      %480 = vmatpush1.msra.mxu0 0.0
      %481 = vmatprep.subr.mxu0 0.0
      %482 = vmatpush1.msra.mxu0 0.0
      %483 = vmatprep.subr.mxu0 0.0
      %484 = vmatpush1.msra.mxu0 0.0
      %485 = vmatprep.subr.mxu0 0.0
      %486 = vmatpush1.msra.mxu0 0.0
      %487 = vmatprep.subr.mxu0 0.0
      %488 = vmatpush1.msra.mxu0 0.0
      %489 = vmatprep.subr.mxu0 0.0
      %490 = vmatpush1.msra.mxu0 0.0
      %491 = vmatprep.mubr.f32.mxu0 0.0
      %492 = vmatmul.mubr.f32.gmra.mrb[0].mxu0 %v425
      %v493 = vpop.f32.mrb[0].mxu0
      %v494 = vadd.f32 %v420, %v493
      %v495 = vpop.f32.mrb[0].mxu0
      %v496 = vadd.f32 %v422, %v495
      %497 = vdwg.mxu0
      %498 = vrot.lane.b32.xlu0 %v299, 15
      %v499 = vpop.permute.xlu0 %498
      %500 = vrot.lane.b32.xlu0 %v300, 15
      %v501 = vpop.permute.xlu0 %500
      %vm502 = vcmp.lt.s32.totalorder %v306, 15
      %v503 = vsel %vm502, %v499, %v501
      %v504 = vsel %vm502, %v501, %v499
      %s505 = scalar_lea.vmem %s4, 4
      %v506 = vld [vmem:[%s505] sm:$0x3]
      %v508 = vlaneseq
      %v509 = vshrl.u32 %v508, 7
      %v510 = vsub.s32 0, %v509
      %v511 = vrot.slane %v506, %v510
      %v512 = vlaneseq
      %v513 = vshrl.u32 %v512, 7
      %v514 = vsub.s32 1, %v513
      %v515 = vrot.slane %v506, %v514
      %v518 = vmul.f32 %v504, %v511
      %v519 = vmul.f32 %v503, %v515
      %s520 = scalar_lea.vmem %s3, 8
      %v521 = vld [vmem:[%s520] sm:$0xf]
      %v523 = vsel %vm349, %v521, 0
      %525 = vmatprep.subr.mxu0 %v519
      %526 = vmatpush1.msra.mxu0 %v518
      %527 = vmatprep.subr.mxu0 0.0
      %528 = vmatpush1.msra.mxu0 0.0
      %529 = vmatprep.subr.mxu0 0.0
      %530 = vmatpush1.msra.mxu0 0.0
      %531 = vmatprep.subr.mxu0 0.0
      %532 = vmatpush1.msra.mxu0 0.0
      %533 = vmatprep.subr.mxu0 0.0
      %534 = vmatpush1.msra.mxu0 0.0
      %535 = vmatprep.subr.mxu0 0.0
      %536 = vmatpush1.msra.mxu0 0.0
      %537 = vmatprep.subr.mxu0 0.0
      %538 = vmatpush1.msra.mxu0 0.0
      %539 = vmatprep.subr.mxu0 0.0
      %540 = vmatpush1.msra.mxu0 0.0
      %541 = vmatprep.subr.mxu0 0.0
      %542 = vmatpush1.msra.mxu0 0.0
      %543 = vmatprep.subr.mxu0 0.0
      %544 = vmatpush1.msra.mxu0 0.0
      %545 = vmatprep.subr.mxu0 0.0
      %546 = vmatpush1.msra.mxu0 0.0
      %547 = vmatprep.subr.mxu0 0.0
      %548 = vmatpush1.msra.mxu0 0.0
      %549 = vmatprep.subr.mxu0 0.0
      %550 = vmatpush1.msra.mxu0 0.0
      %551 = vmatprep.subr.mxu0 0.0
      %552 = vmatpush1.msra.mxu0 0.0
      %553 = vmatprep.subr.mxu0 0.0
      %554 = vmatpush1.msra.mxu0 0.0
      %555 = vmatprep.subr.mxu0 0.0
      %556 = vmatpush1.msra.mxu0 0.0
      %557 = vmatprep.subr.mxu0 0.0
      %558 = vmatpush1.msra.mxu0 0.0
      %559 = vmatprep.subr.mxu0 0.0
      %560 = vmatpush1.msra.mxu0 0.0
      %561 = vmatprep.subr.mxu0 0.0
      %562 = vmatpush1.msra.mxu0 0.0
      %563 = vmatprep.subr.mxu0 0.0
      %564 = vmatpush1.msra.mxu0 0.0
      %565 = vmatprep.subr.mxu0 0.0
      %566 = vmatpush1.msra.mxu0 0.0
      %567 = vmatprep.subr.mxu0 0.0
      %568 = vmatpush1.msra.mxu0 0.0
      %569 = vmatprep.subr.mxu0 0.0
      %570 = vmatpush1.msra.mxu0 0.0
      %571 = vmatprep.subr.mxu0 0.0
      %572 = vmatpush1.msra.mxu0 0.0
      %573 = vmatprep.subr.mxu0 0.0
      %574 = vmatpush1.msra.mxu0 0.0
      %575 = vmatprep.subr.mxu0 0.0
      %576 = vmatpush1.msra.mxu0 0.0
      %577 = vmatprep.subr.mxu0 0.0
      %578 = vmatpush1.msra.mxu0 0.0
      %579 = vmatprep.subr.mxu0 0.0
      %580 = vmatpush1.msra.mxu0 0.0
      %581 = vmatprep.subr.mxu0 0.0
      %582 = vmatpush1.msra.mxu0 0.0
      %583 = vmatprep.subr.mxu0 0.0
      %584 = vmatpush1.msra.mxu0 0.0
      %585 = vmatprep.subr.mxu0 0.0
      %586 = vmatpush1.msra.mxu0 0.0
      %587 = vmatprep.subr.mxu0 0.0
      %588 = vmatpush1.msra.mxu0 0.0
      %589 = vmatprep.mubr.f32.mxu0 0.0
      %590 = vmatmul.mubr.f32.gmra.mrb[0].mxu0 %v523
      %v591 = vpop.f32.mrb[0].mxu0
      %v592 = vadd.f32 0.0, %v591
      %v593 = vpop.f32.mrb[0].mxu0
      %v594 = vadd.f32 0.0, %v593
      %595 = vdwg.mxu0
      %v596 = vadd.f32 %v494, %v592
      %v597 = vadd.f32 %v496, %v594
      %598 = vrot.lane.b32.xlu0 %v299, 1
      %v599 = vpop.permute.xlu0 %598
      %600 = vrot.lane.b32.xlu0 %v300, 1
      %v601 = vpop.permute.xlu0 %600
      %vm602 = vcmp.lt.s32.totalorder %v306, 1
      %v603 = vsel %vm602, %v599, %v601
      %v604 = vsel %vm602, %v601, %v599
      %s605 = scalar_lea.vmem %s4, 6
      %v606 = vld [vmem:[%s605] sm:$0x3]
      %v608 = vlaneseq
      %v609 = vshrl.u32 %v608, 7
      %v610 = vsub.s32 0, %v609
      %v611 = vrot.slane %v606, %v610
      %v612 = vlaneseq
      %v613 = vshrl.u32 %v612, 7
      %v614 = vsub.s32 1, %v613
      %v615 = vrot.slane %v606, %v614
      %v618 = vmul.f32 %v604, %v611
      %v619 = vmul.f32 %v603, %v615
      %s620 = scalar_lea.vmem %s3, 12
      %v621 = vld [vmem:[%s620] sm:$0xf]
      %v623 = vsel %vm349, %v621, 0
      %625 = vmatprep.subr.mxu0 %v619
      %626 = vmatpush1.msra.mxu0 %v618
      %627 = vmatprep.subr.mxu0 0.0
      %628 = vmatpush1.msra.mxu0 0.0
      %629 = vmatprep.subr.mxu0 0.0
      %630 = vmatpush1.msra.mxu0 0.0
      %631 = vmatprep.subr.mxu0 0.0
      %632 = vmatpush1.msra.mxu0 0.0
      %633 = vmatprep.subr.mxu0 0.0
      %634 = vmatpush1.msra.mxu0 0.0
      %635 = vmatprep.subr.mxu0 0.0
      %636 = vmatpush1.msra.mxu0 0.0
      %637 = vmatprep.subr.mxu0 0.0
      %638 = vmatpush1.msra.mxu0 0.0
      %639 = vmatprep.subr.mxu0 0.0
      %640 = vmatpush1.msra.mxu0 0.0
      %641 = vmatprep.subr.mxu0 0.0
      %642 = vmatpush1.msra.mxu0 0.0
      %643 = vmatprep.subr.mxu0 0.0
      %644 = vmatpush1.msra.mxu0 0.0
      %645 = vmatprep.subr.mxu0 0.0
      %646 = vmatpush1.msra.mxu0 0.0
      %647 = vmatprep.subr.mxu0 0.0
      %648 = vmatpush1.msra.mxu0 0.0
      %649 = vmatprep.subr.mxu0 0.0
      %650 = vmatpush1.msra.mxu0 0.0
      %651 = vmatprep.subr.mxu0 0.0
      %652 = vmatpush1.msra.mxu0 0.0
      %653 = vmatprep.subr.mxu0 0.0
      %654 = vmatpush1.msra.mxu0 0.0
      %655 = vmatprep.subr.mxu0 0.0
      %656 = vmatpush1.msra.mxu0 0.0
      %657 = vmatprep.subr.mxu0 0.0
      %658 = vmatpush1.msra.mxu0 0.0
      %659 = vmatprep.subr.mxu0 0.0
      %660 = vmatpush1.msra.mxu0 0.0
      %661 = vmatprep.subr.mxu0 0.0
      %662 = vmatpush1.msra.mxu0 0.0
      %663 = vmatprep.subr.mxu0 0.0
      %664 = vmatpush1.msra.mxu0 0.0
      %665 = vmatprep.subr.mxu0 0.0
      %666 = vmatpush1.msra.mxu0 0.0
      %667 = vmatprep.subr.mxu0 0.0
      %668 = vmatpush1.msra.mxu0 0.0
      %669 = vmatprep.subr.mxu0 0.0
      %670 = vmatpush1.msra.mxu0 0.0
      %671 = vmatprep.subr.mxu0 0.0
      %672 = vmatpush1.msra.mxu0 0.0
      %673 = vmatprep.subr.mxu0 0.0
      %674 = vmatpush1.msra.mxu0 0.0
      %675 = vmatprep.subr.mxu0 0.0
      %676 = vmatpush1.msra.mxu0 0.0
      %677 = vmatprep.subr.mxu0 0.0
      %678 = vmatpush1.msra.mxu0 0.0
      %679 = vmatprep.subr.mxu0 0.0
      %680 = vmatpush1.msra.mxu0 0.0
      %681 = vmatprep.subr.mxu0 0.0
      %682 = vmatpush1.msra.mxu0 0.0
      %683 = vmatprep.subr.mxu0 0.0
      %684 = vmatpush1.msra.mxu0 0.0
      %685 = vmatprep.subr.mxu0 0.0
      %686 = vmatpush1.msra.mxu0 0.0
      %687 = vmatprep.subr.mxu0 0.0
      %688 = vmatpush1.msra.mxu0 0.0
      %689 = vmatprep.mubr.f32.mxu0 0.0
      %690 = vmatmul.mubr.f32.gmra.mrb[0].mxu0 %v623
      %v691 = vpop.f32.mrb[0].mxu0
      %v692 = vadd.f32 0.0, %v691
      %v693 = vpop.f32.mrb[0].mxu0
      %v694 = vadd.f32 0.0, %v693
      %695 = vdwg.mxu0
      %v696 = vadd.f32 %v596, %v692
      %v697 = vadd.f32 %v597, %v694
      %s698 = scalar_lea.vmem %s3, 16
      %v699 = vld [vmem:[%s698] sm:$0xf]
      %v701 = vsel %vm349, %v699, 0
      %703 = vmatprep.subr.mxu0 %v300
      %704 = vmatpush1.msra.mxu0 %v299
      %705 = vmatprep.subr.mxu0 0.0
      %706 = vmatpush1.msra.mxu0 0.0
      %707 = vmatprep.subr.mxu0 0.0
      %708 = vmatpush1.msra.mxu0 0.0
      %709 = vmatprep.subr.mxu0 0.0
      %710 = vmatpush1.msra.mxu0 0.0
      %711 = vmatprep.subr.mxu0 0.0
      %712 = vmatpush1.msra.mxu0 0.0
      %713 = vmatprep.subr.mxu0 0.0
      %714 = vmatpush1.msra.mxu0 0.0
      %715 = vmatprep.subr.mxu0 0.0
      %716 = vmatpush1.msra.mxu0 0.0
      %717 = vmatprep.subr.mxu0 0.0
      %718 = vmatpush1.msra.mxu0 0.0
      %719 = vmatprep.subr.mxu0 0.0
      %720 = vmatpush1.msra.mxu0 0.0
      %721 = vmatprep.subr.mxu0 0.0
      %722 = vmatpush1.msra.mxu0 0.0
      %723 = vmatprep.subr.mxu0 0.0
      %724 = vmatpush1.msra.mxu0 0.0
      %725 = vmatprep.subr.mxu0 0.0
      %726 = vmatpush1.msra.mxu0 0.0
      %727 = vmatprep.subr.mxu0 0.0
      %728 = vmatpush1.msra.mxu0 0.0
      %729 = vmatprep.subr.mxu0 0.0
      %730 = vmatpush1.msra.mxu0 0.0
      %731 = vmatprep.subr.mxu0 0.0
      %732 = vmatpush1.msra.mxu0 0.0
      %733 = vmatprep.subr.mxu0 0.0
      %734 = vmatpush1.msra.mxu0 0.0
      %735 = vmatprep.subr.mxu0 0.0
      %736 = vmatpush1.msra.mxu0 0.0
      %737 = vmatprep.subr.mxu0 0.0
      %738 = vmatpush1.msra.mxu0 0.0
      %739 = vmatprep.subr.mxu0 0.0
      %740 = vmatpush1.msra.mxu0 0.0
      %741 = vmatprep.subr.mxu0 0.0
      %742 = vmatpush1.msra.mxu0 0.0
      %743 = vmatprep.subr.mxu0 0.0
      %744 = vmatpush1.msra.mxu0 0.0
      %745 = vmatprep.subr.mxu0 0.0
      %746 = vmatpush1.msra.mxu0 0.0
      %747 = vmatprep.subr.mxu0 0.0
      %748 = vmatpush1.msra.mxu0 0.0
      %749 = vmatprep.subr.mxu0 0.0
      %750 = vmatpush1.msra.mxu0 0.0
      %751 = vmatprep.subr.mxu0 0.0
      %752 = vmatpush1.msra.mxu0 0.0
      %753 = vmatprep.subr.mxu0 0.0
      %754 = vmatpush1.msra.mxu0 0.0
      %755 = vmatprep.subr.mxu0 0.0
      %756 = vmatpush1.msra.mxu0 0.0
      %757 = vmatprep.subr.mxu0 0.0
      %758 = vmatpush1.msra.mxu0 0.0
      %759 = vmatprep.subr.mxu0 0.0
      %760 = vmatpush1.msra.mxu0 0.0
      %761 = vmatprep.subr.mxu0 0.0
      %762 = vmatpush1.msra.mxu0 0.0
      %763 = vmatprep.subr.mxu0 0.0
      %764 = vmatpush1.msra.mxu0 0.0
      %765 = vmatprep.subr.mxu0 0.0
      %766 = vmatpush1.msra.mxu0 0.0
      %767 = vmatprep.mubr.f32.mxu0 0.0
      %768 = vmatmul.mubr.f32.gmra.mrb[0].mxu0 %v701
      %v769 = vpop.f32.mrb[0].mxu0
      %v770 = vadd.f32 0.0, %v769
      %v771 = vpop.f32.mrb[0].mxu0
      %v772 = vadd.f32 0.0, %v771
      %773 = vdwg.mxu0
      %v774 = vadd.f32 %v696, %v770
      %v775 = vadd.f32 %v697, %v772
      %776 = vrot.lane.b32.xlu0 %v299, 127
      %v777 = vpop.permute.xlu0 %776
      %778 = vrot.lane.b32.xlu0 %v300, 127
      %v779 = vpop.permute.xlu0 %778
      %vm780 = vcmp.lt.s32.totalorder %v306, 127
      %v781 = vsel %vm780, %v777, %v779
      %v782 = vsel %vm780, %v779, %v777
      %s783 = scalar_lea.vmem %s4, 10
      %v784 = vld [vmem:[%s783] sm:$0x3]
      %v786 = vlaneseq
      %v787 = vshrl.u32 %v786, 7
      %v788 = vsub.s32 0, %v787
      %v789 = vrot.slane %v784, %v788
      %v790 = vlaneseq
      %v791 = vshrl.u32 %v790, 7
      %v792 = vsub.s32 1, %v791
      %v793 = vrot.slane %v784, %v792
      %v796 = vmul.f32 %v781, %v789
      %v797 = vmul.f32 %v782, %v793
      %s798 = scalar_lea.vmem %s3, 20
      %v799 = vld [vmem:[%s798] sm:$0xf]
      %v801 = vsel %vm349, %v799, 0
      %803 = vmatprep.subr.mxu0 %v797
      %804 = vmatpush1.msra.mxu0 %v796
      %805 = vmatprep.subr.mxu0 0.0
      %806 = vmatpush1.msra.mxu0 0.0
      %807 = vmatprep.subr.mxu0 0.0
      %808 = vmatpush1.msra.mxu0 0.0
      %809 = vmatprep.subr.mxu0 0.0
      %810 = vmatpush1.msra.mxu0 0.0
      %811 = vmatprep.subr.mxu0 0.0
      %812 = vmatpush1.msra.mxu0 0.0
      %813 = vmatprep.subr.mxu0 0.0
      %814 = vmatpush1.msra.mxu0 0.0
      %815 = vmatprep.subr.mxu0 0.0
      %816 = vmatpush1.msra.mxu0 0.0
      %817 = vmatprep.subr.mxu0 0.0
      %818 = vmatpush1.msra.mxu0 0.0
      %819 = vmatprep.subr.mxu0 0.0
      %820 = vmatpush1.msra.mxu0 0.0
      %821 = vmatprep.subr.mxu0 0.0
      %822 = vmatpush1.msra.mxu0 0.0
      %823 = vmatprep.subr.mxu0 0.0
      %824 = vmatpush1.msra.mxu0 0.0
      %825 = vmatprep.subr.mxu0 0.0
      %826 = vmatpush1.msra.mxu0 0.0
      %827 = vmatprep.subr.mxu0 0.0
      %828 = vmatpush1.msra.mxu0 0.0
      %829 = vmatprep.subr.mxu0 0.0
      %830 = vmatpush1.msra.mxu0 0.0
      %831 = vmatprep.subr.mxu0 0.0
      %832 = vmatpush1.msra.mxu0 0.0
      %833 = vmatprep.subr.mxu0 0.0
      %834 = vmatpush1.msra.mxu0 0.0
      %835 = vmatprep.subr.mxu0 0.0
      %836 = vmatpush1.msra.mxu0 0.0
      %837 = vmatprep.subr.mxu0 0.0
      %838 = vmatpush1.msra.mxu0 0.0
      %839 = vmatprep.subr.mxu0 0.0
      %840 = vmatpush1.msra.mxu0 0.0
      %841 = vmatprep.subr.mxu0 0.0
      %842 = vmatpush1.msra.mxu0 0.0
      %843 = vmatprep.subr.mxu0 0.0
      %844 = vmatpush1.msra.mxu0 0.0
      %845 = vmatprep.subr.mxu0 0.0
      %846 = vmatpush1.msra.mxu0 0.0
      %847 = vmatprep.subr.mxu0 0.0
      %848 = vmatpush1.msra.mxu0 0.0
      %849 = vmatprep.subr.mxu0 0.0
      %850 = vmatpush1.msra.mxu0 0.0
      %851 = vmatprep.subr.mxu0 0.0
      %852 = vmatpush1.msra.mxu0 0.0
      %853 = vmatprep.subr.mxu0 0.0
      %854 = vmatpush1.msra.mxu0 0.0
      %855 = vmatprep.subr.mxu0 0.0
      %856 = vmatpush1.msra.mxu0 0.0
      %857 = vmatprep.subr.mxu0 0.0
      %858 = vmatpush1.msra.mxu0 0.0
      %859 = vmatprep.subr.mxu0 0.0
      %860 = vmatpush1.msra.mxu0 0.0
      %861 = vmatprep.subr.mxu0 0.0
      %862 = vmatpush1.msra.mxu0 0.0
      %863 = vmatprep.subr.mxu0 0.0
      %864 = vmatpush1.msra.mxu0 0.0
      %865 = vmatprep.subr.mxu0 0.0
      %866 = vmatpush1.msra.mxu0 0.0
      %867 = vmatprep.mubr.f32.mxu0 0.0
      %868 = vmatmul.mubr.f32.gmra.mrb[0].mxu0 %v801
      %v869 = vpop.f32.mrb[0].mxu0
      %v870 = vadd.f32 0.0, %v869
      %v871 = vpop.f32.mrb[0].mxu0
      %v872 = vadd.f32 0.0, %v871
      %873 = vdwg.mxu0
      %v874 = vadd.f32 %v774, %v870
      %v875 = vadd.f32 %v775, %v872
      %876 = vrot.lane.b32.xlu0 %v299, 113
      %v877 = vpop.permute.xlu0 %876
      %878 = vrot.lane.b32.xlu0 %v300, 113
      %v879 = vpop.permute.xlu0 %878
      %vm880 = vcmp.lt.s32.totalorder %v306, 113
      %v881 = vsel %vm880, %v877, %v879
      %v882 = vsel %vm880, %v879, %v877
      %s883 = scalar_lea.vmem %s4, 12
      %v884 = vld [vmem:[%s883] sm:$0x3]
      %v886 = vlaneseq
      %v887 = vshrl.u32 %v886, 7
      %v888 = vsub.s32 0, %v887
      %v889 = vrot.slane %v884, %v888
      %v890 = vlaneseq
      %v891 = vshrl.u32 %v890, 7
      %v892 = vsub.s32 1, %v891
      %v893 = vrot.slane %v884, %v892
      %v896 = vmul.f32 %v881, %v889
      %v897 = vmul.f32 %v882, %v893
      %s898 = scalar_lea.vmem %s3, 24
      %v899 = vld [vmem:[%s898] sm:$0xf]
      %v901 = vsel %vm349, %v899, 0
      %903 = vmatprep.subr.mxu0 %v897
      %904 = vmatpush1.msra.mxu0 %v896
      %905 = vmatprep.subr.mxu0 0.0
      %906 = vmatpush1.msra.mxu0 0.0
      %907 = vmatprep.subr.mxu0 0.0
      %908 = vmatpush1.msra.mxu0 0.0
      %909 = vmatprep.subr.mxu0 0.0
      %910 = vmatpush1.msra.mxu0 0.0
      %911 = vmatprep.subr.mxu0 0.0
      %912 = vmatpush1.msra.mxu0 0.0
      %913 = vmatprep.subr.mxu0 0.0
      %914 = vmatpush1.msra.mxu0 0.0
      %915 = vmatprep.subr.mxu0 0.0
      %916 = vmatpush1.msra.mxu0 0.0
      %917 = vmatprep.subr.mxu0 0.0
      %918 = vmatpush1.msra.mxu0 0.0
      %919 = vmatprep.subr.mxu0 0.0
      %920 = vmatpush1.msra.mxu0 0.0
      %921 = vmatprep.subr.mxu0 0.0
      %922 = vmatpush1.msra.mxu0 0.0
      %923 = vmatprep.subr.mxu0 0.0
      %924 = vmatpush1.msra.mxu0 0.0
      %925 = vmatprep.subr.mxu0 0.0
      %926 = vmatpush1.msra.mxu0 0.0
      %927 = vmatprep.subr.mxu0 0.0
      %928 = vmatpush1.msra.mxu0 0.0
      %929 = vmatprep.subr.mxu0 0.0
      %930 = vmatpush1.msra.mxu0 0.0
      %931 = vmatprep.subr.mxu0 0.0
      %932 = vmatpush1.msra.mxu0 0.0
      %933 = vmatprep.subr.mxu0 0.0
      %934 = vmatpush1.msra.mxu0 0.0
      %935 = vmatprep.subr.mxu0 0.0
      %936 = vmatpush1.msra.mxu0 0.0
      %937 = vmatprep.subr.mxu0 0.0
      %938 = vmatpush1.msra.mxu0 0.0
      %939 = vmatprep.subr.mxu0 0.0
      %940 = vmatpush1.msra.mxu0 0.0
      %941 = vmatprep.subr.mxu0 0.0
      %942 = vmatpush1.msra.mxu0 0.0
      %943 = vmatprep.subr.mxu0 0.0
      %944 = vmatpush1.msra.mxu0 0.0
      %945 = vmatprep.subr.mxu0 0.0
      %946 = vmatpush1.msra.mxu0 0.0
      %947 = vmatprep.subr.mxu0 0.0
      %948 = vmatpush1.msra.mxu0 0.0
      %949 = vmatprep.subr.mxu0 0.0
      %950 = vmatpush1.msra.mxu0 0.0
      %951 = vmatprep.subr.mxu0 0.0
      %952 = vmatpush1.msra.mxu0 0.0
      %953 = vmatprep.subr.mxu0 0.0
      %954 = vmatpush1.msra.mxu0 0.0
      %955 = vmatprep.subr.mxu0 0.0
      %956 = vmatpush1.msra.mxu0 0.0
      %957 = vmatprep.subr.mxu0 0.0
      %958 = vmatpush1.msra.mxu0 0.0
      %959 = vmatprep.subr.mxu0 0.0
      %960 = vmatpush1.msra.mxu0 0.0
      %961 = vmatprep.subr.mxu0 0.0
      %962 = vmatpush1.msra.mxu0 0.0
      %963 = vmatprep.subr.mxu0 0.0
      %964 = vmatpush1.msra.mxu0 0.0
      %965 = vmatprep.subr.mxu0 0.0
      %966 = vmatpush1.msra.mxu0 0.0
      %967 = vmatprep.mubr.f32.mxu0 0.0
      %968 = vmatmul.mubr.f32.gmra.mrb[0].mxu0 %v901
      %v969 = vpop.f32.mrb[0].mxu0
      %v970 = vadd.f32 0.0, %v969
      %v971 = vpop.f32.mrb[0].mxu0
      %v972 = vadd.f32 0.0, %v971
      %973 = vdwg.mxu0
      %v974 = vadd.f32 %v874, %v970
      %v975 = vadd.f32 %v875, %v972
      %976 = vrot.lane.b32.xlu0 %v299, 112
      %v977 = vpop.permute.xlu0 %976
      %978 = vrot.lane.b32.xlu0 %v300, 112
      %v979 = vpop.permute.xlu0 %978
      %vm980 = vcmp.lt.s32.totalorder %v306, 112
      %v981 = vsel %vm980, %v977, %v979
      %v982 = vsel %vm980, %v979, %v977
      %s983 = scalar_lea.vmem %s4, 14
      %v984 = vld [vmem:[%s983] sm:$0x3]
      %v986 = vlaneseq
      %v987 = vshrl.u32 %v986, 7
      %v988 = vsub.s32 0, %v987
      %v989 = vrot.slane %v984, %v988
      %v990 = vlaneseq
      %v991 = vshrl.u32 %v990, 7
      %v992 = vsub.s32 1, %v991
      %v993 = vrot.slane %v984, %v992
      %v996 = vmul.f32 %v981, %v989
      %v997 = vmul.f32 %v982, %v993
      %s998 = scalar_lea.vmem %s3, 28
      %v999 = vld [vmem:[%s998] sm:$0xf]
      %v1001 = vsel %vm349, %v999, 0
      %1003 = vmatprep.subr.mxu0 %v997
      %1004 = vmatpush1.msra.mxu0 %v996
      %1005 = vmatprep.subr.mxu0 0.0
      %1006 = vmatpush1.msra.mxu0 0.0
      %1007 = vmatprep.subr.mxu0 0.0
      %1008 = vmatpush1.msra.mxu0 0.0
      %1009 = vmatprep.subr.mxu0 0.0
      %1010 = vmatpush1.msra.mxu0 0.0
      %1011 = vmatprep.subr.mxu0 0.0
      %1012 = vmatpush1.msra.mxu0 0.0
      %1013 = vmatprep.subr.mxu0 0.0
      %1014 = vmatpush1.msra.mxu0 0.0
      %1015 = vmatprep.subr.mxu0 0.0
      %1016 = vmatpush1.msra.mxu0 0.0
      %1017 = vmatprep.subr.mxu0 0.0
      %1018 = vmatpush1.msra.mxu0 0.0
      %1019 = vmatprep.subr.mxu0 0.0
      %1020 = vmatpush1.msra.mxu0 0.0
      %1021 = vmatprep.subr.mxu0 0.0
      %1022 = vmatpush1.msra.mxu0 0.0
      %1023 = vmatprep.subr.mxu0 0.0
      %1024 = vmatpush1.msra.mxu0 0.0
      %1025 = vmatprep.subr.mxu0 0.0
      %1026 = vmatpush1.msra.mxu0 0.0
      %1027 = vmatprep.subr.mxu0 0.0
      %1028 = vmatpush1.msra.mxu0 0.0
      %1029 = vmatprep.subr.mxu0 0.0
      %1030 = vmatpush1.msra.mxu0 0.0
      %1031 = vmatprep.subr.mxu0 0.0
      %1032 = vmatpush1.msra.mxu0 0.0
      %1033 = vmatprep.subr.mxu0 0.0
      %1034 = vmatpush1.msra.mxu0 0.0
      %1035 = vmatprep.subr.mxu0 0.0
      %1036 = vmatpush1.msra.mxu0 0.0
      %1037 = vmatprep.subr.mxu0 0.0
      %1038 = vmatpush1.msra.mxu0 0.0
      %1039 = vmatprep.subr.mxu0 0.0
      %1040 = vmatpush1.msra.mxu0 0.0
      %1041 = vmatprep.subr.mxu0 0.0
      %1042 = vmatpush1.msra.mxu0 0.0
      %1043 = vmatprep.subr.mxu0 0.0
      %1044 = vmatpush1.msra.mxu0 0.0
      %1045 = vmatprep.subr.mxu0 0.0
      %1046 = vmatpush1.msra.mxu0 0.0
      %1047 = vmatprep.subr.mxu0 0.0
      %1048 = vmatpush1.msra.mxu0 0.0
      %1049 = vmatprep.subr.mxu0 0.0
      %1050 = vmatpush1.msra.mxu0 0.0
      %1051 = vmatprep.subr.mxu0 0.0
      %1052 = vmatpush1.msra.mxu0 0.0
      %1053 = vmatprep.subr.mxu0 0.0
      %1054 = vmatpush1.msra.mxu0 0.0
      %1055 = vmatprep.subr.mxu0 0.0
      %1056 = vmatpush1.msra.mxu0 0.0
      %1057 = vmatprep.subr.mxu0 0.0
      %1058 = vmatpush1.msra.mxu0 0.0
      %1059 = vmatprep.subr.mxu0 0.0
      %1060 = vmatpush1.msra.mxu0 0.0
      %1061 = vmatprep.subr.mxu0 0.0
      %1062 = vmatpush1.msra.mxu0 0.0
      %1063 = vmatprep.subr.mxu0 0.0
      %1064 = vmatpush1.msra.mxu0 0.0
      %1065 = vmatprep.subr.mxu0 0.0
      %1066 = vmatpush1.msra.mxu0 0.0
      %1067 = vmatprep.mubr.f32.mxu0 0.0
      %1068 = vmatmul.mubr.f32.gmra.mrb[0].mxu0 %v1001
      %v1069 = vpop.f32.mrb[0].mxu0
      %v1070 = vadd.f32 0.0, %v1069
      %v1071 = vpop.f32.mrb[0].mxu0
      %v1072 = vadd.f32 0.0, %v1071
      %1073 = vdwg.mxu0
      %v1074 = vadd.f32 %v974, %v1070
      %v1075 = vadd.f32 %v975, %v1072
      %1076 = vrot.lane.b32.xlu0 %v299, 111
      %v1077 = vpop.permute.xlu0 %1076
      %1078 = vrot.lane.b32.xlu0 %v300, 111
      %v1079 = vpop.permute.xlu0 %1078
      %vm1080 = vcmp.lt.s32.totalorder %v306, 111
      %v1081 = vsel %vm1080, %v1077, %v1079
      %v1082 = vsel %vm1080, %v1079, %v1077
      %s1083 = scalar_lea.vmem %s4, 16
      %v1084 = vld [vmem:[%s1083] sm:$0x3]
      %v1086 = vlaneseq
      %v1087 = vshrl.u32 %v1086, 7
      %v1088 = vsub.s32 0, %v1087
      %v1089 = vrot.slane %v1084, %v1088
      %v1090 = vlaneseq
      %v1091 = vshrl.u32 %v1090, 7
      %v1092 = vsub.s32 1, %v1091
      %v1093 = vrot.slane %v1084, %v1092
      %v1096 = vmul.f32 %v1081, %v1089
      %v1097 = vmul.f32 %v1082, %v1093
      %s1098 = scalar_lea.vmem %s3, 32
      %v1099 = vld [vmem:[%s1098] sm:$0xf]
      %v1101 = vsel %vm349, %v1099, 0
      %1103 = vmatprep.subr.mxu0 %v1097
      %1104 = vmatpush1.msra.mxu0 %v1096
      %1105 = vmatprep.subr.mxu0 0.0
      %1106 = vmatpush1.msra.mxu0 0.0
      %1107 = vmatprep.subr.mxu0 0.0
      %1108 = vmatpush1.msra.mxu0 0.0
      %1109 = vmatprep.subr.mxu0 0.0
      %1110 = vmatpush1.msra.mxu0 0.0
      %1111 = vmatprep.subr.mxu0 0.0
      %1112 = vmatpush1.msra.mxu0 0.0
      %1113 = vmatprep.subr.mxu0 0.0
      %1114 = vmatpush1.msra.mxu0 0.0
      %1115 = vmatprep.subr.mxu0 0.0
      %1116 = vmatpush1.msra.mxu0 0.0
      %1117 = vmatprep.subr.mxu0 0.0
      %1118 = vmatpush1.msra.mxu0 0.0
      %1119 = vmatprep.subr.mxu0 0.0
      %1120 = vmatpush1.msra.mxu0 0.0
      %1121 = vmatprep.subr.mxu0 0.0
      %1122 = vmatpush1.msra.mxu0 0.0
      %1123 = vmatprep.subr.mxu0 0.0
      %1124 = vmatpush1.msra.mxu0 0.0
      %1125 = vmatprep.subr.mxu0 0.0
      %1126 = vmatpush1.msra.mxu0 0.0
      %1127 = vmatprep.subr.mxu0 0.0
      %1128 = vmatpush1.msra.mxu0 0.0
      %1129 = vmatprep.subr.mxu0 0.0
      %1130 = vmatpush1.msra.mxu0 0.0
      %1131 = vmatprep.subr.mxu0 0.0
      %1132 = vmatpush1.msra.mxu0 0.0
      %1133 = vmatprep.subr.mxu0 0.0
      %1134 = vmatpush1.msra.mxu0 0.0
      %1135 = vmatprep.subr.mxu0 0.0
      %1136 = vmatpush1.msra.mxu0 0.0
      %1137 = vmatprep.subr.mxu0 0.0
      %1138 = vmatpush1.msra.mxu0 0.0
      %1139 = vmatprep.subr.mxu0 0.0
      %1140 = vmatpush1.msra.mxu0 0.0
      %1141 = vmatprep.subr.mxu0 0.0
      %1142 = vmatpush1.msra.mxu0 0.0
      %1143 = vmatprep.subr.mxu0 0.0
      %1144 = vmatpush1.msra.mxu0 0.0
      %1145 = vmatprep.subr.mxu0 0.0
      %1146 = vmatpush1.msra.mxu0 0.0
      %1147 = vmatprep.subr.mxu0 0.0
      %1148 = vmatpush1.msra.mxu0 0.0
      %1149 = vmatprep.subr.mxu0 0.0
      %1150 = vmatpush1.msra.mxu0 0.0
      %1151 = vmatprep.subr.mxu0 0.0
      %1152 = vmatpush1.msra.mxu0 0.0
      %1153 = vmatprep.subr.mxu0 0.0
      %1154 = vmatpush1.msra.mxu0 0.0
      %1155 = vmatprep.subr.mxu0 0.0
      %1156 = vmatpush1.msra.mxu0 0.0
      %1157 = vmatprep.subr.mxu0 0.0
      %1158 = vmatpush1.msra.mxu0 0.0
      %1159 = vmatprep.subr.mxu0 0.0
      %1160 = vmatpush1.msra.mxu0 0.0
      %1161 = vmatprep.subr.mxu0 0.0
      %1162 = vmatpush1.msra.mxu0 0.0
      %1163 = vmatprep.subr.mxu0 0.0
      %1164 = vmatpush1.msra.mxu0 0.0
      %1165 = vmatprep.subr.mxu0 0.0
      %1166 = vmatpush1.msra.mxu0 0.0
      %1167 = vmatprep.mubr.f32.mxu0 0.0
      %1168 = vmatmul.mubr.f32.gmra.mrb[0].mxu0 %v1101
      %v1169 = vpop.f32.mrb[0].mxu0
      %v1170 = vadd.f32 0.0, %v1169
      %v1171 = vpop.f32.mrb[0].mxu0
      %v1172 = vadd.f32 0.0, %v1171
      %1173 = vdwg.mxu0
      %v1174 = vadd.f32 %v1074, %v1170
      %v1175 = vadd.f32 %v1075, %v1172
      %v1178 = vcombine.low %v1174, %v1175
      %1180 = vst [vmem:[%s273] sm:$0xff] %v1178
      %v1181 = vld [vmem:[%s6] sm:$0xf]
      %vm1182 = vcmask 1043456
      %v1183 = vsel %vm1182, %v1174, 0.0
      %v1184 = vsel %vm1182, %v1175, 0.0
      %v1185 = vadd.f32 %v1183, %v1184
      %1186 = vadd.xlane.f32.xlu0 %v1185
      %v1187 = vpop.xlane.xlu0 %1186
      %v1188 = vadd.f32 %v1181, %v1187
      %vm1189 = vcmask 3072
      %1190 = vst.msk [vmem:[%s6] sm:$0xf] %vm1189, %v1188
      %v1191 = vld [vmem:[%s7] sm:$0xf]
      %v1192 = vmul.f32 %v1174, %v1174
      %v1193 = vmul.f32 %v1175, %v1175
      %v1194 = vsel %vm1182, %v1192, 0.0
      %v1195 = vsel %vm1182, %v1193, 0.0
      %v1196 = vadd.f32 %v1194, %v1195
      %1197 = vadd.xlane.f32.xlu0 %v1196
      %v1198 = vpop.xlane.xlu0 %1197
      %v1199 = vadd.f32 %v1191, %v1198
      %1200 = vst.msk [vmem:[%s7] sm:$0xf] %vm1189, %v1199
      %p1201 = scmp.lt.s32.totalorder %s19, 1
      %s1202 = scalar_select %p1201, %s19, 1
      %s1203 = smul.addr %s1202, 2
      %s1204 = smul.addr %s1203, 4
      %s1205 = scalar_lea.vmem %s5, %s1204
      // Predicated region
      $region45: #{resblock_forward.4} parent=39 // pred_check
        %p1206 = pneg %p147
      $region46: #{resblock_forward.4} parent=39 // pred_check_branch
        %1208 = sbr.rel (%p1206) target = $region48
      $region47: #{resblock_forward.4} parent=39 // pred_region
        _
      $region48: #{resblock_forward.4} parent=39 // pred_fallthru
        _
      // Predicated region
      $region49: #{resblock_forward.4} parent=39 // pred_check
        %p1209 = pneg %p168
      $region50: #{resblock_forward.4} parent=39 // pred_check_branch
        %1211 = sbr.rel (%p1209) target = $region52
      $region51: #{resblock_forward.4} parent=39 // pred_region
        _
      $region52: #{resblock_forward.4} parent=39 // pred_fallthru
        _
      // Predicated region
      $region53: #{resblock_forward.4} parent=39 // pred_check
        %p1212 = pneg %p189
      $region54: #{resblock_forward.4} parent=39 // pred_check_branch
        %1214 = sbr.rel (%p1212) target = $region56
      $region55: #{resblock_forward.4} parent=39 // pred_region
        _
      $region56: #{resblock_forward.4} parent=39 // pred_fallthru
        _
      // Predicated region
      $region57: #{resblock_forward.4} parent=39 // pred_check
        %p1215 = pneg %p168
      $region58: #{resblock_forward.4} parent=39 // pred_check_branch
        %1217 = sbr.rel (%p1215) target = $region60
      $region59: #{resblock_forward.4} parent=39 // pred_region
        _
      $region60: #{resblock_forward.4} parent=39 // pred_fallthru
        _
      // Predicated region
      $region61: #{resblock_forward.4} parent=39 // pred_check
        %p1218 = pneg %p189
      $region62: #{resblock_forward.4} parent=39 // pred_check_branch
        %1220 = sbr.rel (%p1218) target = $region64
      $region63: #{resblock_forward.4} parent=39 // pred_region
        _
      $region64: #{resblock_forward.4} parent=39 // pred_fallthru
        _
    $region40: #{resblock_forward.4} parent=5 // pred_fallthru
      _
    %p1221 = scmp.le.s32.totalorder 2, %s14
    // Predicated region
    $region65: #{resblock_forward.4} parent=5 // pred_check
      %p1222 = pneg %p1221
    $region66: #{resblock_forward.4} parent=5 // pred_check_branch
      %1224 = sbr.rel (%p1222) target = $region68
    $region67: #{resblock_forward.4} parent=5 // pred_region
      %s1225 = ssub.s32 %s14, 2
      // Predicated region
      $region69: #{resblock_forward.4} parent=67 // pred_check
        %p1226 = pneg %p153
      $region70: #{resblock_forward.4} parent=67 // pred_check_branch
        %1228 = sbr.rel (%p1226) target = $region72
      $region71: #{resblock_forward.4} parent=67 // pred_region
        %p1229 = scmp.lt.s32.totalorder %s20, 1
        %s1230 = scalar_select %p1229, %s20, 1
        %s1231 = smul.addr %s1230, 2
        %s1232 = smul.addr %s1231, 4
        %s1233 = scalar_lea.vmem %s5, %s1232
      $region72: #{resblock_forward.4} parent=67 // pred_fallthru
        _
    $region68: #{resblock_forward.4} parent=5 // pred_fallthru
      _
  $region6: #{resblock_forward.4} parent=0 // loop_footer
    %s18 = sadd.s32 1, %s14
  $region7: #{resblock_forward.4} parent=0 // loop_footer_branch
    %13 = sbr.rel target = $region3
  $region8: #{resblock_forward.4} parent=0 // loop_exit
    _

</llo_original>
